<compile_context>
chip_gen: v7x
topology: tpu7x:2x2x1
jax: 0.10.0
libtpu: 0.0.40
codegen_flags: <defaults>
</compile_context>

<pallas_src>
import math

import jax
import jax.numpy as jnp
from jax.experimental import pallas as pl
from jax.experimental.pallas import tpu as pltpu

_NEG = -1e30  # "minus infinity" for padded logit lanes (finite, avoids inf math)


# ---------------------------------------------------------------------------
# Fused whole-model kernel builder
# ---------------------------------------------------------------------------
def _build_fused_kernel(B, S, Cmax, Ec, Ew, Hc, Hw, Vc, Vw, Cp, Lc, Lw):
    N = B * S            # char sequences == word rows, ordered n = s*B + b
    Tc, Tw = Cmax, S

    def cell(g, h, c, whh, H):
        # PyTorch gate order (i, f, g, o); c' = f*c + i*g ; h' = o*tanh(c').
        g = g + jnp.dot(h, whh, preferred_element_type=jnp.float32)
        i_g = jax.nn.sigmoid(g[:, 0 * H:1 * H])
        f_g = jax.nn.sigmoid(g[:, 1 * H:2 * H])
        g_g = jnp.tanh(g[:, 2 * H:3 * H])
        o_g = jax.nn.sigmoid(g[:, 3 * H:4 * H])
        c_new = f_g * c + i_g * g_g
        return o_g * jnp.tanh(c_new), c_new

    def kernel(*refs):
        it = iter(refs)
        xc_ref, xw_ref = next(it), next(it)
        cemb_ref, wemb_ref = next(it), next(it)
        char_w = [(next(it), next(it), next(it), next(it)) for _ in range(Lc)]
        word_w = [(next(it), next(it), next(it), next(it)) for _ in range(Lw)]
        w1_ref, b1_ref, w2_ref, b2_ref = next(it), next(it), next(it), next(it)
        out_ref = next(it)
        hw_slab = next(it)                            # (Tw*B, 2*Hw) VMEM scratch
        hc_slab = next(it) if Lc > 1 else None        # (Tc*N, 2*Hc) VMEM scratch

        # (1) char embedding gather as a one-hot GEMM (tables resident in VMEM)
        oh_c = jnp.where(
            xc_ref[...] == jax.lax.broadcasted_iota(jnp.int32, (Tc * N, Vc), 1),
            1.0, 0.0)
        x = jnp.dot(oh_c, cemb_ref[...], preferred_element_type=jnp.float32)

        # (2) char bidirectional LSTM over all N sequences at once
        zc = jnp.zeros((N, Hc), jnp.float32)
        h_cf = h_cb = zc
        for li, (wih, whh_f_r, whh_b_r, b) in enumerate(char_w):
            # wide input projection for BOTH directions, bias folded in
            gx = jnp.dot(x, wih[...], preferred_element_type=jnp.float32) + b[...]
            whh_f, whh_b = whh_f_r[...], whh_b_r[...]
            if li < Lc - 1:
                # intermediate layer: full bidirectional sequence, stored
                # in-loop into the VMEM slab (keeps vreg pressure flat).
                h, c = zc, zc
                for t in range(Tc):
                    h, c = cell(gx[t * N:(t + 1) * N, 0:4 * Hc], h, c, whh_f, Hc)
                    hc_slab[t * N:(t + 1) * N, 0:Hc] = h
                h, c = zc, zc
                for t in range(Tc - 1, -1, -1):
                    h, c = cell(gx[t * N:(t + 1) * N, 4 * Hc:8 * Hc], h, c, whh_b, Hc)
                    hc_slab[t * N:(t + 1) * N, Hc:2 * Hc] = h
                x = hc_slab[...]
            else:
                # last layer: downstream only consumes output[:, -1, :]
                # = [h_fwd(T-1) | h_bwd(T-1)]; the backward direction needs
                # only ONE step from zero state on the last char.
                h, c = zc, zc
                for t in range(Tc):
                    h, c = cell(gx[t * N:(t + 1) * N, 0:4 * Hc], h, c, whh_f, Hc)
                h_cf = h
                h_cb, _ = cell(gx[(Tc - 1) * N:Tc * N, 4 * Hc:8 * Hc],
                               zc, zc, whh_b, Hc)

        # (3) word embedding gather as a one-hot GEMM
        oh_w = jnp.where(
            xw_ref[...] == jax.lax.broadcasted_iota(jnp.int32, (Tw * B, Vw), 1),
            1.0, 0.0)
        emb_w = jnp.dot(oh_w, wemb_ref[...], preferred_element_type=jnp.float32)

        # (4) word bidirectional LSTM
        zw = jnp.zeros((B, Hw), jnp.float32)
        for li, (wih, whh_f_r, whh_b_r, b) in enumerate(word_w):
            if li == 0:
                # concat([emb_word, char_last]) @ W_ih realised as a sum of
                # projections — the concatenated slab is never built.
                w = wih[...]
                gx = (jnp.dot(emb_w, w[0:Ew, :], preferred_element_type=jnp.float32)
                      + jnp.dot(h_cf, w[Ew:Ew + Hc, :], preferred_element_type=jnp.float32)
                      + jnp.dot(h_cb, w[Ew + Hc:Ew + 2 * Hc, :], preferred_element_type=jnp.float32)
                      + b[...])
            else:
                prev = hw_slab[...]
                gx = jnp.dot(prev, wih[...], preferred_element_type=jnp.float32) + b[...]
            whh_f, whh_b = whh_f_r[...], whh_b_r[...]
            h, c = zw, zw
            for t in range(Tw):
                h, c = cell(gx[t * B:(t + 1) * B, 0:4 * Hw], h, c, whh_f, Hw)
                hw_slab[t * B:(t + 1) * B, 0:Hw] = h
            h, c = zw, zw
            for t in range(Tw - 1, -1, -1):
                h, c = cell(gx[t * B:(t + 1) * B, 4 * Hw:8 * Hw], h, c, whh_b, Hw)
                hw_slab[t * B:(t + 1) * B, Hw:2 * Hw] = h

        # (5) MLP head hoisted out of the time loop: one GEMM chain over all
        #     S*B rows + one log_softmax; lane-dense (Cp=128) final store.
        hslab = hw_slab[...]                                       # (Tw*B, 2*Hw)
        hid = jnp.dot(hslab, w1_ref[...], preferred_element_type=jnp.float32) + b1_ref[...]
        hid = jnp.maximum(hid, 0.0)
        logits = jnp.dot(hid, w2_ref[...], preferred_element_type=jnp.float32) + b2_ref[...]
        m = jnp.max(logits, axis=-1, keepdims=True)
        z = logits - m
        lse = jnp.log(jnp.sum(jnp.exp(z), axis=-1, keepdims=True))
        out_ref[...] = (z - lse).astype(out_ref.dtype)

    return kernel


def _cost_estimate(args, B, S, Cmax, Ec, Ew, Hc, Hw, Cp, Lc, Lw):
    """Rough advisory flop/byte counts for the fused kernel."""
    N = B * S
    Vc, Vw = args[2].shape[0], args[3].shape[0]
    fl = 2 * Cmax * N * Vc * Ec + 2 * S * B * Vw * Ew          # one-hot gathers
    trans = 0
    inp = Ec
    for li in range(Lc):
        fl += 2 * Cmax * N * inp * 8 * Hc                       # input proj
        steps = Cmax + (1 if li == Lc - 1 else Cmax)
        fl += 2 * steps * N * Hc * 4 * Hc                       # h @ W_hh
        trans += 5 * steps * N * Hc
        inp = 2 * Hc
    inp = Ew + 2 * Hc
    for li in range(Lw):
        fl += 2 * S * B * inp * 8 * Hw
        fl += 2 * (2 * S) * B * Hw * 4 * Hw
        trans += 5 * (2 * S) * B * Hw
        inp = 2 * Hw
    fl += 2 * S * B * 2 * Hw * Hw + 2 * S * B * Hw * Cp         # head GEMMs
    trans += S * B * Cp + S * B                                  # exp + log
    by = sum(int(a.size) * a.dtype.itemsize for a in args) + S * B * Cp * 4
    return pl.CostEstimate(flops=int(fl), transcendentals=int(trans),
                           bytes_accessed=int(by))


def _pad_rows_to_multiple(x, m):
    r = x.shape[0] % m
    return x if r == 0 else jnp.pad(x, ((0, m - r), (0, 0)))


# ---------------------------------------------------------------------------
# Full forward pass (mirrors LSTM_WORD_CHAR.forward)
# ---------------------------------------------------------------------------
def forward(params, X_word, X_char):
    B, S = X_word.shape
    Cmax = X_char.shape[-1]
    N = B * S
    Hc = params["lstm_char"][0]["whh_f"].shape[0]
    Hw = params["lstm_word"][0]["whh_f"].shape[0]
    Ec = params["char_emb"].shape[1]
    Ew = params["word_emb"].shape[1]
    C = params["w2"].shape[1]
    Cp = ((C + 127) // 128) * 128
    Lc, Lw = len(params["lstm_char"]), len(params["lstm_word"])

    # Tiny int32 index permutations into the kernel row layout:
    #   char rows ordered (t, s*B + b); word rows ordered (s*B + b).
    # The float gathers themselves happen inside the kernel.
    xc_idx = jnp.transpose(X_char, (2, 1, 0)).reshape(Cmax * N, 1).astype(jnp.int32)
    xw_idx = jnp.transpose(X_word, (1, 0)).reshape(S * B, 1).astype(jnp.int32)

    # Sublane-align the vocab (K) dim of the in-kernel one-hot GEMMs; pad rows
    # are never selected because indices < vocab size.
    cemb = _pad_rows_to_multiple(params["char_emb"], 8)
    wemb = _pad_rows_to_multiple(params["word_emb"], 8)

    # Lane-dense classes for the final store; pad logits ~ -1e30, sliced off.
    w2p = jnp.pad(params["w2"], ((0, 0), (0, Cp - C)))
    b2p = jnp.pad(params["b2"], ((0, 0), (0, Cp - C)), constant_values=_NEG)

    args = [xc_idx, xw_idx, cemb, wemb]
    for p in params["lstm_char"]:
        args += [p["wih"], p["whh_f"], p["whh_b"], p["b"]]
    for p in params["lstm_word"]:
        args += [p["wih"], p["whh_f"], p["whh_b"], p["b"]]
    args += [params["w1"], params["b1"], w2p, b2p]

    kernel = _build_fused_kernel(B, S, Cmax, Ec, Ew, Hc, Hw,
                                 cemb.shape[0], wemb.shape[0], Cp, Lc, Lw)

    in_specs = [pl.BlockSpec(tuple(a.shape), lambda i: (0, 0)) for a in args]
    scratch = [pltpu.VMEM((S * B, 2 * Hw), jnp.float32)]
    if Lc > 1:
        scratch.append(pltpu.VMEM((Cmax * N, 2 * Hc), jnp.float32))

    out = pl.pallas_call(
        kernel,
        out_shape=jax.ShapeDtypeStruct((S * B, Cp), jnp.float32),
        grid_spec=pltpu.PrefetchScalarGridSpec(
            num_scalar_prefetch=0,
            grid=(1,),                       # single invocation: no batch split
            in_specs=in_specs,               # on single-TC chips (v5e/v6e)
            out_specs=pl.BlockSpec((S * B, Cp), lambda i: (0, 0)),
            scratch_shapes=scratch),
        compiler_params=pltpu.CompilerParams(dimension_semantics=("arbitrary",)),
        cost_estimate=_cost_estimate(args, B, S, Cmax, Ec, Ew, Hc, Hw, Cp, Lc, Lw),
    )(*args)

    return jnp.transpose(out[:, :C].reshape(S, B, C), (1, 0, 2))   # (B, S, C)


# ---------------------------------------------------------------------------
# Deterministic parameter init (shapes from LSTM_WORD_CHAR.__init__)
# ---------------------------------------------------------------------------
def init_params(key, vocab_size, char_size, Ec, Ew, num_classes, Hc, Hw, num_layers):
    keys = iter(jax.random.split(key, 256))

    def u(shape, bound):
        return jax.random.uniform(next(keys), shape, jnp.float32, -bound, bound)

    params = {}
    char_emb = jax.random.normal(next(keys), (char_size, Ec), jnp.float32)
    params["char_emb"] = char_emb.at[0].set(0.0)          # padding_idx=0
    word_emb = jax.random.normal(next(keys), (vocab_size, Ew), jnp.float32)
    params["word_emb"] = word_emb.at[0].set(0.0)          # padding_idx=0

    def lstm_params(in_size, H, nlayers):
        # Weights stored pre-transposed (in, 4H) with fwd/bwd fused along the
        # gate axis; PyTorch's (b_ih + b_hh) pair folded into one bias per
        # direction (importing torch weights requires transpose + bias sum).
        layers, inp, bound = [], in_size, 1.0 / math.sqrt(H)
        for _ in range(nlayers):
            layers.append(dict(
                wih=u((inp, 8 * H), bound),                # [W_ih_f | W_ih_b]
                whh_f=u((H, 4 * H), bound),
                whh_b=u((H, 4 * H), bound),
                b=u((1, 8 * H), bound),                    # [b_f | b_b]
            ))
            inp = 2 * H
        return layers

    params["lstm_char"] = lstm_params(Ec, Hc, num_layers)
    params["lstm_word"] = lstm_params(2 * Hc + Ew, Hw, num_layers)

    b1 = 1.0 / math.sqrt(2 * Hw)
    params["w1"], params["b1"] = u((2 * Hw, Hw), b1), u((1, Hw), b1)
    b2 = 1.0 / math.sqrt(Hw)
    params["w2"], params["b2"] = u((Hw, num_classes), b2), u((1, num_classes), b2)
    return params


if __name__ == "__main__":
    key = jax.random.PRNGKey(0)
    vocab_size, char_size = 30, 20
    Ec, Ew = 16, 32            # embedding_size_char / embedding_size_word
    Hc, Hw = 16, 32            # hidden_layer_size_char / hidden_layer_size_word
    num_classes = 5
    num_layers = 1             # dropout only acts between stacked layers -> identity here
    B, S, Cmax = 2, 8, 6       # batch, max_sent_len, max_char

    kp, kw, kc = jax.random.split(key, 3)
    params = init_params(kp, vocab_size, char_size, Ec, Ew, num_classes, Hc, Hw, num_layers)
    X_word = jax.random.randint(kw, (B, S), 0, vocab_size, dtype=jnp.int32)
    X_char = jax.random.randint(kc, (B, S, Cmax), 0, char_size, dtype=jnp.int32)

    out = jax.jit(forward)(params, X_word, X_char)
    jax.block_until_ready(out)
    assert out.shape == (B, S, num_classes)
    assert bool(jnp.all(jnp.isfinite(out)))
    print("KERNEL_OK")
</pallas_src>

<mosaic_0001>
module attributes {stable_mosaic.version = 11 : i64} {
  func.func @kernel(%arg0: i32, %arg1: memref<96x1xi32, #tpu.memory_space<vmem>>, %arg2: memref<16x1xi32, #tpu.memory_space<vmem>>, %arg3: memref<24x16xf32, #tpu.memory_space<vmem>>, %arg4: memref<32x32xf32, #tpu.memory_space<vmem>>, %arg5: memref<16x128xf32, #tpu.memory_space<vmem>>, %arg6: memref<16x64xf32, #tpu.memory_space<vmem>>, %arg7: memref<16x64xf32, #tpu.memory_space<vmem>>, %arg8: memref<1x128xf32, #tpu.memory_space<vmem>>, %arg9: memref<64x256xf32, #tpu.memory_space<vmem>>, %arg10: memref<32x128xf32, #tpu.memory_space<vmem>>, %arg11: memref<32x128xf32, #tpu.memory_space<vmem>>, %arg12: memref<1x256xf32, #tpu.memory_space<vmem>>, %arg13: memref<64x32xf32, #tpu.memory_space<vmem>>, %arg14: memref<1x32xf32, #tpu.memory_space<vmem>>, %arg15: memref<32x128xf32, #tpu.memory_space<vmem>>, %arg16: memref<1x128xf32, #tpu.memory_space<vmem>>, %arg17: memref<16x128xf32, #tpu.memory_space<vmem>>, %arg18: memref<16x64xf32, #tpu.memory_space<vmem>>) attributes {dimension_semantics = [#tpu.dimension_semantics<arbitrary>], iteration_bounds = array<i64: 1>, scalar_prefetch = 0 : i64, scratch_operands = 1 : i64, tpu.core_type = #tpu.core_type<tc>, window_params = [{pipeline_mode = #tpu.pipeline_mode<synchronous>, transform_indices = @transform_0, window_bounds = array<i64: 96, 1>}, {pipeline_mode = #tpu.pipeline_mode<synchronous>, transform_indices = @transform_1, window_bounds = array<i64: 16, 1>}, {pipeline_mode = #tpu.pipeline_mode<synchronous>, transform_indices = @transform_2, window_bounds = array<i64: 24, 16>}, {pipeline_mode = #tpu.pipeline_mode<synchronous>, transform_indices = @transform_3, window_bounds = array<i64: 32, 32>}, {pipeline_mode = #tpu.pipeline_mode<synchronous>, transform_indices = @transform_4, window_bounds = array<i64: 16, 128>}, {pipeline_mode = #tpu.pipeline_mode<synchronous>, transform_indices = @transform_5, window_bounds = array<i64: 16, 64>}, {pipeline_mode = #tpu.pipeline_mode<synchronous>, transform_indices = @transform_6, window_bounds = array<i64: 16, 64>}, {pipeline_mode = #tpu.pipeline_mode<synchronous>, transform_indices = @transform_7, window_bounds = array<i64: 1, 128>}, {pipeline_mode = #tpu.pipeline_mode<synchronous>, transform_indices = @transform_8, window_bounds = array<i64: 64, 256>}, {pipeline_mode = #tpu.pipeline_mode<synchronous>, transform_indices = @transform_9, window_bounds = array<i64: 32, 128>}, {pipeline_mode = #tpu.pipeline_mode<synchronous>, transform_indices = @transform_10, window_bounds = array<i64: 32, 128>}, {pipeline_mode = #tpu.pipeline_mode<synchronous>, transform_indices = @transform_11, window_bounds = array<i64: 1, 256>}, {pipeline_mode = #tpu.pipeline_mode<synchronous>, transform_indices = @transform_12, window_bounds = array<i64: 64, 32>}, {pipeline_mode = #tpu.pipeline_mode<synchronous>, transform_indices = @transform_13, window_bounds = array<i64: 1, 32>}, {pipeline_mode = #tpu.pipeline_mode<synchronous>, transform_indices = @transform_14, window_bounds = array<i64: 32, 128>}, {pipeline_mode = #tpu.pipeline_mode<synchronous>, transform_indices = @transform_15, window_bounds = array<i64: 1, 128>}, {pipeline_mode = #tpu.pipeline_mode<synchronous>, transform_indices = @transform_16, window_bounds = array<i64: 16, 128>}]} {
    %c0 = arith.constant 0 : index
    %c0_0 = arith.constant 0 : index
    %0 = vector.load %arg1[%c0, %c0_0] : memref<96x1xi32, #tpu.memory_space<vmem>>, vector<96x1xi32>
    %1 = tpu.iota {dimensions = array<i32: 1>} : vector<96x24xi32>
    %2 = vector.broadcast %0 : vector<96x1xi32> to vector<96x24xi32>
    %3 = arith.cmpi eq, %2, %1 : vector<96x24xi32>
    %cst = arith.constant 1.000000e+00 : f32
    %cst_1 = arith.constant 0.000000e+00 : f32
    %4 = vector.broadcast %cst : f32 to vector<96x24xf32>
    %5 = vector.broadcast %cst_1 : f32 to vector<96x24xf32>
    %6 = arith.select %3, %4, %5 : vector<96x24xi1>, vector<96x24xf32>
    %c0_2 = arith.constant 0 : index
    %c0_3 = arith.constant 0 : index
    %7 = vector.load %arg3[%c0_2, %c0_3] : memref<24x16xf32, #tpu.memory_space<vmem>>, vector<24x16xf32>
    %cst_4 = arith.constant dense<0.000000e+00> : vector<96x16xf32>
    %8 = tpu.matmul %6, %7, %cst_4 {dimension_numbers = #tpu.dot_dimension_numbers<[1], [0], [0], [1], [0, 0, 1, 1], [], []>} : vector<96x24xf32>, vector<24x16xf32>, vector<96x16xf32> -> vector<96x16xf32>
    %cst_5 = arith.constant 0.000000e+00 : f32
    %9 = vector.broadcast %cst_5 : f32 to vector<16x16xf32>
    %c0_6 = arith.constant 0 : index
    %c0_7 = arith.constant 0 : index
    %10 = vector.load %arg5[%c0_6, %c0_7] : memref<16x128xf32, #tpu.memory_space<vmem>>, vector<16x128xf32>
    %cst_8 = arith.constant dense<0.000000e+00> : vector<96x128xf32>
    %11 = tpu.matmul %8, %10, %cst_8 {dimension_numbers = #tpu.dot_dimension_numbers<[1], [0], [0], [1], [0, 0, 1, 1], [], []>} : vector<96x16xf32>, vector<16x128xf32>, vector<96x128xf32> -> vector<96x128xf32>
    %c0_9 = arith.constant 0 : index
    %c0_10 = arith.constant 0 : index
    %12 = vector.load %arg8[%c0_9, %c0_10] : memref<1x128xf32, #tpu.memory_space<vmem>>, vector<1x128xf32>
    %13 = vector.broadcast %12 : vector<1x128xf32> to vector<96x128xf32>
    %14 = arith.addf %11, %13 : vector<96x128xf32>
    %c0_11 = arith.constant 0 : index
    %c0_12 = arith.constant 0 : index
    %15 = vector.load %arg6[%c0_11, %c0_12] : memref<16x64xf32, #tpu.memory_space<vmem>>, vector<16x64xf32>
    %c0_13 = arith.constant 0 : index
    %c0_14 = arith.constant 0 : index
    %16 = vector.load %arg7[%c0_13, %c0_14] : memref<16x64xf32, #tpu.memory_space<vmem>>, vector<16x64xf32>
    %17 = vector.extract_strided_slice %14 {offsets = [0, 0], sizes = [16, 64], strides = [1, 1]} : vector<96x128xf32> to vector<16x64xf32>
    %cst_15 = arith.constant dense<0.000000e+00> : vector<16x64xf32>
    %18 = tpu.matmul %9, %15, %cst_15 {dimension_numbers = #tpu.dot_dimension_numbers<[1], [0], [0], [1], [0, 0, 1, 1], [], []>} : vector<16x16xf32>, vector<16x64xf32>, vector<16x64xf32> -> vector<16x64xf32>
    %19 = arith.addf %17, %18 : vector<16x64xf32>
    %20 = vector.extract_strided_slice %19 {offsets = [0, 0], sizes = [16, 16], strides = [1, 1]} : vector<16x64xf32> to vector<16x16xf32>
    %21 = arith.negf %20 : vector<16x16xf32>
    %22 = math.exp %21 : vector<16x16xf32>
    %cst_16 = arith.constant 1.000000e+00 : f32
    %23 = vector.broadcast %cst_16 : f32 to vector<16x16xf32>
    %24 = arith.addf %23, %22 : vector<16x16xf32>
    %25 = arith.divf %23, %24 : vector<16x16xf32>
    %26 = vector.extract_strided_slice %19 {offsets = [0, 16], sizes = [16, 16], strides = [1, 1]} : vector<16x64xf32> to vector<16x16xf32>
    %27 = arith.negf %26 : vector<16x16xf32>
    %28 = math.exp %27 : vector<16x16xf32>
    %cst_17 = arith.constant 1.000000e+00 : f32
    %29 = vector.broadcast %cst_17 : f32 to vector<16x16xf32>
    %30 = arith.addf %29, %28 : vector<16x16xf32>
    %31 = arith.divf %29, %30 : vector<16x16xf32>
    %32 = vector.extract_strided_slice %19 {offsets = [0, 32], sizes = [16, 16], strides = [1, 1]} : vector<16x64xf32> to vector<16x16xf32>
    %33 = math.tanh %32 : vector<16x16xf32>
    %34 = vector.extract_strided_slice %19 {offsets = [0, 48], sizes = [16, 16], strides = [1, 1]} : vector<16x64xf32> to vector<16x16xf32>
    %35 = arith.negf %34 : vector<16x16xf32>
    %36 = math.exp %35 : vector<16x16xf32>
    %cst_18 = arith.constant 1.000000e+00 : f32
    %37 = vector.broadcast %cst_18 : f32 to vector<16x16xf32>
    %38 = arith.addf %37, %36 : vector<16x16xf32>
    %39 = arith.divf %37, %38 : vector<16x16xf32>
    %40 = arith.mulf %31, %9 : vector<16x16xf32>
    %41 = arith.mulf %25, %33 : vector<16x16xf32>
    %42 = arith.addf %40, %41 : vector<16x16xf32>
    %43 = math.tanh %42 : vector<16x16xf32>
    %44 = arith.mulf %39, %43 : vector<16x16xf32>
    %45 = vector.extract_strided_slice %14 {offsets = [16, 0], sizes = [16, 64], strides = [1, 1]} : vector<96x128xf32> to vector<16x64xf32>
    %cst_19 = arith.constant dense<0.000000e+00> : vector<16x64xf32>
    %46 = tpu.matmul %44, %15, %cst_19 {dimension_numbers = #tpu.dot_dimension_numbers<[1], [0], [0], [1], [0, 0, 1, 1], [], []>} : vector<16x16xf32>, vector<16x64xf32>, vector<16x64xf32> -> vector<16x64xf32>
    %47 = arith.addf %45, %46 : vector<16x64xf32>
    %48 = vector.extract_strided_slice %47 {offsets = [0, 0], sizes = [16, 16], strides = [1, 1]} : vector<16x64xf32> to vector<16x16xf32>
    %49 = arith.negf %48 : vector<16x16xf32>
    %50 = math.exp %49 : vector<16x16xf32>
    %cst_20 = arith.constant 1.000000e+00 : f32
    %51 = vector.broadcast %cst_20 : f32 to vector<16x16xf32>
    %52 = arith.addf %51, %50 : vector<16x16xf32>
    %53 = arith.divf %51, %52 : vector<16x16xf32>
    %54 = vector.extract_strided_slice %47 {offsets = [0, 16], sizes = [16, 16], strides = [1, 1]} : vector<16x64xf32> to vector<16x16xf32>
    %55 = arith.negf %54 : vector<16x16xf32>
    %56 = math.exp %55 : vector<16x16xf32>
    %cst_21 = arith.constant 1.000000e+00 : f32
    %57 = vector.broadcast %cst_21 : f32 to vector<16x16xf32>
    %58 = arith.addf %57, %56 : vector<16x16xf32>
    %59 = arith.divf %57, %58 : vector<16x16xf32>
    %60 = vector.extract_strided_slice %47 {offsets = [0, 32], sizes = [16, 16], strides = [1, 1]} : vector<16x64xf32> to vector<16x16xf32>
    %61 = math.tanh %60 : vector<16x16xf32>
    %62 = vector.extract_strided_slice %47 {offsets = [0, 48], sizes = [16, 16], strides = [1, 1]} : vector<16x64xf32> to vector<16x16xf32>
    %63 = arith.negf %62 : vector<16x16xf32>
    %64 = math.exp %63 : vector<16x16xf32>
    %cst_22 = arith.constant 1.000000e+00 : f32
    %65 = vector.broadcast %cst_22 : f32 to vector<16x16xf32>
    %66 = arith.addf %65, %64 : vector<16x16xf32>
    %67 = arith.divf %65, %66 : vector<16x16xf32>
    %68 = arith.mulf %59, %42 : vector<16x16xf32>
    %69 = arith.mulf %53, %61 : vector<16x16xf32>
    %70 = arith.addf %68, %69 : vector<16x16xf32>
    %71 = math.tanh %70 : vector<16x16xf32>
    %72 = arith.mulf %67, %71 : vector<16x16xf32>
    %73 = vector.extract_strided_slice %14 {offsets = [32, 0], sizes = [16, 64], strides = [1, 1]} : vector<96x128xf32> to vector<16x64xf32>
    %cst_23 = arith.constant dense<0.000000e+00> : vector<16x64xf32>
    %74 = tpu.matmul %72, %15, %cst_23 {dimension_numbers = #tpu.dot_dimension_numbers<[1], [0], [0], [1], [0, 0, 1, 1], [], []>} : vector<16x16xf32>, vector<16x64xf32>, vector<16x64xf32> -> vector<16x64xf32>
    %75 = arith.addf %73, %74 : vector<16x64xf32>
    %76 = vector.extract_strided_slice %75 {offsets = [0, 0], sizes = [16, 16], strides = [1, 1]} : vector<16x64xf32> to vector<16x16xf32>
    %77 = arith.negf %76 : vector<16x16xf32>
    %78 = math.exp %77 : vector<16x16xf32>
    %cst_24 = arith.constant 1.000000e+00 : f32
    %79 = vector.broadcast %cst_24 : f32 to vector<16x16xf32>
    %80 = arith.addf %79, %78 : vector<16x16xf32>
    %81 = arith.divf %79, %80 : vector<16x16xf32>
    %82 = vector.extract_strided_slice %75 {offsets = [0, 16], sizes = [16, 16], strides = [1, 1]} : vector<16x64xf32> to vector<16x16xf32>
    %83 = arith.negf %82 : vector<16x16xf32>
    %84 = math.exp %83 : vector<16x16xf32>
    %cst_25 = arith.constant 1.000000e+00 : f32
    %85 = vector.broadcast %cst_25 : f32 to vector<16x16xf32>
    %86 = arith.addf %85, %84 : vector<16x16xf32>
    %87 = arith.divf %85, %86 : vector<16x16xf32>
    %88 = vector.extract_strided_slice %75 {offsets = [0, 32], sizes = [16, 16], strides = [1, 1]} : vector<16x64xf32> to vector<16x16xf32>
    %89 = math.tanh %88 : vector<16x16xf32>
    %90 = vector.extract_strided_slice %75 {offsets = [0, 48], sizes = [16, 16], strides = [1, 1]} : vector<16x64xf32> to vector<16x16xf32>
    %91 = arith.negf %90 : vector<16x16xf32>
    %92 = math.exp %91 : vector<16x16xf32>
    %cst_26 = arith.constant 1.000000e+00 : f32
    %93 = vector.broadcast %cst_26 : f32 to vector<16x16xf32>
    %94 = arith.addf %93, %92 : vector<16x16xf32>
    %95 = arith.divf %93, %94 : vector<16x16xf32>
    %96 = arith.mulf %87, %70 : vector<16x16xf32>
    %97 = arith.mulf %81, %89 : vector<16x16xf32>
    %98 = arith.addf %96, %97 : vector<16x16xf32>
    %99 = math.tanh %98 : vector<16x16xf32>
    %100 = arith.mulf %95, %99 : vector<16x16xf32>
    %101 = vector.extract_strided_slice %14 {offsets = [48, 0], sizes = [16, 64], strides = [1, 1]} : vector<96x128xf32> to vector<16x64xf32>
    %cst_27 = arith.constant dense<0.000000e+00> : vector<16x64xf32>
    %102 = tpu.matmul %100, %15, %cst_27 {dimension_numbers = #tpu.dot_dimension_numbers<[1], [0], [0], [1], [0, 0, 1, 1], [], []>} : vector<16x16xf32>, vector<16x64xf32>, vector<16x64xf32> -> vector<16x64xf32>
    %103 = arith.addf %101, %102 : vector<16x64xf32>
    %104 = vector.extract_strided_slice %103 {offsets = [0, 0], sizes = [16, 16], strides = [1, 1]} : vector<16x64xf32> to vector<16x16xf32>
    %105 = arith.negf %104 : vector<16x16xf32>
    %106 = math.exp %105 : vector<16x16xf32>
    %cst_28 = arith.constant 1.000000e+00 : f32
    %107 = vector.broadcast %cst_28 : f32 to vector<16x16xf32>
    %108 = arith.addf %107, %106 : vector<16x16xf32>
    %109 = arith.divf %107, %108 : vector<16x16xf32>
    %110 = vector.extract_strided_slice %103 {offsets = [0, 16], sizes = [16, 16], strides = [1, 1]} : vector<16x64xf32> to vector<16x16xf32>
    %111 = arith.negf %110 : vector<16x16xf32>
    %112 = math.exp %111 : vector<16x16xf32>
    %cst_29 = arith.constant 1.000000e+00 : f32
    %113 = vector.broadcast %cst_29 : f32 to vector<16x16xf32>
    %114 = arith.addf %113, %112 : vector<16x16xf32>
    %115 = arith.divf %113, %114 : vector<16x16xf32>
    %116 = vector.extract_strided_slice %103 {offsets = [0, 32], sizes = [16, 16], strides = [1, 1]} : vector<16x64xf32> to vector<16x16xf32>
    %117 = math.tanh %116 : vector<16x16xf32>
    %118 = vector.extract_strided_slice %103 {offsets = [0, 48], sizes = [16, 16], strides = [1, 1]} : vector<16x64xf32> to vector<16x16xf32>
    %119 = arith.negf %118 : vector<16x16xf32>
    %120 = math.exp %119 : vector<16x16xf32>
    %cst_30 = arith.constant 1.000000e+00 : f32
    %121 = vector.broadcast %cst_30 : f32 to vector<16x16xf32>
    %122 = arith.addf %121, %120 : vector<16x16xf32>
    %123 = arith.divf %121, %122 : vector<16x16xf32>
    %124 = arith.mulf %115, %98 : vector<16x16xf32>
    %125 = arith.mulf %109, %117 : vector<16x16xf32>
    %126 = arith.addf %124, %125 : vector<16x16xf32>
    %127 = math.tanh %126 : vector<16x16xf32>
    %128 = arith.mulf %123, %127 : vector<16x16xf32>
    %129 = vector.extract_strided_slice %14 {offsets = [64, 0], sizes = [16, 64], strides = [1, 1]} : vector<96x128xf32> to vector<16x64xf32>
    %cst_31 = arith.constant dense<0.000000e+00> : vector<16x64xf32>
    %130 = tpu.matmul %128, %15, %cst_31 {dimension_numbers = #tpu.dot_dimension_numbers<[1], [0], [0], [1], [0, 0, 1, 1], [], []>} : vector<16x16xf32>, vector<16x64xf32>, vector<16x64xf32> -> vector<16x64xf32>
    %131 = arith.addf %129, %130 : vector<16x64xf32>
    %132 = vector.extract_strided_slice %131 {offsets = [0, 0], sizes = [16, 16], strides = [1, 1]} : vector<16x64xf32> to vector<16x16xf32>
    %133 = arith.negf %132 : vector<16x16xf32>
    %134 = math.exp %133 : vector<16x16xf32>
    %cst_32 = arith.constant 1.000000e+00 : f32
    %135 = vector.broadcast %cst_32 : f32 to vector<16x16xf32>
    %136 = arith.addf %135, %134 : vector<16x16xf32>
    %137 = arith.divf %135, %136 : vector<16x16xf32>
    %138 = vector.extract_strided_slice %131 {offsets = [0, 16], sizes = [16, 16], strides = [1, 1]} : vector<16x64xf32> to vector<16x16xf32>
    %139 = arith.negf %138 : vector<16x16xf32>
    %140 = math.exp %139 : vector<16x16xf32>
    %cst_33 = arith.constant 1.000000e+00 : f32
    %141 = vector.broadcast %cst_33 : f32 to vector<16x16xf32>
    %142 = arith.addf %141, %140 : vector<16x16xf32>
    %143 = arith.divf %141, %142 : vector<16x16xf32>
    %144 = vector.extract_strided_slice %131 {offsets = [0, 32], sizes = [16, 16], strides = [1, 1]} : vector<16x64xf32> to vector<16x16xf32>
    %145 = math.tanh %144 : vector<16x16xf32>
    %146 = vector.extract_strided_slice %131 {offsets = [0, 48], sizes = [16, 16], strides = [1, 1]} : vector<16x64xf32> to vector<16x16xf32>
    %147 = arith.negf %146 : vector<16x16xf32>
    %148 = math.exp %147 : vector<16x16xf32>
    %cst_34 = arith.constant 1.000000e+00 : f32
    %149 = vector.broadcast %cst_34 : f32 to vector<16x16xf32>
    %150 = arith.addf %149, %148 : vector<16x16xf32>
    %151 = arith.divf %149, %150 : vector<16x16xf32>
    %152 = arith.mulf %143, %126 : vector<16x16xf32>
    %153 = arith.mulf %137, %145 : vector<16x16xf32>
    %154 = arith.addf %152, %153 : vector<16x16xf32>
    %155 = math.tanh %154 : vector<16x16xf32>
    %156 = arith.mulf %151, %155 : vector<16x16xf32>
    %157 = vector.extract_strided_slice %14 {offsets = [80, 0], sizes = [16, 64], strides = [1, 1]} : vector<96x128xf32> to vector<16x64xf32>
    %cst_35 = arith.constant dense<0.000000e+00> : vector<16x64xf32>
    %158 = tpu.matmul %156, %15, %cst_35 {dimension_numbers = #tpu.dot_dimension_numbers<[1], [0], [0], [1], [0, 0, 1, 1], [], []>} : vector<16x16xf32>, vector<16x64xf32>, vector<16x64xf32> -> vector<16x64xf32>
    %159 = arith.addf %157, %158 : vector<16x64xf32>
    %160 = vector.extract_strided_slice %159 {offsets = [0, 0], sizes = [16, 16], strides = [1, 1]} : vector<16x64xf32> to vector<16x16xf32>
    %161 = arith.negf %160 : vector<16x16xf32>
    %162 = math.exp %161 : vector<16x16xf32>
    %cst_36 = arith.constant 1.000000e+00 : f32
    %163 = vector.broadcast %cst_36 : f32 to vector<16x16xf32>
    %164 = arith.addf %163, %162 : vector<16x16xf32>
    %165 = arith.divf %163, %164 : vector<16x16xf32>
    %166 = vector.extract_strided_slice %159 {offsets = [0, 16], sizes = [16, 16], strides = [1, 1]} : vector<16x64xf32> to vector<16x16xf32>
    %167 = arith.negf %166 : vector<16x16xf32>
    %168 = math.exp %167 : vector<16x16xf32>
    %cst_37 = arith.constant 1.000000e+00 : f32
    %169 = vector.broadcast %cst_37 : f32 to vector<16x16xf32>
    %170 = arith.addf %169, %168 : vector<16x16xf32>
    %171 = arith.divf %169, %170 : vector<16x16xf32>
    %172 = vector.extract_strided_slice %159 {offsets = [0, 32], sizes = [16, 16], strides = [1, 1]} : vector<16x64xf32> to vector<16x16xf32>
    %173 = math.tanh %172 : vector<16x16xf32>
    %174 = vector.extract_strided_slice %159 {offsets = [0, 48], sizes = [16, 16], strides = [1, 1]} : vector<16x64xf32> to vector<16x16xf32>
    %175 = arith.negf %174 : vector<16x16xf32>
    %176 = math.exp %175 : vector<16x16xf32>
    %cst_38 = arith.constant 1.000000e+00 : f32
    %177 = vector.broadcast %cst_38 : f32 to vector<16x16xf32>
    %178 = arith.addf %177, %176 : vector<16x16xf32>
    %179 = arith.divf %177, %178 : vector<16x16xf32>
    %180 = arith.mulf %171, %154 : vector<16x16xf32>
    %181 = arith.mulf %165, %173 : vector<16x16xf32>
    %182 = arith.addf %180, %181 : vector<16x16xf32>
    %183 = math.tanh %182 : vector<16x16xf32>
    %184 = arith.mulf %179, %183 : vector<16x16xf32>
    %185 = vector.extract_strided_slice %14 {offsets = [80, 64], sizes = [16, 64], strides = [1, 1]} : vector<96x128xf32> to vector<16x64xf32>
    %cst_39 = arith.constant dense<0.000000e+00> : vector<16x64xf32>
    %186 = tpu.matmul %9, %16, %cst_39 {dimension_numbers = #tpu.dot_dimension_numbers<[1], [0], [0], [1], [0, 0, 1, 1], [], []>} : vector<16x16xf32>, vector<16x64xf32>, vector<16x64xf32> -> vector<16x64xf32>
    %187 = arith.addf %185, %186 : vector<16x64xf32>
    %188 = vector.extract_strided_slice %187 {offsets = [0, 0], sizes = [16, 16], strides = [1, 1]} : vector<16x64xf32> to vector<16x16xf32>
    %189 = arith.negf %188 : vector<16x16xf32>
    %190 = math.exp %189 : vector<16x16xf32>
    %cst_40 = arith.constant 1.000000e+00 : f32
    %191 = vector.broadcast %cst_40 : f32 to vector<16x16xf32>
    %192 = arith.addf %191, %190 : vector<16x16xf32>
    %193 = arith.divf %191, %192 : vector<16x16xf32>
    %194 = vector.extract_strided_slice %187 {offsets = [0, 16], sizes = [16, 16], strides = [1, 1]} : vector<16x64xf32> to vector<16x16xf32>
    %195 = arith.negf %194 : vector<16x16xf32>
    %196 = math.exp %195 : vector<16x16xf32>
    %cst_41 = arith.constant 1.000000e+00 : f32
    %197 = vector.broadcast %cst_41 : f32 to vector<16x16xf32>
    %198 = arith.addf %197, %196 : vector<16x16xf32>
    %199 = arith.divf %197, %198 : vector<16x16xf32>
    %200 = vector.extract_strided_slice %187 {offsets = [0, 32], sizes = [16, 16], strides = [1, 1]} : vector<16x64xf32> to vector<16x16xf32>
    %201 = math.tanh %200 : vector<16x16xf32>
    %202 = vector.extract_strided_slice %187 {offsets = [0, 48], sizes = [16, 16], strides = [1, 1]} : vector<16x64xf32> to vector<16x16xf32>
    %203 = arith.negf %202 : vector<16x16xf32>
    %204 = math.exp %203 : vector<16x16xf32>
    %cst_42 = arith.constant 1.000000e+00 : f32
    %205 = vector.broadcast %cst_42 : f32 to vector<16x16xf32>
    %206 = arith.addf %205, %204 : vector<16x16xf32>
    %207 = arith.divf %205, %206 : vector<16x16xf32>
    %208 = arith.mulf %199, %9 : vector<16x16xf32>
    %209 = arith.mulf %193, %201 : vector<16x16xf32>
    %210 = arith.addf %208, %209 : vector<16x16xf32>
    %211 = math.tanh %210 : vector<16x16xf32>
    %212 = arith.mulf %207, %211 : vector<16x16xf32>
    %c0_43 = arith.constant 0 : index
    %c0_44 = arith.constant 0 : index
    %213 = vector.load %arg2[%c0_43, %c0_44] : memref<16x1xi32, #tpu.memory_space<vmem>>, vector<16x1xi32>
    %214 = tpu.iota {dimensions = array<i32: 1>} : vector<16x32xi32>
    %215 = vector.broadcast %213 : vector<16x1xi32> to vector<16x32xi32>
    %216 = arith.cmpi eq, %215, %214 : vector<16x32xi32>
    %cst_45 = arith.constant 1.000000e+00 : f32
    %cst_46 = arith.constant 0.000000e+00 : f32
    %217 = vector.broadcast %cst_45 : f32 to vector<16x32xf32>
    %218 = vector.broadcast %cst_46 : f32 to vector<16x32xf32>
    %219 = arith.select %216, %217, %218 : vector<16x32xi1>, vector<16x32xf32>
    %c0_47 = arith.constant 0 : index
    %c0_48 = arith.constant 0 : index
    %220 = vector.load %arg4[%c0_47, %c0_48] : memref<32x32xf32, #tpu.memory_space<vmem>>, vector<32x32xf32>
    %cst_49 = arith.constant dense<0.000000e+00> : vector<16x32xf32>
    %221 = tpu.matmul %219, %220, %cst_49 {dimension_numbers = #tpu.dot_dimension_numbers<[1], [0], [0], [1], [0, 0, 1, 1], [], []>} : vector<16x32xf32>, vector<32x32xf32>, vector<16x32xf32> -> vector<16x32xf32>
    %cst_50 = arith.constant 0.000000e+00 : f32
    %222 = vector.broadcast %cst_50 : f32 to vector<2x32xf32>
    %c0_51 = arith.constant 0 : index
    %c0_52 = arith.constant 0 : index
    %223 = vector.load %arg9[%c0_51, %c0_52] : memref<64x256xf32, #tpu.memory_space<vmem>>, vector<64x256xf32>
    %224 = vector.extract_strided_slice %223 {offsets = [0, 0], sizes = [32, 256], strides = [1, 1]} : vector<64x256xf32> to vector<32x256xf32>
    %cst_53 = arith.constant dense<0.000000e+00> : vector<16x256xf32>
    %225 = tpu.matmul %221, %224, %cst_53 {dimension_numbers = #tpu.dot_dimension_numbers<[1], [0], [0], [1], [0, 0, 1, 1], [], []>} : vector<16x32xf32>, vector<32x256xf32>, vector<16x256xf32> -> vector<16x256xf32>
    %226 = vector.extract_strided_slice %223 {offsets = [32, 0], sizes = [16, 256], strides = [1, 1]} : vector<64x256xf32> to vector<16x256xf32>
    %cst_54 = arith.constant dense<0.000000e+00> : vector<16x256xf32>
    %227 = tpu.matmul %184, %226, %cst_54 {dimension_numbers = #tpu.dot_dimension_numbers<[1], [0], [0], [1], [0, 0, 1, 1], [], []>} : vector<16x16xf32>, vector<16x256xf32>, vector<16x256xf32> -> vector<16x256xf32>
    %228 = arith.addf %225, %227 : vector<16x256xf32>
    %229 = vector.extract_strided_slice %223 {offsets = [48, 0], sizes = [16, 256], strides = [1, 1]} : vector<64x256xf32> to vector<16x256xf32>
    %cst_55 = arith.constant dense<0.000000e+00> : vector<16x256xf32>
    %230 = tpu.matmul %212, %229, %cst_55 {dimension_numbers = #tpu.dot_dimension_numbers<[1], [0], [0], [1], [0, 0, 1, 1], [], []>} : vector<16x16xf32>, vector<16x256xf32>, vector<16x256xf32> -> vector<16x256xf32>
    %231 = arith.addf %228, %230 : vector<16x256xf32>
    %c0_56 = arith.constant 0 : index
    %c0_57 = arith.constant 0 : index
    %232 = vector.load %arg12[%c0_56, %c0_57] : memref<1x256xf32, #tpu.memory_space<vmem>>, vector<1x256xf32>
    %233 = vector.broadcast %232 : vector<1x256xf32> to vector<16x256xf32>
    %234 = arith.addf %231, %233 : vector<16x256xf32>
    %c0_58 = arith.constant 0 : index
    %c0_59 = arith.constant 0 : index
    %235 = vector.load %arg10[%c0_58, %c0_59] : memref<32x128xf32, #tpu.memory_space<vmem>>, vector<32x128xf32>
    %c0_60 = arith.constant 0 : index
    %c0_61 = arith.constant 0 : index
    %236 = vector.load %arg11[%c0_60, %c0_61] : memref<32x128xf32, #tpu.memory_space<vmem>>, vector<32x128xf32>
    %237 = vector.extract_strided_slice %234 {offsets = [0, 0], sizes = [2, 128], strides = [1, 1]} : vector<16x256xf32> to vector<2x128xf32>
    %cst_62 = arith.constant dense<0.000000e+00> : vector<2x128xf32>
    %238 = tpu.matmul %222, %235, %cst_62 {dimension_numbers = #tpu.dot_dimension_numbers<[1], [0], [0], [1], [0, 0, 1, 1], [], []>} : vector<2x32xf32>, vector<32x128xf32>, vector<2x128xf32> -> vector<2x128xf32>
    %239 = arith.addf %237, %238 : vector<2x128xf32>
    %240 = vector.extract_strided_slice %239 {offsets = [0, 0], sizes = [2, 32], strides = [1, 1]} : vector<2x128xf32> to vector<2x32xf32>
    %241 = arith.negf %240 : vector<2x32xf32>
    %242 = math.exp %241 : vector<2x32xf32>
    %cst_63 = arith.constant 1.000000e+00 : f32
    %243 = vector.broadcast %cst_63 : f32 to vector<2x32xf32>
    %244 = arith.addf %243, %242 : vector<2x32xf32>
    %245 = arith.divf %243, %244 : vector<2x32xf32>
    %246 = vector.extract_strided_slice %239 {offsets = [0, 32], sizes = [2, 32], strides = [1, 1]} : vector<2x128xf32> to vector<2x32xf32>
    %247 = arith.negf %246 : vector<2x32xf32>
    %248 = math.exp %247 : vector<2x32xf32>
    %cst_64 = arith.constant 1.000000e+00 : f32
    %249 = vector.broadcast %cst_64 : f32 to vector<2x32xf32>
    %250 = arith.addf %249, %248 : vector<2x32xf32>
    %251 = arith.divf %249, %250 : vector<2x32xf32>
    %252 = vector.extract_strided_slice %239 {offsets = [0, 64], sizes = [2, 32], strides = [1, 1]} : vector<2x128xf32> to vector<2x32xf32>
    %253 = math.tanh %252 : vector<2x32xf32>
    %254 = vector.extract_strided_slice %239 {offsets = [0, 96], sizes = [2, 32], strides = [1, 1]} : vector<2x128xf32> to vector<2x32xf32>
    %255 = arith.negf %254 : vector<2x32xf32>
    %256 = math.exp %255 : vector<2x32xf32>
    %cst_65 = arith.constant 1.000000e+00 : f32
    %257 = vector.broadcast %cst_65 : f32 to vector<2x32xf32>
    %258 = arith.addf %257, %256 : vector<2x32xf32>
    %259 = arith.divf %257, %258 : vector<2x32xf32>
    %260 = arith.mulf %251, %222 : vector<2x32xf32>
    %261 = arith.mulf %245, %253 : vector<2x32xf32>
    %262 = arith.addf %260, %261 : vector<2x32xf32>
    %263 = math.tanh %262 : vector<2x32xf32>
    %264 = arith.mulf %259, %263 : vector<2x32xf32>
    %c0_66 = arith.constant 0 : index
    %c0_67 = arith.constant 0 : index
    %265 = vector.load %arg18[%c0_66, %c0_67] : memref<16x64xf32, #tpu.memory_space<vmem>>, vector<2x32xf32>
    tpu.vector_store %arg18[%c0_66, %c0_67], %264 {strides = array<i32>} : memref<16x64xf32, #tpu.memory_space<vmem>>, vector<2x32xf32>,
    %266 = vector.extract_strided_slice %234 {offsets = [2, 0], sizes = [2, 128], strides = [1, 1]} : vector<16x256xf32> to vector<2x128xf32>
    %cst_68 = arith.constant dense<0.000000e+00> : vector<2x128xf32>
    %267 = tpu.matmul %264, %235, %cst_68 {dimension_numbers = #tpu.dot_dimension_numbers<[1], [0], [0], [1], [0, 0, 1, 1], [], []>} : vector<2x32xf32>, vector<32x128xf32>, vector<2x128xf32> -> vector<2x128xf32>
    %268 = arith.addf %266, %267 : vector<2x128xf32>
    %269 = vector.extract_strided_slice %268 {offsets = [0, 0], sizes = [2, 32], strides = [1, 1]} : vector<2x128xf32> to vector<2x32xf32>
    %270 = arith.negf %269 : vector<2x32xf32>
    %271 = math.exp %270 : vector<2x32xf32>
    %cst_69 = arith.constant 1.000000e+00 : f32
    %272 = vector.broadcast %cst_69 : f32 to vector<2x32xf32>
    %273 = arith.addf %272, %271 : vector<2x32xf32>
    %274 = arith.divf %272, %273 : vector<2x32xf32>
    %275 = vector.extract_strided_slice %268 {offsets = [0, 32], sizes = [2, 32], strides = [1, 1]} : vector<2x128xf32> to vector<2x32xf32>
    %276 = arith.negf %275 : vector<2x32xf32>
    %277 = math.exp %276 : vector<2x32xf32>
    %cst_70 = arith.constant 1.000000e+00 : f32
    %278 = vector.broadcast %cst_70 : f32 to vector<2x32xf32>
    %279 = arith.addf %278, %277 : vector<2x32xf32>
    %280 = arith.divf %278, %279 : vector<2x32xf32>
    %281 = vector.extract_strided_slice %268 {offsets = [0, 64], sizes = [2, 32], strides = [1, 1]} : vector<2x128xf32> to vector<2x32xf32>
    %282 = math.tanh %281 : vector<2x32xf32>
    %283 = vector.extract_strided_slice %268 {offsets = [0, 96], sizes = [2, 32], strides = [1, 1]} : vector<2x128xf32> to vector<2x32xf32>
    %284 = arith.negf %283 : vector<2x32xf32>
    %285 = math.exp %284 : vector<2x32xf32>
    %cst_71 = arith.constant 1.000000e+00 : f32
    %286 = vector.broadcast %cst_71 : f32 to vector<2x32xf32>
    %287 = arith.addf %286, %285 : vector<2x32xf32>
    %288 = arith.divf %286, %287 : vector<2x32xf32>
    %289 = arith.mulf %280, %262 : vector<2x32xf32>
    %290 = arith.mulf %274, %282 : vector<2x32xf32>
    %291 = arith.addf %289, %290 : vector<2x32xf32>
    %292 = math.tanh %291 : vector<2x32xf32>
    %293 = arith.mulf %288, %292 : vector<2x32xf32>
    %c2 = arith.constant 2 : index
    %c0_72 = arith.constant 0 : index
    %294 = vector.load %arg18[%c2, %c0_72] : memref<16x64xf32, #tpu.memory_space<vmem>>, vector<2x32xf32>
    tpu.vector_store %arg18[%c2, %c0_72], %293 {strides = array<i32>} : memref<16x64xf32, #tpu.memory_space<vmem>>, vector<2x32xf32>,
    %295 = vector.extract_strided_slice %234 {offsets = [4, 0], sizes = [2, 128], strides = [1, 1]} : vector<16x256xf32> to vector<2x128xf32>
    %cst_73 = arith.constant dense<0.000000e+00> : vector<2x128xf32>
    %296 = tpu.matmul %293, %235, %cst_73 {dimension_numbers = #tpu.dot_dimension_numbers<[1], [0], [0], [1], [0, 0, 1, 1], [], []>} : vector<2x32xf32>, vector<32x128xf32>, vector<2x128xf32> -> vector<2x128xf32>
    %297 = arith.addf %295, %296 : vector<2x128xf32>
    %298 = vector.extract_strided_slice %297 {offsets = [0, 0], sizes = [2, 32], strides = [1, 1]} : vector<2x128xf32> to vector<2x32xf32>
    %299 = arith.negf %298 : vector<2x32xf32>
    %300 = math.exp %299 : vector<2x32xf32>
    %cst_74 = arith.constant 1.000000e+00 : f32
    %301 = vector.broadcast %cst_74 : f32 to vector<2x32xf32>
    %302 = arith.addf %301, %300 : vector<2x32xf32>
    %303 = arith.divf %301, %302 : vector<2x32xf32>
    %304 = vector.extract_strided_slice %297 {offsets = [0, 32], sizes = [2, 32], strides = [1, 1]} : vector<2x128xf32> to vector<2x32xf32>
    %305 = arith.negf %304 : vector<2x32xf32>
    %306 = math.exp %305 : vector<2x32xf32>
    %cst_75 = arith.constant 1.000000e+00 : f32
    %307 = vector.broadcast %cst_75 : f32 to vector<2x32xf32>
    %308 = arith.addf %307, %306 : vector<2x32xf32>
    %309 = arith.divf %307, %308 : vector<2x32xf32>
    %310 = vector.extract_strided_slice %297 {offsets = [0, 64], sizes = [2, 32], strides = [1, 1]} : vector<2x128xf32> to vector<2x32xf32>
    %311 = math.tanh %310 : vector<2x32xf32>
    %312 = vector.extract_strided_slice %297 {offsets = [0, 96], sizes = [2, 32], strides = [1, 1]} : vector<2x128xf32> to vector<2x32xf32>
    %313 = arith.negf %312 : vector<2x32xf32>
    %314 = math.exp %313 : vector<2x32xf32>
    %cst_76 = arith.constant 1.000000e+00 : f32
    %315 = vector.broadcast %cst_76 : f32 to vector<2x32xf32>
    %316 = arith.addf %315, %314 : vector<2x32xf32>
    %317 = arith.divf %315, %316 : vector<2x32xf32>
    %318 = arith.mulf %309, %291 : vector<2x32xf32>
    %319 = arith.mulf %303, %311 : vector<2x32xf32>
    %320 = arith.addf %318, %319 : vector<2x32xf32>
    %321 = math.tanh %320 : vector<2x32xf32>
    %322 = arith.mulf %317, %321 : vector<2x32xf32>
    %c4 = arith.constant 4 : index
    %c0_77 = arith.constant 0 : index
    %323 = vector.load %arg18[%c4, %c0_77] : memref<16x64xf32, #tpu.memory_space<vmem>>, vector<2x32xf32>
    tpu.vector_store %arg18[%c4, %c0_77], %322 {strides = array<i32>} : memref<16x64xf32, #tpu.memory_space<vmem>>, vector<2x32xf32>,
    %324 = vector.extract_strided_slice %234 {offsets = [6, 0], sizes = [2, 128], strides = [1, 1]} : vector<16x256xf32> to vector<2x128xf32>
    %cst_78 = arith.constant dense<0.000000e+00> : vector<2x128xf32>
    %325 = tpu.matmul %322, %235, %cst_78 {dimension_numbers = #tpu.dot_dimension_numbers<[1], [0], [0], [1], [0, 0, 1, 1], [], []>} : vector<2x32xf32>, vector<32x128xf32>, vector<2x128xf32> -> vector<2x128xf32>
    %326 = arith.addf %324, %325 : vector<2x128xf32>
    %327 = vector.extract_strided_slice %326 {offsets = [0, 0], sizes = [2, 32], strides = [1, 1]} : vector<2x128xf32> to vector<2x32xf32>
    %328 = arith.negf %327 : vector<2x32xf32>
    %329 = math.exp %328 : vector<2x32xf32>
    %cst_79 = arith.constant 1.000000e+00 : f32
    %330 = vector.broadcast %cst_79 : f32 to vector<2x32xf32>
    %331 = arith.addf %330, %329 : vector<2x32xf32>
    %332 = arith.divf %330, %331 : vector<2x32xf32>
    %333 = vector.extract_strided_slice %326 {offsets = [0, 32], sizes = [2, 32], strides = [1, 1]} : vector<2x128xf32> to vector<2x32xf32>
    %334 = arith.negf %333 : vector<2x32xf32>
    %335 = math.exp %334 : vector<2x32xf32>
    %cst_80 = arith.constant 1.000000e+00 : f32
    %336 = vector.broadcast %cst_80 : f32 to vector<2x32xf32>
    %337 = arith.addf %336, %335 : vector<2x32xf32>
    %338 = arith.divf %336, %337 : vector<2x32xf32>
    %339 = vector.extract_strided_slice %326 {offsets = [0, 64], sizes = [2, 32], strides = [1, 1]} : vector<2x128xf32> to vector<2x32xf32>
    %340 = math.tanh %339 : vector<2x32xf32>
    %341 = vector.extract_strided_slice %326 {offsets = [0, 96], sizes = [2, 32], strides = [1, 1]} : vector<2x128xf32> to vector<2x32xf32>
    %342 = arith.negf %341 : vector<2x32xf32>
    %343 = math.exp %342 : vector<2x32xf32>
    %cst_81 = arith.constant 1.000000e+00 : f32
    %344 = vector.broadcast %cst_81 : f32 to vector<2x32xf32>
    %345 = arith.addf %344, %343 : vector<2x32xf32>
    %346 = arith.divf %344, %345 : vector<2x32xf32>
    %347 = arith.mulf %338, %320 : vector<2x32xf32>
    %348 = arith.mulf %332, %340 : vector<2x32xf32>
    %349 = arith.addf %347, %348 : vector<2x32xf32>
    %350 = math.tanh %349 : vector<2x32xf32>
    %351 = arith.mulf %346, %350 : vector<2x32xf32>
    %c6 = arith.constant 6 : index
    %c0_82 = arith.constant 0 : index
    %352 = vector.load %arg18[%c6, %c0_82] : memref<16x64xf32, #tpu.memory_space<vmem>>, vector<2x32xf32>
    tpu.vector_store %arg18[%c6, %c0_82], %351 {strides = array<i32>} : memref<16x64xf32, #tpu.memory_space<vmem>>, vector<2x32xf32>,
    %353 = vector.extract_strided_slice %234 {offsets = [8, 0], sizes = [2, 128], strides = [1, 1]} : vector<16x256xf32> to vector<2x128xf32>
    %cst_83 = arith.constant dense<0.000000e+00> : vector<2x128xf32>
    %354 = tpu.matmul %351, %235, %cst_83 {dimension_numbers = #tpu.dot_dimension_numbers<[1], [0], [0], [1], [0, 0, 1, 1], [], []>} : vector<2x32xf32>, vector<32x128xf32>, vector<2x128xf32> -> vector<2x128xf32>
    %355 = arith.addf %353, %354 : vector<2x128xf32>
    %356 = vector.extract_strided_slice %355 {offsets = [0, 0], sizes = [2, 32], strides = [1, 1]} : vector<2x128xf32> to vector<2x32xf32>
    %357 = arith.negf %356 : vector<2x32xf32>
    %358 = math.exp %357 : vector<2x32xf32>
    %cst_84 = arith.constant 1.000000e+00 : f32
    %359 = vector.broadcast %cst_84 : f32 to vector<2x32xf32>
    %360 = arith.addf %359, %358 : vector<2x32xf32>
    %361 = arith.divf %359, %360 : vector<2x32xf32>
    %362 = vector.extract_strided_slice %355 {offsets = [0, 32], sizes = [2, 32], strides = [1, 1]} : vector<2x128xf32> to vector<2x32xf32>
    %363 = arith.negf %362 : vector<2x32xf32>
    %364 = math.exp %363 : vector<2x32xf32>
    %cst_85 = arith.constant 1.000000e+00 : f32
    %365 = vector.broadcast %cst_85 : f32 to vector<2x32xf32>
    %366 = arith.addf %365, %364 : vector<2x32xf32>
    %367 = arith.divf %365, %366 : vector<2x32xf32>
    %368 = vector.extract_strided_slice %355 {offsets = [0, 64], sizes = [2, 32], strides = [1, 1]} : vector<2x128xf32> to vector<2x32xf32>
    %369 = math.tanh %368 : vector<2x32xf32>
    %370 = vector.extract_strided_slice %355 {offsets = [0, 96], sizes = [2, 32], strides = [1, 1]} : vector<2x128xf32> to vector<2x32xf32>
    %371 = arith.negf %370 : vector<2x32xf32>
    %372 = math.exp %371 : vector<2x32xf32>
    %cst_86 = arith.constant 1.000000e+00 : f32
    %373 = vector.broadcast %cst_86 : f32 to vector<2x32xf32>
    %374 = arith.addf %373, %372 : vector<2x32xf32>
    %375 = arith.divf %373, %374 : vector<2x32xf32>
    %376 = arith.mulf %367, %349 : vector<2x32xf32>
    %377 = arith.mulf %361, %369 : vector<2x32xf32>
    %378 = arith.addf %376, %377 : vector<2x32xf32>
    %379 = math.tanh %378 : vector<2x32xf32>
    %380 = arith.mulf %375, %379 : vector<2x32xf32>
    %c8 = arith.constant 8 : index
    %c0_87 = arith.constant 0 : index
    %381 = vector.load %arg18[%c8, %c0_87] : memref<16x64xf32, #tpu.memory_space<vmem>>, vector<2x32xf32>
    tpu.vector_store %arg18[%c8, %c0_87], %380 {strides = array<i32>} : memref<16x64xf32, #tpu.memory_space<vmem>>, vector<2x32xf32>,
    %382 = vector.extract_strided_slice %234 {offsets = [10, 0], sizes = [2, 128], strides = [1, 1]} : vector<16x256xf32> to vector<2x128xf32>
    %cst_88 = arith.constant dense<0.000000e+00> : vector<2x128xf32>
    %383 = tpu.matmul %380, %235, %cst_88 {dimension_numbers = #tpu.dot_dimension_numbers<[1], [0], [0], [1], [0, 0, 1, 1], [], []>} : vector<2x32xf32>, vector<32x128xf32>, vector<2x128xf32> -> vector<2x128xf32>
    %384 = arith.addf %382, %383 : vector<2x128xf32>
    %385 = vector.extract_strided_slice %384 {offsets = [0, 0], sizes = [2, 32], strides = [1, 1]} : vector<2x128xf32> to vector<2x32xf32>
    %386 = arith.negf %385 : vector<2x32xf32>
    %387 = math.exp %386 : vector<2x32xf32>
    %cst_89 = arith.constant 1.000000e+00 : f32
    %388 = vector.broadcast %cst_89 : f32 to vector<2x32xf32>
    %389 = arith.addf %388, %387 : vector<2x32xf32>
    %390 = arith.divf %388, %389 : vector<2x32xf32>
    %391 = vector.extract_strided_slice %384 {offsets = [0, 32], sizes = [2, 32], strides = [1, 1]} : vector<2x128xf32> to vector<2x32xf32>
    %392 = arith.negf %391 : vector<2x32xf32>
    %393 = math.exp %392 : vector<2x32xf32>
    %cst_90 = arith.constant 1.000000e+00 : f32
    %394 = vector.broadcast %cst_90 : f32 to vector<2x32xf32>
    %395 = arith.addf %394, %393 : vector<2x32xf32>
    %396 = arith.divf %394, %395 : vector<2x32xf32>
    %397 = vector.extract_strided_slice %384 {offsets = [0, 64], sizes = [2, 32], strides = [1, 1]} : vector<2x128xf32> to vector<2x32xf32>
    %398 = math.tanh %397 : vector<2x32xf32>
    %399 = vector.extract_strided_slice %384 {offsets = [0, 96], sizes = [2, 32], strides = [1, 1]} : vector<2x128xf32> to vector<2x32xf32>
    %400 = arith.negf %399 : vector<2x32xf32>
    %401 = math.exp %400 : vector<2x32xf32>
    %cst_91 = arith.constant 1.000000e+00 : f32
    %402 = vector.broadcast %cst_91 : f32 to vector<2x32xf32>
    %403 = arith.addf %402, %401 : vector<2x32xf32>
    %404 = arith.divf %402, %403 : vector<2x32xf32>
    %405 = arith.mulf %396, %378 : vector<2x32xf32>
    %406 = arith.mulf %390, %398 : vector<2x32xf32>
    %407 = arith.addf %405, %406 : vector<2x32xf32>
    %408 = math.tanh %407 : vector<2x32xf32>
    %409 = arith.mulf %404, %408 : vector<2x32xf32>
    %c10 = arith.constant 10 : index
    %c0_92 = arith.constant 0 : index
    %410 = vector.load %arg18[%c10, %c0_92] : memref<16x64xf32, #tpu.memory_space<vmem>>, vector<2x32xf32>
    tpu.vector_store %arg18[%c10, %c0_92], %409 {strides = array<i32>} : memref<16x64xf32, #tpu.memory_space<vmem>>, vector<2x32xf32>,
    %411 = vector.extract_strided_slice %234 {offsets = [12, 0], sizes = [2, 128], strides = [1, 1]} : vector<16x256xf32> to vector<2x128xf32>
    %cst_93 = arith.constant dense<0.000000e+00> : vector<2x128xf32>
    %412 = tpu.matmul %409, %235, %cst_93 {dimension_numbers = #tpu.dot_dimension_numbers<[1], [0], [0], [1], [0, 0, 1, 1], [], []>} : vector<2x32xf32>, vector<32x128xf32>, vector<2x128xf32> -> vector<2x128xf32>
    %413 = arith.addf %411, %412 : vector<2x128xf32>
    %414 = vector.extract_strided_slice %413 {offsets = [0, 0], sizes = [2, 32], strides = [1, 1]} : vector<2x128xf32> to vector<2x32xf32>
    %415 = arith.negf %414 : vector<2x32xf32>
    %416 = math.exp %415 : vector<2x32xf32>
    %cst_94 = arith.constant 1.000000e+00 : f32
    %417 = vector.broadcast %cst_94 : f32 to vector<2x32xf32>
    %418 = arith.addf %417, %416 : vector<2x32xf32>
    %419 = arith.divf %417, %418 : vector<2x32xf32>
    %420 = vector.extract_strided_slice %413 {offsets = [0, 32], sizes = [2, 32], strides = [1, 1]} : vector<2x128xf32> to vector<2x32xf32>
    %421 = arith.negf %420 : vector<2x32xf32>
    %422 = math.exp %421 : vector<2x32xf32>
    %cst_95 = arith.constant 1.000000e+00 : f32
    %423 = vector.broadcast %cst_95 : f32 to vector<2x32xf32>
    %424 = arith.addf %423, %422 : vector<2x32xf32>
    %425 = arith.divf %423, %424 : vector<2x32xf32>
    %426 = vector.extract_strided_slice %413 {offsets = [0, 64], sizes = [2, 32], strides = [1, 1]} : vector<2x128xf32> to vector<2x32xf32>
    %427 = math.tanh %426 : vector<2x32xf32>
    %428 = vector.extract_strided_slice %413 {offsets = [0, 96], sizes = [2, 32], strides = [1, 1]} : vector<2x128xf32> to vector<2x32xf32>
    %429 = arith.negf %428 : vector<2x32xf32>
    %430 = math.exp %429 : vector<2x32xf32>
    %cst_96 = arith.constant 1.000000e+00 : f32
    %431 = vector.broadcast %cst_96 : f32 to vector<2x32xf32>
    %432 = arith.addf %431, %430 : vector<2x32xf32>
    %433 = arith.divf %431, %432 : vector<2x32xf32>
    %434 = arith.mulf %425, %407 : vector<2x32xf32>
    %435 = arith.mulf %419, %427 : vector<2x32xf32>
    %436 = arith.addf %434, %435 : vector<2x32xf32>
    %437 = math.tanh %436 : vector<2x32xf32>
    %438 = arith.mulf %433, %437 : vector<2x32xf32>
    %c12 = arith.constant 12 : index
    %c0_97 = arith.constant 0 : index
    %439 = vector.load %arg18[%c12, %c0_97] : memref<16x64xf32, #tpu.memory_space<vmem>>, vector<2x32xf32>
    tpu.vector_store %arg18[%c12, %c0_97], %438 {strides = array<i32>} : memref<16x64xf32, #tpu.memory_space<vmem>>, vector<2x32xf32>,
    %440 = vector.extract_strided_slice %234 {offsets = [14, 0], sizes = [2, 128], strides = [1, 1]} : vector<16x256xf32> to vector<2x128xf32>
    %cst_98 = arith.constant dense<0.000000e+00> : vector<2x128xf32>
    %441 = tpu.matmul %438, %235, %cst_98 {dimension_numbers = #tpu.dot_dimension_numbers<[1], [0], [0], [1], [0, 0, 1, 1], [], []>} : vector<2x32xf32>, vector<32x128xf32>, vector<2x128xf32> -> vector<2x128xf32>
    %442 = arith.addf %440, %441 : vector<2x128xf32>
    %443 = vector.extract_strided_slice %442 {offsets = [0, 0], sizes = [2, 32], strides = [1, 1]} : vector<2x128xf32> to vector<2x32xf32>
    %444 = arith.negf %443 : vector<2x32xf32>
    %445 = math.exp %444 : vector<2x32xf32>
    %cst_99 = arith.constant 1.000000e+00 : f32
    %446 = vector.broadcast %cst_99 : f32 to vector<2x32xf32>
    %447 = arith.addf %446, %445 : vector<2x32xf32>
    %448 = arith.divf %446, %447 : vector<2x32xf32>
    %449 = vector.extract_strided_slice %442 {offsets = [0, 32], sizes = [2, 32], strides = [1, 1]} : vector<2x128xf32> to vector<2x32xf32>
    %450 = arith.negf %449 : vector<2x32xf32>
    %451 = math.exp %450 : vector<2x32xf32>
    %cst_100 = arith.constant 1.000000e+00 : f32
    %452 = vector.broadcast %cst_100 : f32 to vector<2x32xf32>
    %453 = arith.addf %452, %451 : vector<2x32xf32>
    %454 = arith.divf %452, %453 : vector<2x32xf32>
    %455 = vector.extract_strided_slice %442 {offsets = [0, 64], sizes = [2, 32], strides = [1, 1]} : vector<2x128xf32> to vector<2x32xf32>
    %456 = math.tanh %455 : vector<2x32xf32>
    %457 = vector.extract_strided_slice %442 {offsets = [0, 96], sizes = [2, 32], strides = [1, 1]} : vector<2x128xf32> to vector<2x32xf32>
    %458 = arith.negf %457 : vector<2x32xf32>
    %459 = math.exp %458 : vector<2x32xf32>
    %cst_101 = arith.constant 1.000000e+00 : f32
    %460 = vector.broadcast %cst_101 : f32 to vector<2x32xf32>
    %461 = arith.addf %460, %459 : vector<2x32xf32>
    %462 = arith.divf %460, %461 : vector<2x32xf32>
    %463 = arith.mulf %454, %436 : vector<2x32xf32>
    %464 = arith.mulf %448, %456 : vector<2x32xf32>
    %465 = arith.addf %463, %464 : vector<2x32xf32>
    %466 = math.tanh %465 : vector<2x32xf32>
    %467 = arith.mulf %462, %466 : vector<2x32xf32>
    %c14 = arith.constant 14 : index
    %c0_102 = arith.constant 0 : index
    %468 = vector.load %arg18[%c14, %c0_102] : memref<16x64xf32, #tpu.memory_space<vmem>>, vector<2x32xf32>
    tpu.vector_store %arg18[%c14, %c0_102], %467 {strides = array<i32>} : memref<16x64xf32, #tpu.memory_space<vmem>>, vector<2x32xf32>,
    %469 = vector.extract_strided_slice %234 {offsets = [14, 128], sizes = [2, 128], strides = [1, 1]} : vector<16x256xf32> to vector<2x128xf32>
    %cst_103 = arith.constant dense<0.000000e+00> : vector<2x128xf32>
    %470 = tpu.matmul %222, %236, %cst_103 {dimension_numbers = #tpu.dot_dimension_numbers<[1], [0], [0], [1], [0, 0, 1, 1], [], []>} : vector<2x32xf32>, vector<32x128xf32>, vector<2x128xf32> -> vector<2x128xf32>
    %471 = arith.addf %469, %470 : vector<2x128xf32>
    %472 = vector.extract_strided_slice %471 {offsets = [0, 0], sizes = [2, 32], strides = [1, 1]} : vector<2x128xf32> to vector<2x32xf32>
    %473 = arith.negf %472 : vector<2x32xf32>
    %474 = math.exp %473 : vector<2x32xf32>
    %cst_104 = arith.constant 1.000000e+00 : f32
    %475 = vector.broadcast %cst_104 : f32 to vector<2x32xf32>
    %476 = arith.addf %475, %474 : vector<2x32xf32>
    %477 = arith.divf %475, %476 : vector<2x32xf32>
    %478 = vector.extract_strided_slice %471 {offsets = [0, 32], sizes = [2, 32], strides = [1, 1]} : vector<2x128xf32> to vector<2x32xf32>
    %479 = arith.negf %478 : vector<2x32xf32>
    %480 = math.exp %479 : vector<2x32xf32>
    %cst_105 = arith.constant 1.000000e+00 : f32
    %481 = vector.broadcast %cst_105 : f32 to vector<2x32xf32>
    %482 = arith.addf %481, %480 : vector<2x32xf32>
    %483 = arith.divf %481, %482 : vector<2x32xf32>
    %484 = vector.extract_strided_slice %471 {offsets = [0, 64], sizes = [2, 32], strides = [1, 1]} : vector<2x128xf32> to vector<2x32xf32>
    %485 = math.tanh %484 : vector<2x32xf32>
    %486 = vector.extract_strided_slice %471 {offsets = [0, 96], sizes = [2, 32], strides = [1, 1]} : vector<2x128xf32> to vector<2x32xf32>
    %487 = arith.negf %486 : vector<2x32xf32>
    %488 = math.exp %487 : vector<2x32xf32>
    %cst_106 = arith.constant 1.000000e+00 : f32
    %489 = vector.broadcast %cst_106 : f32 to vector<2x32xf32>
    %490 = arith.addf %489, %488 : vector<2x32xf32>
    %491 = arith.divf %489, %490 : vector<2x32xf32>
    %492 = arith.mulf %483, %222 : vector<2x32xf32>
    %493 = arith.mulf %477, %485 : vector<2x32xf32>
    %494 = arith.addf %492, %493 : vector<2x32xf32>
    %495 = math.tanh %494 : vector<2x32xf32>
    %496 = arith.mulf %491, %495 : vector<2x32xf32>
    %c14_107 = arith.constant 14 : index
    %c32 = arith.constant 32 : index
    %497 = vector.load %arg18[%c14_107, %c32] : memref<16x64xf32, #tpu.memory_space<vmem>>, vector<2x32xf32>
    tpu.vector_store %arg18[%c14_107, %c32], %496 {strides = array<i32>} : memref<16x64xf32, #tpu.memory_space<vmem>>, vector<2x32xf32>,
    %498 = vector.extract_strided_slice %234 {offsets = [12, 128], sizes = [2, 128], strides = [1, 1]} : vector<16x256xf32> to vector<2x128xf32>
    %cst_108 = arith.constant dense<0.000000e+00> : vector<2x128xf32>
    %499 = tpu.matmul %496, %236, %cst_108 {dimension_numbers = #tpu.dot_dimension_numbers<[1], [0], [0], [1], [0, 0, 1, 1], [], []>} : vector<2x32xf32>, vector<32x128xf32>, vector<2x128xf32> -> vector<2x128xf32>
    %500 = arith.addf %498, %499 : vector<2x128xf32>
    %501 = vector.extract_strided_slice %500 {offsets = [0, 0], sizes = [2, 32], strides = [1, 1]} : vector<2x128xf32> to vector<2x32xf32>
    %502 = arith.negf %501 : vector<2x32xf32>
    %503 = math.exp %502 : vector<2x32xf32>
    %cst_109 = arith.constant 1.000000e+00 : f32
    %504 = vector.broadcast %cst_109 : f32 to vector<2x32xf32>
    %505 = arith.addf %504, %503 : vector<2x32xf32>
    %506 = arith.divf %504, %505 : vector<2x32xf32>
    %507 = vector.extract_strided_slice %500 {offsets = [0, 32], sizes = [2, 32], strides = [1, 1]} : vector<2x128xf32> to vector<2x32xf32>
    %508 = arith.negf %507 : vector<2x32xf32>
    %509 = math.exp %508 : vector<2x32xf32>
    %cst_110 = arith.constant 1.000000e+00 : f32
    %510 = vector.broadcast %cst_110 : f32 to vector<2x32xf32>
    %511 = arith.addf %510, %509 : vector<2x32xf32>
    %512 = arith.divf %510, %511 : vector<2x32xf32>
    %513 = vector.extract_strided_slice %500 {offsets = [0, 64], sizes = [2, 32], strides = [1, 1]} : vector<2x128xf32> to vector<2x32xf32>
    %514 = math.tanh %513 : vector<2x32xf32>
    %515 = vector.extract_strided_slice %500 {offsets = [0, 96], sizes = [2, 32], strides = [1, 1]} : vector<2x128xf32> to vector<2x32xf32>
    %516 = arith.negf %515 : vector<2x32xf32>
    %517 = math.exp %516 : vector<2x32xf32>
    %cst_111 = arith.constant 1.000000e+00 : f32
    %518 = vector.broadcast %cst_111 : f32 to vector<2x32xf32>
    %519 = arith.addf %518, %517 : vector<2x32xf32>
    %520 = arith.divf %518, %519 : vector<2x32xf32>
    %521 = arith.mulf %512, %494 : vector<2x32xf32>
    %522 = arith.mulf %506, %514 : vector<2x32xf32>
    %523 = arith.addf %521, %522 : vector<2x32xf32>
    %524 = math.tanh %523 : vector<2x32xf32>
    %525 = arith.mulf %520, %524 : vector<2x32xf32>
    %c12_112 = arith.constant 12 : index
    %c32_113 = arith.constant 32 : index
    %526 = vector.load %arg18[%c12_112, %c32_113] : memref<16x64xf32, #tpu.memory_space<vmem>>, vector<2x32xf32>
    tpu.vector_store %arg18[%c12_112, %c32_113], %525 {strides = array<i32>} : memref<16x64xf32, #tpu.memory_space<vmem>>, vector<2x32xf32>,
    %527 = vector.extract_strided_slice %234 {offsets = [10, 128], sizes = [2, 128], strides = [1, 1]} : vector<16x256xf32> to vector<2x128xf32>
    %cst_114 = arith.constant dense<0.000000e+00> : vector<2x128xf32>
    %528 = tpu.matmul %525, %236, %cst_114 {dimension_numbers = #tpu.dot_dimension_numbers<[1], [0], [0], [1], [0, 0, 1, 1], [], []>} : vector<2x32xf32>, vector<32x128xf32>, vector<2x128xf32> -> vector<2x128xf32>
    %529 = arith.addf %527, %528 : vector<2x128xf32>
    %530 = vector.extract_strided_slice %529 {offsets = [0, 0], sizes = [2, 32], strides = [1, 1]} : vector<2x128xf32> to vector<2x32xf32>
    %531 = arith.negf %530 : vector<2x32xf32>
    %532 = math.exp %531 : vector<2x32xf32>
    %cst_115 = arith.constant 1.000000e+00 : f32
    %533 = vector.broadcast %cst_115 : f32 to vector<2x32xf32>
    %534 = arith.addf %533, %532 : vector<2x32xf32>
    %535 = arith.divf %533, %534 : vector<2x32xf32>
    %536 = vector.extract_strided_slice %529 {offsets = [0, 32], sizes = [2, 32], strides = [1, 1]} : vector<2x128xf32> to vector<2x32xf32>
    %537 = arith.negf %536 : vector<2x32xf32>
    %538 = math.exp %537 : vector<2x32xf32>
    %cst_116 = arith.constant 1.000000e+00 : f32
    %539 = vector.broadcast %cst_116 : f32 to vector<2x32xf32>
    %540 = arith.addf %539, %538 : vector<2x32xf32>
    %541 = arith.divf %539, %540 : vector<2x32xf32>
    %542 = vector.extract_strided_slice %529 {offsets = [0, 64], sizes = [2, 32], strides = [1, 1]} : vector<2x128xf32> to vector<2x32xf32>
    %543 = math.tanh %542 : vector<2x32xf32>
    %544 = vector.extract_strided_slice %529 {offsets = [0, 96], sizes = [2, 32], strides = [1, 1]} : vector<2x128xf32> to vector<2x32xf32>
    %545 = arith.negf %544 : vector<2x32xf32>
    %546 = math.exp %545 : vector<2x32xf32>
    %cst_117 = arith.constant 1.000000e+00 : f32
    %547 = vector.broadcast %cst_117 : f32 to vector<2x32xf32>
    %548 = arith.addf %547, %546 : vector<2x32xf32>
    %549 = arith.divf %547, %548 : vector<2x32xf32>
    %550 = arith.mulf %541, %523 : vector<2x32xf32>
    %551 = arith.mulf %535, %543 : vector<2x32xf32>
    %552 = arith.addf %550, %551 : vector<2x32xf32>
    %553 = math.tanh %552 : vector<2x32xf32>
    %554 = arith.mulf %549, %553 : vector<2x32xf32>
    %c10_118 = arith.constant 10 : index
    %c32_119 = arith.constant 32 : index
    %555 = vector.load %arg18[%c10_118, %c32_119] : memref<16x64xf32, #tpu.memory_space<vmem>>, vector<2x32xf32>
    tpu.vector_store %arg18[%c10_118, %c32_119], %554 {strides = array<i32>} : memref<16x64xf32, #tpu.memory_space<vmem>>, vector<2x32xf32>,
    %556 = vector.extract_strided_slice %234 {offsets = [8, 128], sizes = [2, 128], strides = [1, 1]} : vector<16x256xf32> to vector<2x128xf32>
    %cst_120 = arith.constant dense<0.000000e+00> : vector<2x128xf32>
    %557 = tpu.matmul %554, %236, %cst_120 {dimension_numbers = #tpu.dot_dimension_numbers<[1], [0], [0], [1], [0, 0, 1, 1], [], []>} : vector<2x32xf32>, vector<32x128xf32>, vector<2x128xf32> -> vector<2x128xf32>
    %558 = arith.addf %556, %557 : vector<2x128xf32>
    %559 = vector.extract_strided_slice %558 {offsets = [0, 0], sizes = [2, 32], strides = [1, 1]} : vector<2x128xf32> to vector<2x32xf32>
    %560 = arith.negf %559 : vector<2x32xf32>
    %561 = math.exp %560 : vector<2x32xf32>
    %cst_121 = arith.constant 1.000000e+00 : f32
    %562 = vector.broadcast %cst_121 : f32 to vector<2x32xf32>
    %563 = arith.addf %562, %561 : vector<2x32xf32>
    %564 = arith.divf %562, %563 : vector<2x32xf32>
    %565 = vector.extract_strided_slice %558 {offsets = [0, 32], sizes = [2, 32], strides = [1, 1]} : vector<2x128xf32> to vector<2x32xf32>
    %566 = arith.negf %565 : vector<2x32xf32>
    %567 = math.exp %566 : vector<2x32xf32>
    %cst_122 = arith.constant 1.000000e+00 : f32
    %568 = vector.broadcast %cst_122 : f32 to vector<2x32xf32>
    %569 = arith.addf %568, %567 : vector<2x32xf32>
    %570 = arith.divf %568, %569 : vector<2x32xf32>
    %571 = vector.extract_strided_slice %558 {offsets = [0, 64], sizes = [2, 32], strides = [1, 1]} : vector<2x128xf32> to vector<2x32xf32>
    %572 = math.tanh %571 : vector<2x32xf32>
    %573 = vector.extract_strided_slice %558 {offsets = [0, 96], sizes = [2, 32], strides = [1, 1]} : vector<2x128xf32> to vector<2x32xf32>
    %574 = arith.negf %573 : vector<2x32xf32>
    %575 = math.exp %574 : vector<2x32xf32>
    %cst_123 = arith.constant 1.000000e+00 : f32
    %576 = vector.broadcast %cst_123 : f32 to vector<2x32xf32>
    %577 = arith.addf %576, %575 : vector<2x32xf32>
    %578 = arith.divf %576, %577 : vector<2x32xf32>
    %579 = arith.mulf %570, %552 : vector<2x32xf32>
    %580 = arith.mulf %564, %572 : vector<2x32xf32>
    %581 = arith.addf %579, %580 : vector<2x32xf32>
    %582 = math.tanh %581 : vector<2x32xf32>
    %583 = arith.mulf %578, %582 : vector<2x32xf32>
    %c8_124 = arith.constant 8 : index
    %c32_125 = arith.constant 32 : index
    %584 = vector.load %arg18[%c8_124, %c32_125] : memref<16x64xf32, #tpu.memory_space<vmem>>, vector<2x32xf32>
    tpu.vector_store %arg18[%c8_124, %c32_125], %583 {strides = array<i32>} : memref<16x64xf32, #tpu.memory_space<vmem>>, vector<2x32xf32>,
    %585 = vector.extract_strided_slice %234 {offsets = [6, 128], sizes = [2, 128], strides = [1, 1]} : vector<16x256xf32> to vector<2x128xf32>
    %cst_126 = arith.constant dense<0.000000e+00> : vector<2x128xf32>
    %586 = tpu.matmul %583, %236, %cst_126 {dimension_numbers = #tpu.dot_dimension_numbers<[1], [0], [0], [1], [0, 0, 1, 1], [], []>} : vector<2x32xf32>, vector<32x128xf32>, vector<2x128xf32> -> vector<2x128xf32>
    %587 = arith.addf %585, %586 : vector<2x128xf32>
    %588 = vector.extract_strided_slice %587 {offsets = [0, 0], sizes = [2, 32], strides = [1, 1]} : vector<2x128xf32> to vector<2x32xf32>
    %589 = arith.negf %588 : vector<2x32xf32>
    %590 = math.exp %589 : vector<2x32xf32>
    %cst_127 = arith.constant 1.000000e+00 : f32
    %591 = vector.broadcast %cst_127 : f32 to vector<2x32xf32>
    %592 = arith.addf %591, %590 : vector<2x32xf32>
    %593 = arith.divf %591, %592 : vector<2x32xf32>
    %594 = vector.extract_strided_slice %587 {offsets = [0, 32], sizes = [2, 32], strides = [1, 1]} : vector<2x128xf32> to vector<2x32xf32>
    %595 = arith.negf %594 : vector<2x32xf32>
    %596 = math.exp %595 : vector<2x32xf32>
    %cst_128 = arith.constant 1.000000e+00 : f32
    %597 = vector.broadcast %cst_128 : f32 to vector<2x32xf32>
    %598 = arith.addf %597, %596 : vector<2x32xf32>
    %599 = arith.divf %597, %598 : vector<2x32xf32>
    %600 = vector.extract_strided_slice %587 {offsets = [0, 64], sizes = [2, 32], strides = [1, 1]} : vector<2x128xf32> to vector<2x32xf32>
    %601 = math.tanh %600 : vector<2x32xf32>
    %602 = vector.extract_strided_slice %587 {offsets = [0, 96], sizes = [2, 32], strides = [1, 1]} : vector<2x128xf32> to vector<2x32xf32>
    %603 = arith.negf %602 : vector<2x32xf32>
    %604 = math.exp %603 : vector<2x32xf32>
    %cst_129 = arith.constant 1.000000e+00 : f32
    %605 = vector.broadcast %cst_129 : f32 to vector<2x32xf32>
    %606 = arith.addf %605, %604 : vector<2x32xf32>
    %607 = arith.divf %605, %606 : vector<2x32xf32>
    %608 = arith.mulf %599, %581 : vector<2x32xf32>
    %609 = arith.mulf %593, %601 : vector<2x32xf32>
    %610 = arith.addf %608, %609 : vector<2x32xf32>
    %611 = math.tanh %610 : vector<2x32xf32>
    %612 = arith.mulf %607, %611 : vector<2x32xf32>
    %c6_130 = arith.constant 6 : index
    %c32_131 = arith.constant 32 : index
    %613 = vector.load %arg18[%c6_130, %c32_131] : memref<16x64xf32, #tpu.memory_space<vmem>>, vector<2x32xf32>
    tpu.vector_store %arg18[%c6_130, %c32_131], %612 {strides = array<i32>} : memref<16x64xf32, #tpu.memory_space<vmem>>, vector<2x32xf32>,
    %614 = vector.extract_strided_slice %234 {offsets = [4, 128], sizes = [2, 128], strides = [1, 1]} : vector<16x256xf32> to vector<2x128xf32>
    %cst_132 = arith.constant dense<0.000000e+00> : vector<2x128xf32>
    %615 = tpu.matmul %612, %236, %cst_132 {dimension_numbers = #tpu.dot_dimension_numbers<[1], [0], [0], [1], [0, 0, 1, 1], [], []>} : vector<2x32xf32>, vector<32x128xf32>, vector<2x128xf32> -> vector<2x128xf32>
    %616 = arith.addf %614, %615 : vector<2x128xf32>
    %617 = vector.extract_strided_slice %616 {offsets = [0, 0], sizes = [2, 32], strides = [1, 1]} : vector<2x128xf32> to vector<2x32xf32>
    %618 = arith.negf %617 : vector<2x32xf32>
    %619 = math.exp %618 : vector<2x32xf32>
    %cst_133 = arith.constant 1.000000e+00 : f32
    %620 = vector.broadcast %cst_133 : f32 to vector<2x32xf32>
    %621 = arith.addf %620, %619 : vector<2x32xf32>
    %622 = arith.divf %620, %621 : vector<2x32xf32>
    %623 = vector.extract_strided_slice %616 {offsets = [0, 32], sizes = [2, 32], strides = [1, 1]} : vector<2x128xf32> to vector<2x32xf32>
    %624 = arith.negf %623 : vector<2x32xf32>
    %625 = math.exp %624 : vector<2x32xf32>
    %cst_134 = arith.constant 1.000000e+00 : f32
    %626 = vector.broadcast %cst_134 : f32 to vector<2x32xf32>
    %627 = arith.addf %626, %625 : vector<2x32xf32>
    %628 = arith.divf %626, %627 : vector<2x32xf32>
    %629 = vector.extract_strided_slice %616 {offsets = [0, 64], sizes = [2, 32], strides = [1, 1]} : vector<2x128xf32> to vector<2x32xf32>
    %630 = math.tanh %629 : vector<2x32xf32>
    %631 = vector.extract_strided_slice %616 {offsets = [0, 96], sizes = [2, 32], strides = [1, 1]} : vector<2x128xf32> to vector<2x32xf32>
    %632 = arith.negf %631 : vector<2x32xf32>
    %633 = math.exp %632 : vector<2x32xf32>
    %cst_135 = arith.constant 1.000000e+00 : f32
    %634 = vector.broadcast %cst_135 : f32 to vector<2x32xf32>
    %635 = arith.addf %634, %633 : vector<2x32xf32>
    %636 = arith.divf %634, %635 : vector<2x32xf32>
    %637 = arith.mulf %628, %610 : vector<2x32xf32>
    %638 = arith.mulf %622, %630 : vector<2x32xf32>
    %639 = arith.addf %637, %638 : vector<2x32xf32>
    %640 = math.tanh %639 : vector<2x32xf32>
    %641 = arith.mulf %636, %640 : vector<2x32xf32>
    %c4_136 = arith.constant 4 : index
    %c32_137 = arith.constant 32 : index
    %642 = vector.load %arg18[%c4_136, %c32_137] : memref<16x64xf32, #tpu.memory_space<vmem>>, vector<2x32xf32>
    tpu.vector_store %arg18[%c4_136, %c32_137], %641 {strides = array<i32>} : memref<16x64xf32, #tpu.memory_space<vmem>>, vector<2x32xf32>,
    %643 = vector.extract_strided_slice %234 {offsets = [2, 128], sizes = [2, 128], strides = [1, 1]} : vector<16x256xf32> to vector<2x128xf32>
    %cst_138 = arith.constant dense<0.000000e+00> : vector<2x128xf32>
    %644 = tpu.matmul %641, %236, %cst_138 {dimension_numbers = #tpu.dot_dimension_numbers<[1], [0], [0], [1], [0, 0, 1, 1], [], []>} : vector<2x32xf32>, vector<32x128xf32>, vector<2x128xf32> -> vector<2x128xf32>
    %645 = arith.addf %643, %644 : vector<2x128xf32>
    %646 = vector.extract_strided_slice %645 {offsets = [0, 0], sizes = [2, 32], strides = [1, 1]} : vector<2x128xf32> to vector<2x32xf32>
    %647 = arith.negf %646 : vector<2x32xf32>
    %648 = math.exp %647 : vector<2x32xf32>
    %cst_139 = arith.constant 1.000000e+00 : f32
    %649 = vector.broadcast %cst_139 : f32 to vector<2x32xf32>
    %650 = arith.addf %649, %648 : vector<2x32xf32>
    %651 = arith.divf %649, %650 : vector<2x32xf32>
    %652 = vector.extract_strided_slice %645 {offsets = [0, 32], sizes = [2, 32], strides = [1, 1]} : vector<2x128xf32> to vector<2x32xf32>
    %653 = arith.negf %652 : vector<2x32xf32>
    %654 = math.exp %653 : vector<2x32xf32>
    %cst_140 = arith.constant 1.000000e+00 : f32
    %655 = vector.broadcast %cst_140 : f32 to vector<2x32xf32>
    %656 = arith.addf %655, %654 : vector<2x32xf32>
    %657 = arith.divf %655, %656 : vector<2x32xf32>
    %658 = vector.extract_strided_slice %645 {offsets = [0, 64], sizes = [2, 32], strides = [1, 1]} : vector<2x128xf32> to vector<2x32xf32>
    %659 = math.tanh %658 : vector<2x32xf32>
    %660 = vector.extract_strided_slice %645 {offsets = [0, 96], sizes = [2, 32], strides = [1, 1]} : vector<2x128xf32> to vector<2x32xf32>
    %661 = arith.negf %660 : vector<2x32xf32>
    %662 = math.exp %661 : vector<2x32xf32>
    %cst_141 = arith.constant 1.000000e+00 : f32
    %663 = vector.broadcast %cst_141 : f32 to vector<2x32xf32>
    %664 = arith.addf %663, %662 : vector<2x32xf32>
    %665 = arith.divf %663, %664 : vector<2x32xf32>
    %666 = arith.mulf %657, %639 : vector<2x32xf32>
    %667 = arith.mulf %651, %659 : vector<2x32xf32>
    %668 = arith.addf %666, %667 : vector<2x32xf32>
    %669 = math.tanh %668 : vector<2x32xf32>
    %670 = arith.mulf %665, %669 : vector<2x32xf32>
    %c2_142 = arith.constant 2 : index
    %c32_143 = arith.constant 32 : index
    %671 = vector.load %arg18[%c2_142, %c32_143] : memref<16x64xf32, #tpu.memory_space<vmem>>, vector<2x32xf32>
    tpu.vector_store %arg18[%c2_142, %c32_143], %670 {strides = array<i32>} : memref<16x64xf32, #tpu.memory_space<vmem>>, vector<2x32xf32>,
    %672 = vector.extract_strided_slice %234 {offsets = [0, 128], sizes = [2, 128], strides = [1, 1]} : vector<16x256xf32> to vector<2x128xf32>
    %cst_144 = arith.constant dense<0.000000e+00> : vector<2x128xf32>
    %673 = tpu.matmul %670, %236, %cst_144 {dimension_numbers = #tpu.dot_dimension_numbers<[1], [0], [0], [1], [0, 0, 1, 1], [], []>} : vector<2x32xf32>, vector<32x128xf32>, vector<2x128xf32> -> vector<2x128xf32>
    %674 = arith.addf %672, %673 : vector<2x128xf32>
    %675 = vector.extract_strided_slice %674 {offsets = [0, 0], sizes = [2, 32], strides = [1, 1]} : vector<2x128xf32> to vector<2x32xf32>
    %676 = arith.negf %675 : vector<2x32xf32>
    %677 = math.exp %676 : vector<2x32xf32>
    %cst_145 = arith.constant 1.000000e+00 : f32
    %678 = vector.broadcast %cst_145 : f32 to vector<2x32xf32>
    %679 = arith.addf %678, %677 : vector<2x32xf32>
    %680 = arith.divf %678, %679 : vector<2x32xf32>
    %681 = vector.extract_strided_slice %674 {offsets = [0, 32], sizes = [2, 32], strides = [1, 1]} : vector<2x128xf32> to vector<2x32xf32>
    %682 = arith.negf %681 : vector<2x32xf32>
    %683 = math.exp %682 : vector<2x32xf32>
    %cst_146 = arith.constant 1.000000e+00 : f32
    %684 = vector.broadcast %cst_146 : f32 to vector<2x32xf32>
    %685 = arith.addf %684, %683 : vector<2x32xf32>
    %686 = arith.divf %684, %685 : vector<2x32xf32>
    %687 = vector.extract_strided_slice %674 {offsets = [0, 64], sizes = [2, 32], strides = [1, 1]} : vector<2x128xf32> to vector<2x32xf32>
    %688 = math.tanh %687 : vector<2x32xf32>
    %689 = vector.extract_strided_slice %674 {offsets = [0, 96], sizes = [2, 32], strides = [1, 1]} : vector<2x128xf32> to vector<2x32xf32>
    %690 = arith.negf %689 : vector<2x32xf32>
    %691 = math.exp %690 : vector<2x32xf32>
    %cst_147 = arith.constant 1.000000e+00 : f32
    %692 = vector.broadcast %cst_147 : f32 to vector<2x32xf32>
    %693 = arith.addf %692, %691 : vector<2x32xf32>
    %694 = arith.divf %692, %693 : vector<2x32xf32>
    %695 = arith.mulf %686, %668 : vector<2x32xf32>
    %696 = arith.mulf %680, %688 : vector<2x32xf32>
    %697 = arith.addf %695, %696 : vector<2x32xf32>
    %698 = math.tanh %697 : vector<2x32xf32>
    %699 = arith.mulf %694, %698 : vector<2x32xf32>
    %c0_148 = arith.constant 0 : index
    %c32_149 = arith.constant 32 : index
    %700 = vector.load %arg18[%c0_148, %c32_149] : memref<16x64xf32, #tpu.memory_space<vmem>>, vector<2x32xf32>
    tpu.vector_store %arg18[%c0_148, %c32_149], %699 {strides = array<i32>} : memref<16x64xf32, #tpu.memory_space<vmem>>, vector<2x32xf32>,
    %c0_150 = arith.constant 0 : index
    %c0_151 = arith.constant 0 : index
    %701 = vector.load %arg18[%c0_150, %c0_151] : memref<16x64xf32, #tpu.memory_space<vmem>>, vector<16x64xf32>
    %c0_152 = arith.constant 0 : index
    %c0_153 = arith.constant 0 : index
    %702 = vector.load %arg13[%c0_152, %c0_153] : memref<64x32xf32, #tpu.memory_space<vmem>>, vector<64x32xf32>
    %cst_154 = arith.constant dense<0.000000e+00> : vector<16x32xf32>
    %703 = tpu.matmul %701, %702, %cst_154 {dimension_numbers = #tpu.dot_dimension_numbers<[1], [0], [0], [1], [0, 0, 1, 1], [], []>} : vector<16x64xf32>, vector<64x32xf32>, vector<16x32xf32> -> vector<16x32xf32>
    %c0_155 = arith.constant 0 : index
    %c0_156 = arith.constant 0 : index
    %704 = vector.load %arg14[%c0_155, %c0_156] : memref<1x32xf32, #tpu.memory_space<vmem>>, vector<1x32xf32>
    %705 = vector.broadcast %704 : vector<1x32xf32> to vector<16x32xf32>
    %706 = arith.addf %703, %705 : vector<16x32xf32>
    %cst_157 = arith.constant 0.000000e+00 : f32
    %707 = vector.broadcast %cst_157 : f32 to vector<16x32xf32>
    %708 = arith.maximumf %706, %707 : vector<16x32xf32>
    %c0_158 = arith.constant 0 : index
    %c0_159 = arith.constant 0 : index
    %709 = vector.load %arg15[%c0_158, %c0_159] : memref<32x128xf32, #tpu.memory_space<vmem>>, vector<32x128xf32>
    %cst_160 = arith.constant dense<0.000000e+00> : vector<16x128xf32>
    %710 = tpu.matmul %708, %709, %cst_160 {dimension_numbers = #tpu.dot_dimension_numbers<[1], [0], [0], [1], [0, 0, 1, 1], [], []>} : vector<16x32xf32>, vector<32x128xf32>, vector<16x128xf32> -> vector<16x128xf32>
    %c0_161 = arith.constant 0 : index
    %c0_162 = arith.constant 0 : index
    %711 = vector.load %arg16[%c0_161, %c0_162] : memref<1x128xf32, #tpu.memory_space<vmem>>, vector<1x128xf32>
    %712 = vector.broadcast %711 : vector<1x128xf32> to vector<16x128xf32>
    %713 = arith.addf %710, %712 : vector<16x128xf32>
    %cst_163 = arith.constant dense<0xFF800000> : vector<16xf32>
    %714 = vector.multi_reduction <maximumf>, %713, %cst_163 [1] : vector<16x128xf32> to vector<16xf32>
    %715 = vector.shape_cast %714 : vector<16xf32> to vector<16x1xf32>
    %716 = vector.broadcast %715 : vector<16x1xf32> to vector<16x128xf32>
    %717 = arith.subf %713, %716 : vector<16x128xf32>
    %718 = math.exp %717 : vector<16x128xf32>
    %cst_164 = arith.constant dense<0.000000e+00> : vector<16xf32>
    %719 = vector.multi_reduction <add>, %718, %cst_164 [1] : vector<16x128xf32> to vector<16xf32>
    %720 = vector.shape_cast %719 : vector<16xf32> to vector<16x1xf32>
    %721 = math.log %720 : vector<16x1xf32>
    %722 = vector.broadcast %721 : vector<16x1xf32> to vector<16x128xf32>
    %723 = arith.subf %717, %722 : vector<16x128xf32>
    %c0_165 = arith.constant 0 : index
    %c0_166 = arith.constant 0 : index
    %724 = vector.load %arg17[%c0_165, %c0_166] : memref<16x128xf32, #tpu.memory_space<vmem>>, vector<16x128xf32>
    tpu.vector_store %arg17[%c0_165, %c0_166], %723 {strides = array<i32>} : memref<16x128xf32, #tpu.memory_space<vmem>>, vector<16x128xf32>,
    return
  }
  func.func @transform_0(%arg0: i32) -> (i32, i32) {
    %c0_i32 = arith.constant 0 : i32
    %c0_i32_0 = arith.constant 0 : i32
    %c0_i32_1 = arith.constant 0 : i32
    return %c0_i32, %c0_i32_0 : i32, i32
  }
  func.func @transform_1(%arg0: i32) -> (i32, i32) {
    %c0_i32 = arith.constant 0 : i32
    %c0_i32_0 = arith.constant 0 : i32
    %c0_i32_1 = arith.constant 0 : i32
    return %c0_i32, %c0_i32_0 : i32, i32
  }
  func.func @transform_2(%arg0: i32) -> (i32, i32) {
    %c0_i32 = arith.constant 0 : i32
    %c0_i32_0 = arith.constant 0 : i32
    %c0_i32_1 = arith.constant 0 : i32
    return %c0_i32, %c0_i32_0 : i32, i32
  }
  func.func @transform_3(%arg0: i32) -> (i32, i32) {
    %c0_i32 = arith.constant 0 : i32
    %c0_i32_0 = arith.constant 0 : i32
    %c0_i32_1 = arith.constant 0 : i32
    return %c0_i32, %c0_i32_0 : i32, i32
  }
  func.func @transform_4(%arg0: i32) -> (i32, i32) {
    %c0_i32 = arith.constant 0 : i32
    %c0_i32_0 = arith.constant 0 : i32
    %c0_i32_1 = arith.constant 0 : i32
    return %c0_i32, %c0_i32_0 : i32, i32
  }
  func.func @transform_5(%arg0: i32) -> (i32, i32) {
    %c0_i32 = arith.constant 0 : i32
    %c0_i32_0 = arith.constant 0 : i32
    %c0_i32_1 = arith.constant 0 : i32
    return %c0_i32, %c0_i32_0 : i32, i32
  }
  func.func @transform_6(%arg0: i32) -> (i32, i32) {
    %c0_i32 = arith.constant 0 : i32
    %c0_i32_0 = arith.constant 0 : i32
    %c0_i32_1 = arith.constant 0 : i32
    return %c0_i32, %c0_i32_0 : i32, i32
  }
  func.func @transform_7(%arg0: i32) -> (i32, i32) {
    %c0_i32 = arith.constant 0 : i32
    %c0_i32_0 = arith.constant 0 : i32
    %c0_i32_1 = arith.constant 0 : i32
    return %c0_i32, %c0_i32_0 : i32, i32
  }
  func.func @transform_8(%arg0: i32) -> (i32, i32) {
    %c0_i32 = arith.constant 0 : i32
    %c0_i32_0 = arith.constant 0 : i32
    %c0_i32_1 = arith.constant 0 : i32
    return %c0_i32, %c0_i32_0 : i32, i32
  }
  func.func @transform_9(%arg0: i32) -> (i32, i32) {
    %c0_i32 = arith.constant 0 : i32
    %c0_i32_0 = arith.constant 0 : i32
    %c0_i32_1 = arith.constant 0 : i32
    return %c0_i32, %c0_i32_0 : i32, i32
  }
  func.func @transform_10(%arg0: i32) -> (i32, i32) {
    %c0_i32 = arith.constant 0 : i32
    %c0_i32_0 = arith.constant 0 : i32
    %c0_i32_1 = arith.constant 0 : i32
    return %c0_i32, %c0_i32_0 : i32, i32
  }
  func.func @transform_11(%arg0: i32) -> (i32, i32) {
    %c0_i32 = arith.constant 0 : i32
    %c0_i32_0 = arith.constant 0 : i32
    %c0_i32_1 = arith.constant 0 : i32
    return %c0_i32, %c0_i32_0 : i32, i32
  }
  func.func @transform_12(%arg0: i32) -> (i32, i32) {
    %c0_i32 = arith.constant 0 : i32
    %c0_i32_0 = arith.constant 0 : i32
    %c0_i32_1 = arith.constant 0 : i32
    return %c0_i32, %c0_i32_0 : i32, i32
  }
  func.func @transform_13(%arg0: i32) -> (i32, i32) {
    %c0_i32 = arith.constant 0 : i32
    %c0_i32_0 = arith.constant 0 : i32
    %c0_i32_1 = arith.constant 0 : i32
    return %c0_i32, %c0_i32_0 : i32, i32
  }
  func.func @transform_14(%arg0: i32) -> (i32, i32) {
    %c0_i32 = arith.constant 0 : i32
    %c0_i32_0 = arith.constant 0 : i32
    %c0_i32_1 = arith.constant 0 : i32
    return %c0_i32, %c0_i32_0 : i32, i32
  }
  func.func @transform_15(%arg0: i32) -> (i32, i32) {
    %c0_i32 = arith.constant 0 : i32
    %c0_i32_0 = arith.constant 0 : i32
    %c0_i32_1 = arith.constant 0 : i32
    return %c0_i32, %c0_i32_0 : i32, i32
  }
  func.func @transform_16(%arg0: i32) -> (i32, i32) {
    %c0_i32 = arith.constant 0 : i32
    %c0_i32_0 = arith.constant 0 : i32
    %c0_i32_1 = arith.constant 0 : i32
    return %c0_i32, %c0_i32_0 : i32, i32
  }
}

</mosaic_0001>

<llo_original>
// kernel: forward.1
$region0: #{forward.1}
  #allocation0 [shape = 'u32[]', space=smem, size = 0x4, offset = 0x4, fixed_abs, tag = 'smem constant byte address 0x4 - core index']
  #allocation1 [shape = 'u32[144,128]{1,0:T(1,128)}', space=vmem, size = 0x12000, scoped, tag = 'internal scratch']
  #allocation2 [shape = 'f32[16,64]{1,0:T(8,128)}', space=vmem, size = 0x2000, scoped, tag = 'scratch operand']
  %s0 = inlined_call_operand.vmem [shape: s32[96,1], index: 0, kind: input, shape index: {}]
  %s1 = inlined_call_operand.vmem [shape: s32[16,1], index: 1, kind: input, shape index: {}]
  %s2 = inlined_call_operand.vmem [shape: f32[24,16], index: 2, kind: input, shape index: {}]
  %s3 = inlined_call_operand.vmem [shape: f32[32,32], index: 3, kind: input, shape index: {}]
  %s4 = inlined_call_operand.vmem [shape: f32[16,128], index: 4, kind: input, shape index: {}]
  %s5 = inlined_call_operand.vmem [shape: f32[16,64], index: 5, kind: input, shape index: {}]
  %s6 = inlined_call_operand.vmem [shape: f32[16,64], index: 6, kind: input, shape index: {}]
  %s7 = inlined_call_operand.vmem [shape: f32[1,128], index: 7, kind: input, shape index: {}]
  %s8 = inlined_call_operand.vmem [shape: f32[64,256], index: 8, kind: input, shape index: {}]
  %s9 = inlined_call_operand.vmem [shape: f32[32,128], index: 9, kind: input, shape index: {}]
  %s10 = inlined_call_operand.vmem [shape: f32[32,128], index: 10, kind: input, shape index: {}]
  %s11 = inlined_call_operand.vmem [shape: f32[1,256], index: 11, kind: input, shape index: {}]
  %s12 = inlined_call_operand.vmem [shape: f32[64,32], index: 12, kind: input, shape index: {}]
  %s13 = inlined_call_operand.vmem [shape: f32[1,32], index: 13, kind: input, shape index: {}]
  %s14 = inlined_call_operand.vmem [shape: f32[32,128], index: 14, kind: input, shape index: {}]
  %s15 = inlined_call_operand.vmem [shape: f32[1,128], index: 15, kind: input, shape index: {}]
  %s16 = inlined_call_operand.vmem [shape: f32[16,128], index: 16, kind: output, shape index: {}]
  %s17 = sld [smem:[#allocation0]]
  $region74: #{forward.1} parent=0
    _
  %s19 = ssub.s32 1, %s17
  %s20 = scalar_select 0, %s19, %s17
  // Predicated region
  $region2: #{forward.1} parent=0 // pred_check
    _
  $region3: #{forward.1} parent=0 // pred_check_branch
    %22 = sbr.rel (0) target = $region5
  $region4: #{forward.1} parent=0 // pred_region
    _
  $region5: #{forward.1} parent=0 // pred_fallthru
    _
  // Predicated region
  $region6: #{forward.1} parent=0 // pred_check
    _
  $region7: #{forward.1} parent=0 // pred_check_branch
    %24 = sbr.rel (0) target = $region9
  $region8: #{forward.1} parent=0 // pred_region
    _
  $region9: #{forward.1} parent=0 // pred_fallthru
    _
  // Predicated region
  $region10: #{forward.1} parent=0 // pred_check
    _
  $region11: #{forward.1} parent=0 // pred_check_branch
    %26 = sbr.rel (0) target = $region13
  $region12: #{forward.1} parent=0 // pred_region
    _
  $region13: #{forward.1} parent=0 // pred_fallthru
    _
  // Predicated region
  $region14: #{forward.1} parent=0 // pred_check
    _
  $region15: #{forward.1} parent=0 // pred_check_branch
    %28 = sbr.rel (0) target = $region17
  $region16: #{forward.1} parent=0 // pred_region
    _
  $region17: #{forward.1} parent=0 // pred_fallthru
    _
  // Predicated region
  $region18: #{forward.1} parent=0 // pred_check
    _
  $region19: #{forward.1} parent=0 // pred_check_branch
    %30 = sbr.rel (0) target = $region21
  $region20: #{forward.1} parent=0 // pred_region
    _
  $region21: #{forward.1} parent=0 // pred_fallthru
    _
  // Predicated region
  $region22: #{forward.1} parent=0 // pred_check
    _
  $region23: #{forward.1} parent=0 // pred_check_branch
    %32 = sbr.rel (0) target = $region25
  $region24: #{forward.1} parent=0 // pred_region
    _
  $region25: #{forward.1} parent=0 // pred_fallthru
    _
  // Predicated region
  $region26: #{forward.1} parent=0 // pred_check
    _
  $region27: #{forward.1} parent=0 // pred_check_branch
    %34 = sbr.rel (0) target = $region29
  $region28: #{forward.1} parent=0 // pred_region
    _
  $region29: #{forward.1} parent=0 // pred_fallthru
    _
  // Predicated region
  $region30: #{forward.1} parent=0 // pred_check
    _
  $region31: #{forward.1} parent=0 // pred_check_branch
    %36 = sbr.rel (0) target = $region33
  $region32: #{forward.1} parent=0 // pred_region
    _
  $region33: #{forward.1} parent=0 // pred_fallthru
    _
  // Predicated region
  $region34: #{forward.1} parent=0 // pred_check
    _
  $region35: #{forward.1} parent=0 // pred_check_branch
    %38 = sbr.rel (0) target = $region37
  $region36: #{forward.1} parent=0 // pred_region
    _
  $region37: #{forward.1} parent=0 // pred_fallthru
    _
  // Predicated region
  $region38: #{forward.1} parent=0 // pred_check
    _
  $region39: #{forward.1} parent=0 // pred_check_branch
    %40 = sbr.rel (0) target = $region41
  $region40: #{forward.1} parent=0 // pred_region
    _
  $region41: #{forward.1} parent=0 // pred_fallthru
    _
  // Predicated region
  $region42: #{forward.1} parent=0 // pred_check
    _
  $region43: #{forward.1} parent=0 // pred_check_branch
    %42 = sbr.rel (0) target = $region45
  $region44: #{forward.1} parent=0 // pred_region
    _
  $region45: #{forward.1} parent=0 // pred_fallthru
    _
  // Predicated region
  $region46: #{forward.1} parent=0 // pred_check
    _
  $region47: #{forward.1} parent=0 // pred_check_branch
    %44 = sbr.rel (0) target = $region49
  $region48: #{forward.1} parent=0 // pred_region
    _
  $region49: #{forward.1} parent=0 // pred_fallthru
    _
  // Predicated region
  $region50: #{forward.1} parent=0 // pred_check
    _
  $region51: #{forward.1} parent=0 // pred_check_branch
    %46 = sbr.rel (0) target = $region53
  $region52: #{forward.1} parent=0 // pred_region
    _
  $region53: #{forward.1} parent=0 // pred_fallthru
    _
  // Predicated region
  $region54: #{forward.1} parent=0 // pred_check
    _
  $region55: #{forward.1} parent=0 // pred_check_branch
    %48 = sbr.rel (0) target = $region57
  $region56: #{forward.1} parent=0 // pred_region
    _
  $region57: #{forward.1} parent=0 // pred_fallthru
    _
  // Predicated region
  $region58: #{forward.1} parent=0 // pred_check
    _
  $region59: #{forward.1} parent=0 // pred_check_branch
    %50 = sbr.rel (0) target = $region61
  $region60: #{forward.1} parent=0 // pred_region
    _
  $region61: #{forward.1} parent=0 // pred_fallthru
    _
  // Predicated region
  $region62: #{forward.1} parent=0 // pred_check
    _
  $region63: #{forward.1} parent=0 // pred_check_branch
    %52 = sbr.rel (0) target = $region65
  $region64: #{forward.1} parent=0 // pred_region
    _
  $region65: #{forward.1} parent=0 // pred_fallthru
    _
  %v53 = vld [vmem:[%s0] sm:$0xff]
  %v54 = vld [vmem:[%s0 + $0x8] sm:$0xff]
  %v55 = vld [vmem:[%s0 + $0x10] sm:$0xff]
  %v56 = vld [vmem:[%s0 + $0x18] sm:$0xff]
  %v57 = vld [vmem:[%s0 + $0x20] sm:$0xff]
  %v58 = vld [vmem:[%s0 + $0x28] sm:$0xff]
  %v59 = vld [vmem:[%s0 + $0x30] sm:$0xff]
  %v60 = vld [vmem:[%s0 + $0x38] sm:$0xff]
  %v61 = vld [vmem:[%s0 + $0x40] sm:$0xff]
  %v62 = vld [vmem:[%s0 + $0x48] sm:$0xff]
  %v63 = vld [vmem:[%s0 + $0x50] sm:$0xff]
  %v64 = vld [vmem:[%s0 + $0x58] sm:$0xff]
  %v65 = vlaneseq
  %v66 = vand.u32 %v65, 127
  %67 = vset.pattern.permute.xlu0 0
  %68 = vperm.xlu0 %67, %v53
  %v69 = vpop.permute.xlu0 %68
  %70 = vset.pattern.permute.xlu0 0
  %71 = vperm.xlu0 %70, %v54
  %v72 = vpop.permute.xlu0 %71
  %73 = vset.pattern.permute.xlu0 0
  %74 = vperm.xlu0 %73, %v55
  %v75 = vpop.permute.xlu0 %74
  %76 = vset.pattern.permute.xlu0 0
  %77 = vperm.xlu0 %76, %v56
  %v78 = vpop.permute.xlu0 %77
  %79 = vset.pattern.permute.xlu0 0
  %80 = vperm.xlu0 %79, %v57
  %v81 = vpop.permute.xlu0 %80
  %82 = vset.pattern.permute.xlu0 0
  %83 = vperm.xlu0 %82, %v58
  %v84 = vpop.permute.xlu0 %83
  %85 = vset.pattern.permute.xlu0 0
  %86 = vperm.xlu0 %85, %v59
  %v87 = vpop.permute.xlu0 %86
  %88 = vset.pattern.permute.xlu0 0
  %89 = vperm.xlu0 %88, %v60
  %v90 = vpop.permute.xlu0 %89
  %91 = vset.pattern.permute.xlu0 0
  %92 = vperm.xlu0 %91, %v61
  %v93 = vpop.permute.xlu0 %92
  %94 = vset.pattern.permute.xlu0 0
  %95 = vperm.xlu0 %94, %v62
  %v96 = vpop.permute.xlu0 %95
  %97 = vset.pattern.permute.xlu0 0
  %98 = vperm.xlu0 %97, %v63
  %v99 = vpop.permute.xlu0 %98
  %100 = vset.pattern.permute.xlu0 0
  %101 = vperm.xlu0 %100, %v64
  %v102 = vpop.permute.xlu0 %101
  %vm103 = vcmp.eq.s32.totalorder %v69, %v66
  %vm104 = vcmp.eq.s32.totalorder %v72, %v66
  %vm105 = vcmp.eq.s32.totalorder %v75, %v66
  %vm106 = vcmp.eq.s32.totalorder %v78, %v66
  %vm107 = vcmp.eq.s32.totalorder %v81, %v66
  %vm108 = vcmp.eq.s32.totalorder %v84, %v66
  %vm109 = vcmp.eq.s32.totalorder %v87, %v66
  %vm110 = vcmp.eq.s32.totalorder %v90, %v66
  %vm111 = vcmp.eq.s32.totalorder %v93, %v66
  %vm112 = vcmp.eq.s32.totalorder %v96, %v66
  %vm113 = vcmp.eq.s32.totalorder %v99, %v66
  %vm114 = vcmp.eq.s32.totalorder %v102, %v66
  %v115 = vsel %vm103, 1.0, 0.0
  %v116 = vsel %vm104, 1.0, 0.0
  %v117 = vsel %vm105, 1.0, 0.0
  %v118 = vsel %vm106, 1.0, 0.0
  %v119 = vsel %vm107, 1.0, 0.0
  %v120 = vsel %vm108, 1.0, 0.0
  %v121 = vsel %vm109, 1.0, 0.0
  %v122 = vsel %vm110, 1.0, 0.0
  %v123 = vsel %vm111, 1.0, 0.0
  %v124 = vsel %vm112, 1.0, 0.0
  %v125 = vsel %vm113, 1.0, 0.0
  %v126 = vsel %vm114, 1.0, 0.0
  %v127 = vld [vmem:[%s2] sm:$0xff]
  %v128 = vld [vmem:[%s2 + $0x8] sm:$0xff]
  %v129 = vld [vmem:[%s2 + $0x10] sm:$0xff]
  %vm130 = vcmask 195584
  %v132 = vsel %vm130, %v115, 0
  %v135 = vsel %vm130, %v116, 0
  %v138 = vsel %vm130, %v117, 0
  %v141 = vsel %vm130, %v118, 0
  %v144 = vsel %vm130, %v119, 0
  %v147 = vsel %vm130, %v120, 0
  %v150 = vsel %vm130, %v121, 0
  %v153 = vsel %vm130, %v122, 0
  %v156 = vsel %vm130, %v123, 0
  %v159 = vsel %vm130, %v124, 0
  %v162 = vsel %vm130, %v125, 0
  %v165 = vsel %vm130, %v126, 0
  %167 = vmatprep.subr.mxu0 0.0
  %168 = vmatpush1.msra.mxu0 %v127
  %169 = vmatprep.subr.mxu0 0.0
  %170 = vmatpush1.msra.mxu0 %v128
  %171 = vmatprep.subr.mxu0 0.0
  %172 = vmatpush1.msra.mxu0 %v129
  %173 = vmatprep.subr.mxu0 0.0
  %174 = vmatpush1.msra.mxu0 0.0
  %175 = vmatprep.subr.mxu0 0.0
  %176 = vmatpush1.msra.mxu0 0.0
  %177 = vmatprep.subr.mxu0 0.0
  %178 = vmatpush1.msra.mxu0 0.0
  %179 = vmatprep.subr.mxu0 0.0
  %180 = vmatpush1.msra.mxu0 0.0
  %181 = vmatprep.subr.mxu0 0.0
  %182 = vmatpush1.msra.mxu0 0.0
  %183 = vmatprep.subr.mxu0 0.0
  %184 = vmatpush1.msra.mxu0 0.0
  %185 = vmatprep.subr.mxu0 0.0
  %186 = vmatpush1.msra.mxu0 0.0
  %187 = vmatprep.subr.mxu0 0.0
  %188 = vmatpush1.msra.mxu0 0.0
  %189 = vmatprep.subr.mxu0 0.0
  %190 = vmatpush1.msra.mxu0 0.0
  %191 = vmatprep.subr.mxu0 0.0
  %192 = vmatpush1.msra.mxu0 0.0
  %193 = vmatprep.subr.mxu0 0.0
  %194 = vmatpush1.msra.mxu0 0.0
  %195 = vmatprep.subr.mxu0 0.0
  %196 = vmatpush1.msra.mxu0 0.0
  %197 = vmatprep.subr.mxu0 0.0
  %198 = vmatpush1.msra.mxu0 0.0
  %199 = vmatprep.subr.mxu0 0.0
  %200 = vmatpush1.msra.mxu0 0.0
  %201 = vmatprep.subr.mxu0 0.0
  %202 = vmatpush1.msra.mxu0 0.0
  %203 = vmatprep.subr.mxu0 0.0
  %204 = vmatpush1.msra.mxu0 0.0
  %205 = vmatprep.subr.mxu0 0.0
  %206 = vmatpush1.msra.mxu0 0.0
  %207 = vmatprep.subr.mxu0 0.0
  %208 = vmatpush1.msra.mxu0 0.0
  %209 = vmatprep.subr.mxu0 0.0
  %210 = vmatpush1.msra.mxu0 0.0
  %211 = vmatprep.subr.mxu0 0.0
  %212 = vmatpush1.msra.mxu0 0.0
  %213 = vmatprep.subr.mxu0 0.0
  %214 = vmatpush1.msra.mxu0 0.0
  %215 = vmatprep.subr.mxu0 0.0
  %216 = vmatpush1.msra.mxu0 0.0
  %217 = vmatprep.subr.mxu0 0.0
  %218 = vmatpush1.msra.mxu0 0.0
  %219 = vmatprep.subr.mxu0 0.0
  %220 = vmatpush1.msra.mxu0 0.0
  %221 = vmatprep.subr.mxu0 0.0
  %222 = vmatpush1.msra.mxu0 0.0
  %223 = vmatprep.subr.mxu0 0.0
  %224 = vmatpush1.msra.mxu0 0.0
  %225 = vmatprep.subr.mxu0 0.0
  %226 = vmatpush1.msra.mxu0 0.0
  %227 = vmatprep.subr.mxu0 0.0
  %228 = vmatpush1.msra.mxu0 0.0
  %229 = vmatprep.subr.mxu0 0.0
  %230 = vmatpush1.msra.mxu0 0.0
  %231 = vmatprep.mubr.f32.mxu0 0.0
  %232 = vmatmul.mubr.f32.gmra.mrb[0].mxu0 %v132
  %v233 = vpop.f32.mrb[0].mxu0
  %v234 = vadd.f32 0.0, %v233
  %v235 = vpop.f32.mrb[0].mxu0
  %236 = vmatprep.mubr.f32.mxu0 0.0
  %237 = vmatmul.mubr.f32.gmra.mrb[0].mxu0 %v135
  %v238 = vpop.f32.mrb[0].mxu0
  %v239 = vadd.f32 0.0, %v238
  %v240 = vpop.f32.mrb[0].mxu0
  %241 = vmatprep.mubr.f32.mxu0 0.0
  %242 = vmatmul.mubr.f32.gmra.mrb[0].mxu0 %v138
  %v243 = vpop.f32.mrb[0].mxu0
  %v244 = vadd.f32 0.0, %v243
  %v245 = vpop.f32.mrb[0].mxu0
  %246 = vmatprep.mubr.f32.mxu0 0.0
  %247 = vmatmul.mubr.f32.gmra.mrb[0].mxu0 %v141
  %v248 = vpop.f32.mrb[0].mxu0
  %v249 = vadd.f32 0.0, %v248
  %v250 = vpop.f32.mrb[0].mxu0
  %251 = vmatprep.mubr.f32.mxu0 0.0
  %252 = vmatmul.mubr.f32.gmra.mrb[0].mxu0 %v144
  %v253 = vpop.f32.mrb[0].mxu0
  %v254 = vadd.f32 0.0, %v253
  %v255 = vpop.f32.mrb[0].mxu0
  %256 = vmatprep.mubr.f32.mxu0 0.0
  %257 = vmatmul.mubr.f32.gmra.mrb[0].mxu0 %v147
  %v258 = vpop.f32.mrb[0].mxu0
  %v259 = vadd.f32 0.0, %v258
  %v260 = vpop.f32.mrb[0].mxu0
  %261 = vmatprep.mubr.f32.mxu0 0.0
  %262 = vmatmul.mubr.f32.gmra.mrb[0].mxu0 %v150
  %v263 = vpop.f32.mrb[0].mxu0
  %v264 = vadd.f32 0.0, %v263
  %v265 = vpop.f32.mrb[0].mxu0
  %266 = vmatprep.mubr.f32.mxu0 0.0
  %267 = vmatmul.mubr.f32.gmra.mrb[0].mxu0 %v153
  %v268 = vpop.f32.mrb[0].mxu0
  %v269 = vadd.f32 0.0, %v268
  %v270 = vpop.f32.mrb[0].mxu0
  %271 = vmatprep.mubr.f32.mxu0 0.0
  %272 = vmatmul.mubr.f32.gmra.mrb[0].mxu0 %v156
  %v273 = vpop.f32.mrb[0].mxu0
  %v274 = vadd.f32 0.0, %v273
  %v275 = vpop.f32.mrb[0].mxu0
  %276 = vmatprep.mubr.f32.mxu0 0.0
  %277 = vmatmul.mubr.f32.gmra.mrb[0].mxu0 %v159
  %v278 = vpop.f32.mrb[0].mxu0
  %v279 = vadd.f32 0.0, %v278
  %v280 = vpop.f32.mrb[0].mxu0
  %281 = vmatprep.mubr.f32.mxu0 0.0
  %282 = vmatmul.mubr.f32.gmra.mrb[0].mxu0 %v162
  %v283 = vpop.f32.mrb[0].mxu0
  %v284 = vadd.f32 0.0, %v283
  %v285 = vpop.f32.mrb[0].mxu0
  %286 = vmatprep.mubr.f32.mxu0 0.0
  %287 = vmatmul.mubr.f32.gmra.mrb[0].mxu0 %v165
  %v288 = vpop.f32.mrb[0].mxu0
  %v289 = vadd.f32 0.0, %v288
  %v290 = vpop.f32.mrb[0].mxu0
  %291 = vdwg.mxu0
  %v292 = vld [vmem:[%s4] sm:$0xff]
  %v293 = vld [vmem:[%s4 + $0x8] sm:$0xff]
  %v294 = vld [vmem:[%s7] sm:$0x1]
  %v296 = vlaneseq
  %v297 = vshrl.u32 %v296, 7
  %v298 = vsub.s32 0, %v297
  %v299 = vrot.slane %v294, %v298
  %vm301 = vcmask 130048
  %v303 = vsel %vm301, %v234, 0
  %v306 = vsel %vm301, %v239, 0
  %v309 = vsel %vm301, %v244, 0
  %v312 = vsel %vm301, %v249, 0
  %v315 = vsel %vm301, %v254, 0
  %v318 = vsel %vm301, %v259, 0
  %v321 = vsel %vm301, %v264, 0
  %v324 = vsel %vm301, %v269, 0
  %v327 = vsel %vm301, %v274, 0
  %v330 = vsel %vm301, %v279, 0
  %v333 = vsel %vm301, %v284, 0
  %v336 = vsel %vm301, %v289, 0
  %338 = vmatprep.subr.mxu0 0.0
  %339 = vmatpush1.msra.mxu0 %v292
  %340 = vmatprep.subr.mxu0 0.0
  %341 = vmatpush1.msra.mxu0 %v293
  %342 = vmatprep.subr.mxu0 0.0
  %343 = vmatpush1.msra.mxu0 0.0
  %344 = vmatprep.subr.mxu0 0.0
  %345 = vmatpush1.msra.mxu0 0.0
  %346 = vmatprep.subr.mxu0 0.0
  %347 = vmatpush1.msra.mxu0 0.0
  %348 = vmatprep.subr.mxu0 0.0
  %349 = vmatpush1.msra.mxu0 0.0
  %350 = vmatprep.subr.mxu0 0.0
  %351 = vmatpush1.msra.mxu0 0.0
  %352 = vmatprep.subr.mxu0 0.0
  %353 = vmatpush1.msra.mxu0 0.0
  %354 = vmatprep.subr.mxu0 0.0
  %355 = vmatpush1.msra.mxu0 0.0
  %356 = vmatprep.subr.mxu0 0.0
  %357 = vmatpush1.msra.mxu0 0.0
  %358 = vmatprep.subr.mxu0 0.0
  %359 = vmatpush1.msra.mxu0 0.0
  %360 = vmatprep.subr.mxu0 0.0
  %361 = vmatpush1.msra.mxu0 0.0
  %362 = vmatprep.subr.mxu0 0.0
  %363 = vmatpush1.msra.mxu0 0.0
  %364 = vmatprep.subr.mxu0 0.0
  %365 = vmatpush1.msra.mxu0 0.0
  %366 = vmatprep.subr.mxu0 0.0
  %367 = vmatpush1.msra.mxu0 0.0
  %368 = vmatprep.subr.mxu0 0.0
  %369 = vmatpush1.msra.mxu0 0.0
  %370 = vmatprep.subr.mxu0 0.0
  %371 = vmatpush1.msra.mxu0 0.0
  %372 = vmatprep.subr.mxu0 0.0
  %373 = vmatpush1.msra.mxu0 0.0
  %374 = vmatprep.subr.mxu0 0.0
  %375 = vmatpush1.msra.mxu0 0.0
  %376 = vmatprep.subr.mxu0 0.0
  %377 = vmatpush1.msra.mxu0 0.0
  %378 = vmatprep.subr.mxu0 0.0
  %379 = vmatpush1.msra.mxu0 0.0
  %380 = vmatprep.subr.mxu0 0.0
  %381 = vmatpush1.msra.mxu0 0.0
  %382 = vmatprep.subr.mxu0 0.0
  %383 = vmatpush1.msra.mxu0 0.0
  %384 = vmatprep.subr.mxu0 0.0
  %385 = vmatpush1.msra.mxu0 0.0
  %386 = vmatprep.subr.mxu0 0.0
  %387 = vmatpush1.msra.mxu0 0.0
  %388 = vmatprep.subr.mxu0 0.0
  %389 = vmatpush1.msra.mxu0 0.0
  %390 = vmatprep.subr.mxu0 0.0
  %391 = vmatpush1.msra.mxu0 0.0
  %392 = vmatprep.subr.mxu0 0.0
  %393 = vmatpush1.msra.mxu0 0.0
  %394 = vmatprep.subr.mxu0 0.0
  %395 = vmatpush1.msra.mxu0 0.0
  %396 = vmatprep.subr.mxu0 0.0
  %397 = vmatpush1.msra.mxu0 0.0
  %398 = vmatprep.subr.mxu0 0.0
  %399 = vmatpush1.msra.mxu0 0.0
  %400 = vmatprep.subr.mxu0 0.0
  %401 = vmatpush1.msra.mxu0 0.0
  %402 = vmatprep.mubr.f32.mxu0 0.0
  %403 = vmatmul.mubr.f32.gmra.mrb[0].mxu0 %v303
  %v404 = vpop.f32.mrb[0].mxu0
  %v405 = vadd.f32 %v299, %v404
  %v406 = vpop.f32.mrb[0].mxu0
  %407 = vmatprep.mubr.f32.mxu0 0.0
  %408 = vmatmul.mubr.f32.gmra.mrb[0].mxu0 %v306
  %v409 = vpop.f32.mrb[0].mxu0
  %v410 = vadd.f32 %v299, %v409
  %v411 = vpop.f32.mrb[0].mxu0
  %412 = vmatprep.mubr.f32.mxu0 0.0
  %413 = vmatmul.mubr.f32.gmra.mrb[0].mxu0 %v309
  %v414 = vpop.f32.mrb[0].mxu0
  %v415 = vadd.f32 %v299, %v414
  %v416 = vpop.f32.mrb[0].mxu0
  %417 = vmatprep.mubr.f32.mxu0 0.0
  %418 = vmatmul.mubr.f32.gmra.mrb[0].mxu0 %v312
  %v419 = vpop.f32.mrb[0].mxu0
  %v420 = vadd.f32 %v299, %v419
  %v421 = vpop.f32.mrb[0].mxu0
  %422 = vmatprep.mubr.f32.mxu0 0.0
  %423 = vmatmul.mubr.f32.gmra.mrb[0].mxu0 %v315
  %v424 = vpop.f32.mrb[0].mxu0
  %v425 = vadd.f32 %v299, %v424
  %v426 = vpop.f32.mrb[0].mxu0
  %427 = vmatprep.mubr.f32.mxu0 0.0
  %428 = vmatmul.mubr.f32.gmra.mrb[0].mxu0 %v318
  %v429 = vpop.f32.mrb[0].mxu0
  %v430 = vadd.f32 %v299, %v429
  %v431 = vpop.f32.mrb[0].mxu0
  %432 = vmatprep.mubr.f32.mxu0 0.0
  %433 = vmatmul.mubr.f32.gmra.mrb[0].mxu0 %v321
  %v434 = vpop.f32.mrb[0].mxu0
  %v435 = vadd.f32 %v299, %v434
  %v436 = vpop.f32.mrb[0].mxu0
  %437 = vmatprep.mubr.f32.mxu0 0.0
  %438 = vmatmul.mubr.f32.gmra.mrb[0].mxu0 %v324
  %v439 = vpop.f32.mrb[0].mxu0
  %v440 = vadd.f32 %v299, %v439
  %v441 = vpop.f32.mrb[0].mxu0
  %442 = vmatprep.mubr.f32.mxu0 0.0
  %443 = vmatmul.mubr.f32.gmra.mrb[0].mxu0 %v327
  %v444 = vpop.f32.mrb[0].mxu0
  %v445 = vadd.f32 %v299, %v444
  %v446 = vpop.f32.mrb[0].mxu0
  %447 = vmatprep.mubr.f32.mxu0 0.0
  %448 = vmatmul.mubr.f32.gmra.mrb[0].mxu0 %v330
  %v449 = vpop.f32.mrb[0].mxu0
  %v450 = vadd.f32 %v299, %v449
  %v451 = vpop.f32.mrb[0].mxu0
  %452 = vmatprep.mubr.f32.mxu0 0.0
  %453 = vmatmul.mubr.f32.gmra.mrb[0].mxu0 %v333
  %v454 = vpop.f32.mrb[0].mxu0
  %v455 = vadd.f32 %v299, %v454
  %v456 = vpop.f32.mrb[0].mxu0
  %457 = vmatprep.mubr.f32.mxu0 0.0
  %458 = vmatmul.mubr.f32.gmra.mrb[0].mxu0 %v336
  %v459 = vpop.f32.mrb[0].mxu0
  %v460 = vadd.f32 %v299, %v459
  %v461 = vpop.f32.mrb[0].mxu0
  %462 = vdwg.mxu0
  %v463 = vld [vmem:[%s5] sm:$0xff]
  %v464 = vld [vmem:[%s5 + $0x8] sm:$0xff]
  %v465 = vld [vmem:[%s6] sm:$0xff]
  %v466 = vld [vmem:[%s6 + $0x8] sm:$0xff]
  %v468 = vsel %vm301, 0.0, 0
  %470 = vmatprep.subr.mxu0 0.0
  %471 = vmatpush1.msra.mxu0 %v463
  %472 = vmatprep.subr.mxu0 0.0
  %473 = vmatpush1.msra.mxu0 %v464
  %474 = vmatprep.subr.mxu0 0.0
  %475 = vmatpush1.msra.mxu0 0.0
  %476 = vmatprep.subr.mxu0 0.0
  %477 = vmatpush1.msra.mxu0 0.0
  %478 = vmatprep.subr.mxu0 0.0
  %479 = vmatpush1.msra.mxu0 0.0
  %480 = vmatprep.subr.mxu0 0.0
  %481 = vmatpush1.msra.mxu0 0.0
  %482 = vmatprep.subr.mxu0 0.0
  %483 = vmatpush1.msra.mxu0 0.0
  %484 = vmatprep.subr.mxu0 0.0
  %485 = vmatpush1.msra.mxu0 0.0
  %486 = vmatprep.subr.mxu0 0.0
  %487 = vmatpush1.msra.mxu0 0.0
  %488 = vmatprep.subr.mxu0 0.0
  %489 = vmatpush1.msra.mxu0 0.0
  %490 = vmatprep.subr.mxu0 0.0
  %491 = vmatpush1.msra.mxu0 0.0
  %492 = vmatprep.subr.mxu0 0.0
  %493 = vmatpush1.msra.mxu0 0.0
  %494 = vmatprep.subr.mxu0 0.0
  %495 = vmatpush1.msra.mxu0 0.0
  %496 = vmatprep.subr.mxu0 0.0
  %497 = vmatpush1.msra.mxu0 0.0
  %498 = vmatprep.subr.mxu0 0.0
  %499 = vmatpush1.msra.mxu0 0.0
  %500 = vmatprep.subr.mxu0 0.0
  %501 = vmatpush1.msra.mxu0 0.0
  %502 = vmatprep.subr.mxu0 0.0
  %503 = vmatpush1.msra.mxu0 0.0
  %504 = vmatprep.subr.mxu0 0.0
  %505 = vmatpush1.msra.mxu0 0.0
  %506 = vmatprep.subr.mxu0 0.0
  %507 = vmatpush1.msra.mxu0 0.0
  %508 = vmatprep.subr.mxu0 0.0
  %509 = vmatpush1.msra.mxu0 0.0
  %510 = vmatprep.subr.mxu0 0.0
  %511 = vmatpush1.msra.mxu0 0.0
  %512 = vmatprep.subr.mxu0 0.0
  %513 = vmatpush1.msra.mxu0 0.0
  %514 = vmatprep.subr.mxu0 0.0
  %515 = vmatpush1.msra.mxu0 0.0
  %516 = vmatprep.subr.mxu0 0.0
  %517 = vmatpush1.msra.mxu0 0.0
  %518 = vmatprep.subr.mxu0 0.0
  %519 = vmatpush1.msra.mxu0 0.0
  %520 = vmatprep.subr.mxu0 0.0
  %521 = vmatpush1.msra.mxu0 0.0
  %522 = vmatprep.subr.mxu0 0.0
  %523 = vmatpush1.msra.mxu0 0.0
  %524 = vmatprep.subr.mxu0 0.0
  %525 = vmatpush1.msra.mxu0 0.0
  %526 = vmatprep.subr.mxu0 0.0
  %527 = vmatpush1.msra.mxu0 0.0
  %528 = vmatprep.subr.mxu0 0.0
  %529 = vmatpush1.msra.mxu0 0.0
  %530 = vmatprep.subr.mxu0 0.0
  %531 = vmatpush1.msra.mxu0 0.0
  %532 = vmatprep.subr.mxu0 0.0
  %533 = vmatpush1.msra.mxu0 0.0
  %534 = vmatprep.mubr.f32.mxu0 0.0
  %535 = vmatmul.mubr.f32.gmra.mrb[0].mxu0 %v468
  %v536 = vpop.f32.mrb[0].mxu0
  %v537 = vadd.f32 0.0, %v536
  %v538 = vpop.f32.mrb[0].mxu0
  %539 = vmatprep.mubr.f32.mxu0 0.0
  %540 = vmatmul.mubr.f32.gmra.mrb[0].mxu0 %v468
  %v541 = vpop.f32.mrb[0].mxu0
  %v542 = vadd.f32 0.0, %v541
  %v543 = vpop.f32.mrb[0].mxu0
  %544 = vdwg.mxu0
  %v545 = vadd.f32 %v405, %v537
  %v546 = vadd.f32 %v410, %v542
  %v547 = vxor.u32 %v545, 2147483648
  %v548 = vxor.u32 %v546, 2147483648
  %v549 = vmul.f32 %v547, 1.442695
  %v550 = vpow.pop %v549
  %v551 = vmul.f32 %v548, 1.442695
  %v552 = vpow.pop %v551
  %v553 = vadd.f32 %v550, 1.0
  %v554 = vadd.f32 %v552, 1.0
  %v555 = vrcp.pop %v553
  %v556 = vmul.f32 1.0, %v555
  %v557 = vrcp.pop %v554
  %v558 = vmul.f32 1.0, %v557
  %v559 = vtanh.pop %v545
  %v560 = vtanh.pop %v546
  %v561 = vmul.f32 %v556, 0.0
  %v562 = vmul.f32 %v558, 0.0
  %565 = vrot.lane.b32.xlu0 %v559, 96
  %v566 = vpop.permute.xlu0 %565
  %567 = vrot.lane.b32.xlu0 %v560, 96
  %v568 = vpop.permute.xlu0 %567
  %v571 = vmul.f32 %v556, %v566
  %v572 = vmul.f32 %v558, %v568
  %575 = vrot.lane.b32.xlu0 %v571, 16
  %v576 = vpop.permute.xlu0 %575
  %577 = vrot.lane.b32.xlu0 %v572, 16
  %v578 = vpop.permute.xlu0 %577
  %v581 = vadd.f32 %v561, %v576
  %v582 = vadd.f32 %v562, %v578
  %v583 = vtanh.pop %v581
  %v584 = vtanh.pop %v582
  %587 = vrot.lane.b32.xlu0 %v583, 32
  %v588 = vpop.permute.xlu0 %587
  %589 = vrot.lane.b32.xlu0 %v584, 32
  %v590 = vpop.permute.xlu0 %589
  %v593 = vmul.f32 %v556, %v588
  %v594 = vmul.f32 %v558, %v590
  %597 = vrot.lane.b32.xlu0 %v593, 80
  %v598 = vpop.permute.xlu0 %597
  %599 = vrot.lane.b32.xlu0 %v594, 80
  %v600 = vpop.permute.xlu0 %599
  %v601 = vsel %vm301, %v598, 0
  %v603 = vsel %vm301, %v600, 0
  %605 = vmatprep.subr.mxu0 0.0
  %606 = vmatpush1.msra.mxu0 %v463
  %607 = vmatprep.subr.mxu0 0.0
  %608 = vmatpush1.msra.mxu0 %v464
  %609 = vmatprep.subr.mxu0 0.0
  %610 = vmatpush1.msra.mxu0 0.0
  %611 = vmatprep.subr.mxu0 0.0
  %612 = vmatpush1.msra.mxu0 0.0
  %613 = vmatprep.subr.mxu0 0.0
  %614 = vmatpush1.msra.mxu0 0.0
  %615 = vmatprep.subr.mxu0 0.0
  %616 = vmatpush1.msra.mxu0 0.0
  %617 = vmatprep.subr.mxu0 0.0
  %618 = vmatpush1.msra.mxu0 0.0
  %619 = vmatprep.subr.mxu0 0.0
  %620 = vmatpush1.msra.mxu0 0.0
  %621 = vmatprep.subr.mxu0 0.0
  %622 = vmatpush1.msra.mxu0 0.0
  %623 = vmatprep.subr.mxu0 0.0
  %624 = vmatpush1.msra.mxu0 0.0
  %625 = vmatprep.subr.mxu0 0.0
  %626 = vmatpush1.msra.mxu0 0.0
  %627 = vmatprep.subr.mxu0 0.0
  %628 = vmatpush1.msra.mxu0 0.0
  %629 = vmatprep.subr.mxu0 0.0
  %630 = vmatpush1.msra.mxu0 0.0
  %631 = vmatprep.subr.mxu0 0.0
  %632 = vmatpush1.msra.mxu0 0.0
  %633 = vmatprep.subr.mxu0 0.0
  %634 = vmatpush1.msra.mxu0 0.0
  %635 = vmatprep.subr.mxu0 0.0
  %636 = vmatpush1.msra.mxu0 0.0
  %637 = vmatprep.subr.mxu0 0.0
  %638 = vmatpush1.msra.mxu0 0.0
  %639 = vmatprep.subr.mxu0 0.0
  %640 = vmatpush1.msra.mxu0 0.0
  %641 = vmatprep.subr.mxu0 0.0
  %642 = vmatpush1.msra.mxu0 0.0
  %643 = vmatprep.subr.mxu0 0.0
  %644 = vmatpush1.msra.mxu0 0.0
  %645 = vmatprep.subr.mxu0 0.0
  %646 = vmatpush1.msra.mxu0 0.0
  %647 = vmatprep.subr.mxu0 0.0
  %648 = vmatpush1.msra.mxu0 0.0
  %649 = vmatprep.subr.mxu0 0.0
  %650 = vmatpush1.msra.mxu0 0.0
  %651 = vmatprep.subr.mxu0 0.0
  %652 = vmatpush1.msra.mxu0 0.0
  %653 = vmatprep.subr.mxu0 0.0
  %654 = vmatpush1.msra.mxu0 0.0
  %655 = vmatprep.subr.mxu0 0.0
  %656 = vmatpush1.msra.mxu0 0.0
  %657 = vmatprep.subr.mxu0 0.0
  %658 = vmatpush1.msra.mxu0 0.0
  %659 = vmatprep.subr.mxu0 0.0
  %660 = vmatpush1.msra.mxu0 0.0
  %661 = vmatprep.subr.mxu0 0.0
  %662 = vmatpush1.msra.mxu0 0.0
  %663 = vmatprep.subr.mxu0 0.0
  %664 = vmatpush1.msra.mxu0 0.0
  %665 = vmatprep.subr.mxu0 0.0
  %666 = vmatpush1.msra.mxu0 0.0
  %667 = vmatprep.subr.mxu0 0.0
  %668 = vmatpush1.msra.mxu0 0.0
  %669 = vmatprep.mubr.f32.mxu0 0.0
  %670 = vmatmul.mubr.f32.gmra.mrb[0].mxu0 %v601
  %v671 = vpop.f32.mrb[0].mxu0
  %v672 = vadd.f32 0.0, %v671
  %v673 = vpop.f32.mrb[0].mxu0
  %674 = vmatprep.mubr.f32.mxu0 0.0
  %675 = vmatmul.mubr.f32.gmra.mrb[0].mxu0 %v603
  %v676 = vpop.f32.mrb[0].mxu0
  %v677 = vadd.f32 0.0, %v676
  %v678 = vpop.f32.mrb[0].mxu0
  %679 = vdwg.mxu0
  %v680 = vadd.f32 %v415, %v672
  %v681 = vadd.f32 %v420, %v677
  %v682 = vxor.u32 %v680, 2147483648
  %v683 = vxor.u32 %v681, 2147483648
  %v684 = vmul.f32 %v682, 1.442695
  %v685 = vpow.pop %v684
  %v686 = vmul.f32 %v683, 1.442695
  %v687 = vpow.pop %v686
  %v688 = vadd.f32 %v685, 1.0
  %v689 = vadd.f32 %v687, 1.0
  %v690 = vrcp.pop %v688
  %v691 = vmul.f32 1.0, %v690
  %v692 = vrcp.pop %v689
  %v693 = vmul.f32 1.0, %v692
  %v694 = vtanh.pop %v680
  %v695 = vtanh.pop %v681
  %v696 = vmul.f32 %v691, %v581
  %v697 = vmul.f32 %v693, %v582
  %700 = vrot.lane.b32.xlu0 %v694, 96
  %v701 = vpop.permute.xlu0 %700
  %702 = vrot.lane.b32.xlu0 %v695, 96
  %v703 = vpop.permute.xlu0 %702
  %v706 = vmul.f32 %v691, %v701
  %v707 = vmul.f32 %v693, %v703
  %710 = vrot.lane.b32.xlu0 %v706, 16
  %v711 = vpop.permute.xlu0 %710
  %712 = vrot.lane.b32.xlu0 %v707, 16
  %v713 = vpop.permute.xlu0 %712
  %v716 = vadd.f32 %v696, %v711
  %v717 = vadd.f32 %v697, %v713
  %v718 = vtanh.pop %v716
  %v719 = vtanh.pop %v717
  %722 = vrot.lane.b32.xlu0 %v718, 32
  %v723 = vpop.permute.xlu0 %722
  %724 = vrot.lane.b32.xlu0 %v719, 32
  %v725 = vpop.permute.xlu0 %724
  %v728 = vmul.f32 %v691, %v723
  %v729 = vmul.f32 %v693, %v725
  %732 = vrot.lane.b32.xlu0 %v728, 80
  %v733 = vpop.permute.xlu0 %732
  %734 = vrot.lane.b32.xlu0 %v729, 80
  %v735 = vpop.permute.xlu0 %734
  %v736 = vsel %vm301, %v733, 0
  %v738 = vsel %vm301, %v735, 0
  %740 = vmatprep.subr.mxu0 0.0
  %741 = vmatpush1.msra.mxu0 %v463
  %742 = vmatprep.subr.mxu0 0.0
  %743 = vmatpush1.msra.mxu0 %v464
  %744 = vmatprep.subr.mxu0 0.0
  %745 = vmatpush1.msra.mxu0 0.0
  %746 = vmatprep.subr.mxu0 0.0
  %747 = vmatpush1.msra.mxu0 0.0
  %748 = vmatprep.subr.mxu0 0.0
  %749 = vmatpush1.msra.mxu0 0.0
  %750 = vmatprep.subr.mxu0 0.0
  %751 = vmatpush1.msra.mxu0 0.0
  %752 = vmatprep.subr.mxu0 0.0
  %753 = vmatpush1.msra.mxu0 0.0
  %754 = vmatprep.subr.mxu0 0.0
  %755 = vmatpush1.msra.mxu0 0.0
  %756 = vmatprep.subr.mxu0 0.0
  %757 = vmatpush1.msra.mxu0 0.0
  %758 = vmatprep.subr.mxu0 0.0
  %759 = vmatpush1.msra.mxu0 0.0
  %760 = vmatprep.subr.mxu0 0.0
  %761 = vmatpush1.msra.mxu0 0.0
  %762 = vmatprep.subr.mxu0 0.0
  %763 = vmatpush1.msra.mxu0 0.0
  %764 = vmatprep.subr.mxu0 0.0
  %765 = vmatpush1.msra.mxu0 0.0
  %766 = vmatprep.subr.mxu0 0.0
  %767 = vmatpush1.msra.mxu0 0.0
  %768 = vmatprep.subr.mxu0 0.0
  %769 = vmatpush1.msra.mxu0 0.0
  %770 = vmatprep.subr.mxu0 0.0
  %771 = vmatpush1.msra.mxu0 0.0
  %772 = vmatprep.subr.mxu0 0.0
  %773 = vmatpush1.msra.mxu0 0.0
  %774 = vmatprep.subr.mxu0 0.0
  %775 = vmatpush1.msra.mxu0 0.0
  %776 = vmatprep.subr.mxu0 0.0
  %777 = vmatpush1.msra.mxu0 0.0
  %778 = vmatprep.subr.mxu0 0.0
  %779 = vmatpush1.msra.mxu0 0.0
  %780 = vmatprep.subr.mxu0 0.0
  %781 = vmatpush1.msra.mxu0 0.0
  %782 = vmatprep.subr.mxu0 0.0
  %783 = vmatpush1.msra.mxu0 0.0
  %784 = vmatprep.subr.mxu0 0.0
  %785 = vmatpush1.msra.mxu0 0.0
  %786 = vmatprep.subr.mxu0 0.0
  %787 = vmatpush1.msra.mxu0 0.0
  %788 = vmatprep.subr.mxu0 0.0
  %789 = vmatpush1.msra.mxu0 0.0
  %790 = vmatprep.subr.mxu0 0.0
  %791 = vmatpush1.msra.mxu0 0.0
  %792 = vmatprep.subr.mxu0 0.0
  %793 = vmatpush1.msra.mxu0 0.0
  %794 = vmatprep.subr.mxu0 0.0
  %795 = vmatpush1.msra.mxu0 0.0
  %796 = vmatprep.subr.mxu0 0.0
  %797 = vmatpush1.msra.mxu0 0.0
  %798 = vmatprep.subr.mxu0 0.0
  %799 = vmatpush1.msra.mxu0 0.0
  %800 = vmatprep.subr.mxu0 0.0
  %801 = vmatpush1.msra.mxu0 0.0
  %802 = vmatprep.subr.mxu0 0.0
  %803 = vmatpush1.msra.mxu0 0.0
  %804 = vmatprep.mubr.f32.mxu0 0.0
  %805 = vmatmul.mubr.f32.gmra.mrb[0].mxu0 %v736
  %v806 = vpop.f32.mrb[0].mxu0
  %v807 = vadd.f32 0.0, %v806
  %v808 = vpop.f32.mrb[0].mxu0
  %809 = vmatprep.mubr.f32.mxu0 0.0
  %810 = vmatmul.mubr.f32.gmra.mrb[0].mxu0 %v738
  %v811 = vpop.f32.mrb[0].mxu0
  %v812 = vadd.f32 0.0, %v811
  %v813 = vpop.f32.mrb[0].mxu0
  %814 = vdwg.mxu0
  %v815 = vadd.f32 %v425, %v807
  %v816 = vadd.f32 %v430, %v812
  %v817 = vxor.u32 %v815, 2147483648
  %v818 = vxor.u32 %v816, 2147483648
  %v819 = vmul.f32 %v817, 1.442695
  %v820 = vpow.pop %v819
  %v821 = vmul.f32 %v818, 1.442695
  %v822 = vpow.pop %v821
  %v823 = vadd.f32 %v820, 1.0
  %v824 = vadd.f32 %v822, 1.0
  %v825 = vrcp.pop %v823
  %v826 = vmul.f32 1.0, %v825
  %v827 = vrcp.pop %v824
  %v828 = vmul.f32 1.0, %v827
  %v829 = vtanh.pop %v815
  %v830 = vtanh.pop %v816
  %v831 = vmul.f32 %v826, %v716
  %v832 = vmul.f32 %v828, %v717
  %835 = vrot.lane.b32.xlu0 %v829, 96
  %v836 = vpop.permute.xlu0 %835
  %837 = vrot.lane.b32.xlu0 %v830, 96
  %v838 = vpop.permute.xlu0 %837
  %v841 = vmul.f32 %v826, %v836
  %v842 = vmul.f32 %v828, %v838
  %845 = vrot.lane.b32.xlu0 %v841, 16
  %v846 = vpop.permute.xlu0 %845
  %847 = vrot.lane.b32.xlu0 %v842, 16
  %v848 = vpop.permute.xlu0 %847
  %v851 = vadd.f32 %v831, %v846
  %v852 = vadd.f32 %v832, %v848
  %v853 = vtanh.pop %v851
  %v854 = vtanh.pop %v852
  %857 = vrot.lane.b32.xlu0 %v853, 32
  %v858 = vpop.permute.xlu0 %857
  %859 = vrot.lane.b32.xlu0 %v854, 32
  %v860 = vpop.permute.xlu0 %859
  %v863 = vmul.f32 %v826, %v858
  %v864 = vmul.f32 %v828, %v860
  %867 = vrot.lane.b32.xlu0 %v863, 80
  %v868 = vpop.permute.xlu0 %867
  %869 = vrot.lane.b32.xlu0 %v864, 80
  %v870 = vpop.permute.xlu0 %869
  %v871 = vsel %vm301, %v868, 0
  %v873 = vsel %vm301, %v870, 0
  %875 = vmatprep.subr.mxu0 0.0
  %876 = vmatpush1.msra.mxu0 %v463
  %877 = vmatprep.subr.mxu0 0.0
  %878 = vmatpush1.msra.mxu0 %v464
  %879 = vmatprep.subr.mxu0 0.0
  %880 = vmatpush1.msra.mxu0 0.0
  %881 = vmatprep.subr.mxu0 0.0
  %882 = vmatpush1.msra.mxu0 0.0
  %883 = vmatprep.subr.mxu0 0.0
  %884 = vmatpush1.msra.mxu0 0.0
  %885 = vmatprep.subr.mxu0 0.0
  %886 = vmatpush1.msra.mxu0 0.0
  %887 = vmatprep.subr.mxu0 0.0
  %888 = vmatpush1.msra.mxu0 0.0
  %889 = vmatprep.subr.mxu0 0.0
  %890 = vmatpush1.msra.mxu0 0.0
  %891 = vmatprep.subr.mxu0 0.0
  %892 = vmatpush1.msra.mxu0 0.0
  %893 = vmatprep.subr.mxu0 0.0
  %894 = vmatpush1.msra.mxu0 0.0
  %895 = vmatprep.subr.mxu0 0.0
  %896 = vmatpush1.msra.mxu0 0.0
  %897 = vmatprep.subr.mxu0 0.0
  %898 = vmatpush1.msra.mxu0 0.0
  %899 = vmatprep.subr.mxu0 0.0
  %900 = vmatpush1.msra.mxu0 0.0
  %901 = vmatprep.subr.mxu0 0.0
  %902 = vmatpush1.msra.mxu0 0.0
  %903 = vmatprep.subr.mxu0 0.0
  %904 = vmatpush1.msra.mxu0 0.0
  %905 = vmatprep.subr.mxu0 0.0
  %906 = vmatpush1.msra.mxu0 0.0
  %907 = vmatprep.subr.mxu0 0.0
  %908 = vmatpush1.msra.mxu0 0.0
  %909 = vmatprep.subr.mxu0 0.0
  %910 = vmatpush1.msra.mxu0 0.0
  %911 = vmatprep.subr.mxu0 0.0
  %912 = vmatpush1.msra.mxu0 0.0
  %913 = vmatprep.subr.mxu0 0.0
  %914 = vmatpush1.msra.mxu0 0.0
  %915 = vmatprep.subr.mxu0 0.0
  %916 = vmatpush1.msra.mxu0 0.0
  %917 = vmatprep.subr.mxu0 0.0
  %918 = vmatpush1.msra.mxu0 0.0
  %919 = vmatprep.subr.mxu0 0.0
  %920 = vmatpush1.msra.mxu0 0.0
  %921 = vmatprep.subr.mxu0 0.0
  %922 = vmatpush1.msra.mxu0 0.0
  %923 = vmatprep.subr.mxu0 0.0
  %924 = vmatpush1.msra.mxu0 0.0
  %925 = vmatprep.subr.mxu0 0.0
  %926 = vmatpush1.msra.mxu0 0.0
  %927 = vmatprep.subr.mxu0 0.0
  %928 = vmatpush1.msra.mxu0 0.0
  %929 = vmatprep.subr.mxu0 0.0
  %930 = vmatpush1.msra.mxu0 0.0
  %931 = vmatprep.subr.mxu0 0.0
  %932 = vmatpush1.msra.mxu0 0.0
  %933 = vmatprep.subr.mxu0 0.0
  %934 = vmatpush1.msra.mxu0 0.0
  %935 = vmatprep.subr.mxu0 0.0
  %936 = vmatpush1.msra.mxu0 0.0
  %937 = vmatprep.subr.mxu0 0.0
  %938 = vmatpush1.msra.mxu0 0.0
  %939 = vmatprep.mubr.f32.mxu0 0.0
  %940 = vmatmul.mubr.f32.gmra.mrb[0].mxu0 %v871
  %v941 = vpop.f32.mrb[0].mxu0
  %v942 = vadd.f32 0.0, %v941
  %v943 = vpop.f32.mrb[0].mxu0
  %944 = vmatprep.mubr.f32.mxu0 0.0
  %945 = vmatmul.mubr.f32.gmra.mrb[0].mxu0 %v873
  %v946 = vpop.f32.mrb[0].mxu0
  %v947 = vadd.f32 0.0, %v946
  %v948 = vpop.f32.mrb[0].mxu0
  %949 = vdwg.mxu0
  %v950 = vadd.f32 %v435, %v942
  %v951 = vadd.f32 %v440, %v947
  %v952 = vxor.u32 %v950, 2147483648
  %v953 = vxor.u32 %v951, 2147483648
  %v954 = vmul.f32 %v952, 1.442695
  %v955 = vpow.pop %v954
  %v956 = vmul.f32 %v953, 1.442695
  %v957 = vpow.pop %v956
  %v958 = vadd.f32 %v955, 1.0
  %v959 = vadd.f32 %v957, 1.0
  %v960 = vrcp.pop %v958
  %v961 = vmul.f32 1.0, %v960
  %v962 = vrcp.pop %v959
  %v963 = vmul.f32 1.0, %v962
  %v964 = vtanh.pop %v950
  %v965 = vtanh.pop %v951
  %v966 = vmul.f32 %v961, %v851
  %v967 = vmul.f32 %v963, %v852
  %970 = vrot.lane.b32.xlu0 %v964, 96
  %v971 = vpop.permute.xlu0 %970
  %972 = vrot.lane.b32.xlu0 %v965, 96
  %v973 = vpop.permute.xlu0 %972
  %v976 = vmul.f32 %v961, %v971
  %v977 = vmul.f32 %v963, %v973
  %980 = vrot.lane.b32.xlu0 %v976, 16
  %v981 = vpop.permute.xlu0 %980
  %982 = vrot.lane.b32.xlu0 %v977, 16
  %v983 = vpop.permute.xlu0 %982
  %v986 = vadd.f32 %v966, %v981
  %v987 = vadd.f32 %v967, %v983
  %v988 = vtanh.pop %v986
  %v989 = vtanh.pop %v987
  %992 = vrot.lane.b32.xlu0 %v988, 32
  %v993 = vpop.permute.xlu0 %992
  %994 = vrot.lane.b32.xlu0 %v989, 32
  %v995 = vpop.permute.xlu0 %994
  %v998 = vmul.f32 %v961, %v993
  %v999 = vmul.f32 %v963, %v995
  %1002 = vrot.lane.b32.xlu0 %v998, 80
  %v1003 = vpop.permute.xlu0 %1002
  %1004 = vrot.lane.b32.xlu0 %v999, 80
  %v1005 = vpop.permute.xlu0 %1004
  %v1006 = vsel %vm301, %v1003, 0
  %v1008 = vsel %vm301, %v1005, 0
  %1010 = vmatprep.subr.mxu0 0.0
  %1011 = vmatpush1.msra.mxu0 %v463
  %1012 = vmatprep.subr.mxu0 0.0
  %1013 = vmatpush1.msra.mxu0 %v464
  %1014 = vmatprep.subr.mxu0 0.0
  %1015 = vmatpush1.msra.mxu0 0.0
  %1016 = vmatprep.subr.mxu0 0.0
  %1017 = vmatpush1.msra.mxu0 0.0
  %1018 = vmatprep.subr.mxu0 0.0
  %1019 = vmatpush1.msra.mxu0 0.0
  %1020 = vmatprep.subr.mxu0 0.0
  %1021 = vmatpush1.msra.mxu0 0.0
  %1022 = vmatprep.subr.mxu0 0.0
  %1023 = vmatpush1.msra.mxu0 0.0
  %1024 = vmatprep.subr.mxu0 0.0
  %1025 = vmatpush1.msra.mxu0 0.0
  %1026 = vmatprep.subr.mxu0 0.0
  %1027 = vmatpush1.msra.mxu0 0.0
  %1028 = vmatprep.subr.mxu0 0.0
  %1029 = vmatpush1.msra.mxu0 0.0
  %1030 = vmatprep.subr.mxu0 0.0
  %1031 = vmatpush1.msra.mxu0 0.0
  %1032 = vmatprep.subr.mxu0 0.0
  %1033 = vmatpush1.msra.mxu0 0.0
  %1034 = vmatprep.subr.mxu0 0.0
  %1035 = vmatpush1.msra.mxu0 0.0
  %1036 = vmatprep.subr.mxu0 0.0
  %1037 = vmatpush1.msra.mxu0 0.0
  %1038 = vmatprep.subr.mxu0 0.0
  %1039 = vmatpush1.msra.mxu0 0.0
  %1040 = vmatprep.subr.mxu0 0.0
  %1041 = vmatpush1.msra.mxu0 0.0
  %1042 = vmatprep.subr.mxu0 0.0
  %1043 = vmatpush1.msra.mxu0 0.0
  %1044 = vmatprep.subr.mxu0 0.0
  %1045 = vmatpush1.msra.mxu0 0.0
  %1046 = vmatprep.subr.mxu0 0.0
  %1047 = vmatpush1.msra.mxu0 0.0
  %1048 = vmatprep.subr.mxu0 0.0
  %1049 = vmatpush1.msra.mxu0 0.0
  %1050 = vmatprep.subr.mxu0 0.0
  %1051 = vmatpush1.msra.mxu0 0.0
  %1052 = vmatprep.subr.mxu0 0.0
  %1053 = vmatpush1.msra.mxu0 0.0
  %1054 = vmatprep.subr.mxu0 0.0
  %1055 = vmatpush1.msra.mxu0 0.0
  %1056 = vmatprep.subr.mxu0 0.0
  %1057 = vmatpush1.msra.mxu0 0.0
  %1058 = vmatprep.subr.mxu0 0.0
  %1059 = vmatpush1.msra.mxu0 0.0
  %1060 = vmatprep.subr.mxu0 0.0
  %1061 = vmatpush1.msra.mxu0 0.0
  %1062 = vmatprep.subr.mxu0 0.0
  %1063 = vmatpush1.msra.mxu0 0.0
  %1064 = vmatprep.subr.mxu0 0.0
  %1065 = vmatpush1.msra.mxu0 0.0
  %1066 = vmatprep.subr.mxu0 0.0
  %1067 = vmatpush1.msra.mxu0 0.0
  %1068 = vmatprep.subr.mxu0 0.0
  %1069 = vmatpush1.msra.mxu0 0.0
  %1070 = vmatprep.subr.mxu0 0.0
  %1071 = vmatpush1.msra.mxu0 0.0
  %1072 = vmatprep.subr.mxu0 0.0
  %1073 = vmatpush1.msra.mxu0 0.0
  %1074 = vmatprep.mubr.f32.mxu0 0.0
  %1075 = vmatmul.mubr.f32.gmra.mrb[0].mxu0 %v1006
  %v1076 = vpop.f32.mrb[0].mxu0
  %v1077 = vadd.f32 0.0, %v1076
  %v1078 = vpop.f32.mrb[0].mxu0
  %1079 = vmatprep.mubr.f32.mxu0 0.0
  %1080 = vmatmul.mubr.f32.gmra.mrb[0].mxu0 %v1008
  %v1081 = vpop.f32.mrb[0].mxu0
  %v1082 = vadd.f32 0.0, %v1081
  %v1083 = vpop.f32.mrb[0].mxu0
  %1084 = vdwg.mxu0
  %v1085 = vadd.f32 %v445, %v1077
  %v1086 = vadd.f32 %v450, %v1082
  %v1087 = vxor.u32 %v1085, 2147483648
  %v1088 = vxor.u32 %v1086, 2147483648
  %v1089 = vmul.f32 %v1087, 1.442695
  %v1090 = vpow.pop %v1089
  %v1091 = vmul.f32 %v1088, 1.442695
  %v1092 = vpow.pop %v1091
  %v1093 = vadd.f32 %v1090, 1.0
  %v1094 = vadd.f32 %v1092, 1.0
  %v1095 = vrcp.pop %v1093
  %v1096 = vmul.f32 1.0, %v1095
  %v1097 = vrcp.pop %v1094
  %v1098 = vmul.f32 1.0, %v1097
  %v1099 = vtanh.pop %v1085
  %v1100 = vtanh.pop %v1086
  %v1101 = vmul.f32 %v1096, %v986
  %v1102 = vmul.f32 %v1098, %v987
  %1105 = vrot.lane.b32.xlu0 %v1099, 96
  %v1106 = vpop.permute.xlu0 %1105
  %1107 = vrot.lane.b32.xlu0 %v1100, 96
  %v1108 = vpop.permute.xlu0 %1107
  %v1111 = vmul.f32 %v1096, %v1106
  %v1112 = vmul.f32 %v1098, %v1108
  %1115 = vrot.lane.b32.xlu0 %v1111, 16
  %v1116 = vpop.permute.xlu0 %1115
  %1117 = vrot.lane.b32.xlu0 %v1112, 16
  %v1118 = vpop.permute.xlu0 %1117
  %v1121 = vadd.f32 %v1101, %v1116
  %v1122 = vadd.f32 %v1102, %v1118
  %v1123 = vtanh.pop %v1121
  %v1124 = vtanh.pop %v1122
  %1127 = vrot.lane.b32.xlu0 %v1123, 32
  %v1128 = vpop.permute.xlu0 %1127
  %1129 = vrot.lane.b32.xlu0 %v1124, 32
  %v1130 = vpop.permute.xlu0 %1129
  %v1133 = vmul.f32 %v1096, %v1128
  %v1134 = vmul.f32 %v1098, %v1130
  %1137 = vrot.lane.b32.xlu0 %v1133, 80
  %v1138 = vpop.permute.xlu0 %1137
  %1139 = vrot.lane.b32.xlu0 %v1134, 80
  %v1140 = vpop.permute.xlu0 %1139
  %v1141 = vsel %vm301, %v1138, 0
  %v1143 = vsel %vm301, %v1140, 0
  %1145 = vmatprep.subr.mxu0 0.0
  %1146 = vmatpush1.msra.mxu0 %v463
  %1147 = vmatprep.subr.mxu0 0.0
  %1148 = vmatpush1.msra.mxu0 %v464
  %1149 = vmatprep.subr.mxu0 0.0
  %1150 = vmatpush1.msra.mxu0 0.0
  %1151 = vmatprep.subr.mxu0 0.0
  %1152 = vmatpush1.msra.mxu0 0.0
  %1153 = vmatprep.subr.mxu0 0.0
  %1154 = vmatpush1.msra.mxu0 0.0
  %1155 = vmatprep.subr.mxu0 0.0
  %1156 = vmatpush1.msra.mxu0 0.0
  %1157 = vmatprep.subr.mxu0 0.0
  %1158 = vmatpush1.msra.mxu0 0.0
  %1159 = vmatprep.subr.mxu0 0.0
  %1160 = vmatpush1.msra.mxu0 0.0
  %1161 = vmatprep.subr.mxu0 0.0
  %1162 = vmatpush1.msra.mxu0 0.0
  %1163 = vmatprep.subr.mxu0 0.0
  %1164 = vmatpush1.msra.mxu0 0.0
  %1165 = vmatprep.subr.mxu0 0.0
  %1166 = vmatpush1.msra.mxu0 0.0
  %1167 = vmatprep.subr.mxu0 0.0
  %1168 = vmatpush1.msra.mxu0 0.0
  %1169 = vmatprep.subr.mxu0 0.0
  %1170 = vmatpush1.msra.mxu0 0.0
  %1171 = vmatprep.subr.mxu0 0.0
  %1172 = vmatpush1.msra.mxu0 0.0
  %1173 = vmatprep.subr.mxu0 0.0
  %1174 = vmatpush1.msra.mxu0 0.0
  %1175 = vmatprep.subr.mxu0 0.0
  %1176 = vmatpush1.msra.mxu0 0.0
  %1177 = vmatprep.subr.mxu0 0.0
  %1178 = vmatpush1.msra.mxu0 0.0
  %1179 = vmatprep.subr.mxu0 0.0
  %1180 = vmatpush1.msra.mxu0 0.0
  %1181 = vmatprep.subr.mxu0 0.0
  %1182 = vmatpush1.msra.mxu0 0.0
  %1183 = vmatprep.subr.mxu0 0.0
  %1184 = vmatpush1.msra.mxu0 0.0
  %1185 = vmatprep.subr.mxu0 0.0
  %1186 = vmatpush1.msra.mxu0 0.0
  %1187 = vmatprep.subr.mxu0 0.0
  %1188 = vmatpush1.msra.mxu0 0.0
  %1189 = vmatprep.subr.mxu0 0.0
  %1190 = vmatpush1.msra.mxu0 0.0
  %1191 = vmatprep.subr.mxu0 0.0
  %1192 = vmatpush1.msra.mxu0 0.0
  %1193 = vmatprep.subr.mxu0 0.0
  %1194 = vmatpush1.msra.mxu0 0.0
  %1195 = vmatprep.subr.mxu0 0.0
  %1196 = vmatpush1.msra.mxu0 0.0
  %1197 = vmatprep.subr.mxu0 0.0
  %1198 = vmatpush1.msra.mxu0 0.0
  %1199 = vmatprep.subr.mxu0 0.0
  %1200 = vmatpush1.msra.mxu0 0.0
  %1201 = vmatprep.subr.mxu0 0.0
  %1202 = vmatpush1.msra.mxu0 0.0
  %1203 = vmatprep.subr.mxu0 0.0
  %1204 = vmatpush1.msra.mxu0 0.0
  %1205 = vmatprep.subr.mxu0 0.0
  %1206 = vmatpush1.msra.mxu0 0.0
  %1207 = vmatprep.subr.mxu0 0.0
  %1208 = vmatpush1.msra.mxu0 0.0
  %1209 = vmatprep.mubr.f32.mxu0 0.0
  %1210 = vmatmul.mubr.f32.gmra.mrb[0].mxu0 %v1141
  %v1211 = vpop.f32.mrb[0].mxu0
  %v1212 = vadd.f32 0.0, %v1211
  %v1213 = vpop.f32.mrb[0].mxu0
  %1214 = vmatprep.mubr.f32.mxu0 0.0
  %1215 = vmatmul.mubr.f32.gmra.mrb[0].mxu0 %v1143
  %v1216 = vpop.f32.mrb[0].mxu0
  %v1217 = vadd.f32 0.0, %v1216
  %v1218 = vpop.f32.mrb[0].mxu0
  %1219 = vdwg.mxu0
  %v1220 = vadd.f32 %v455, %v1212
  %v1221 = vadd.f32 %v460, %v1217
  %v1222 = vxor.u32 %v1220, 2147483648
  %v1223 = vxor.u32 %v1221, 2147483648
  %v1224 = vmul.f32 %v1222, 1.442695
  %v1225 = vpow.pop %v1224
  %v1226 = vmul.f32 %v1223, 1.442695
  %v1227 = vpow.pop %v1226
  %v1228 = vadd.f32 %v1225, 1.0
  %v1229 = vadd.f32 %v1227, 1.0
  %v1230 = vrcp.pop %v1228
  %v1231 = vmul.f32 1.0, %v1230
  %v1232 = vrcp.pop %v1229
  %v1233 = vmul.f32 1.0, %v1232
  %v1234 = vtanh.pop %v1220
  %v1235 = vtanh.pop %v1221
  %v1236 = vmul.f32 %v1231, %v1121
  %v1237 = vmul.f32 %v1233, %v1122
  %1240 = vrot.lane.b32.xlu0 %v1234, 96
  %v1241 = vpop.permute.xlu0 %1240
  %1242 = vrot.lane.b32.xlu0 %v1235, 96
  %v1243 = vpop.permute.xlu0 %1242
  %v1246 = vmul.f32 %v1231, %v1241
  %v1247 = vmul.f32 %v1233, %v1243
  %1250 = vrot.lane.b32.xlu0 %v1246, 16
  %v1251 = vpop.permute.xlu0 %1250
  %1252 = vrot.lane.b32.xlu0 %v1247, 16
  %v1253 = vpop.permute.xlu0 %1252
  %v1256 = vadd.f32 %v1236, %v1251
  %v1257 = vadd.f32 %v1237, %v1253
  %v1258 = vtanh.pop %v1256
  %v1259 = vtanh.pop %v1257
  %1262 = vrot.lane.b32.xlu0 %v1258, 32
  %v1263 = vpop.permute.xlu0 %1262
  %1264 = vrot.lane.b32.xlu0 %v1259, 32
  %v1265 = vpop.permute.xlu0 %1264
  %v1268 = vmul.f32 %v1231, %v1263
  %v1269 = vmul.f32 %v1233, %v1265
  %1270 = vmatprep.subr.mxu0 0.0
  %1271 = vmatpush1.msra.mxu0 %v465
  %1272 = vmatprep.subr.mxu0 0.0
  %1273 = vmatpush1.msra.mxu0 %v466
  %1274 = vmatprep.subr.mxu0 0.0
  %1275 = vmatpush1.msra.mxu0 0.0
  %1276 = vmatprep.subr.mxu0 0.0
  %1277 = vmatpush1.msra.mxu0 0.0
  %1278 = vmatprep.subr.mxu0 0.0
  %1279 = vmatpush1.msra.mxu0 0.0
  %1280 = vmatprep.subr.mxu0 0.0
  %1281 = vmatpush1.msra.mxu0 0.0
  %1282 = vmatprep.subr.mxu0 0.0
  %1283 = vmatpush1.msra.mxu0 0.0
  %1284 = vmatprep.subr.mxu0 0.0
  %1285 = vmatpush1.msra.mxu0 0.0
  %1286 = vmatprep.subr.mxu0 0.0
  %1287 = vmatpush1.msra.mxu0 0.0
  %1288 = vmatprep.subr.mxu0 0.0
  %1289 = vmatpush1.msra.mxu0 0.0
  %1290 = vmatprep.subr.mxu0 0.0
  %1291 = vmatpush1.msra.mxu0 0.0
  %1292 = vmatprep.subr.mxu0 0.0
  %1293 = vmatpush1.msra.mxu0 0.0
  %1294 = vmatprep.subr.mxu0 0.0
  %1295 = vmatpush1.msra.mxu0 0.0
  %1296 = vmatprep.subr.mxu0 0.0
  %1297 = vmatpush1.msra.mxu0 0.0
  %1298 = vmatprep.subr.mxu0 0.0
  %1299 = vmatpush1.msra.mxu0 0.0
  %1300 = vmatprep.subr.mxu0 0.0
  %1301 = vmatpush1.msra.mxu0 0.0
  %1302 = vmatprep.subr.mxu0 0.0
  %1303 = vmatpush1.msra.mxu0 0.0
  %1304 = vmatprep.subr.mxu0 0.0
  %1305 = vmatpush1.msra.mxu0 0.0
  %1306 = vmatprep.subr.mxu0 0.0
  %1307 = vmatpush1.msra.mxu0 0.0
  %1308 = vmatprep.subr.mxu0 0.0
  %1309 = vmatpush1.msra.mxu0 0.0
  %1310 = vmatprep.subr.mxu0 0.0
  %1311 = vmatpush1.msra.mxu0 0.0
  %1312 = vmatprep.subr.mxu0 0.0
  %1313 = vmatpush1.msra.mxu0 0.0
  %1314 = vmatprep.subr.mxu0 0.0
  %1315 = vmatpush1.msra.mxu0 0.0
  %1316 = vmatprep.subr.mxu0 0.0
  %1317 = vmatpush1.msra.mxu0 0.0
  %1318 = vmatprep.subr.mxu0 0.0
  %1319 = vmatpush1.msra.mxu0 0.0
  %1320 = vmatprep.subr.mxu0 0.0
  %1321 = vmatpush1.msra.mxu0 0.0
  %1322 = vmatprep.subr.mxu0 0.0
  %1323 = vmatpush1.msra.mxu0 0.0
  %1324 = vmatprep.subr.mxu0 0.0
  %1325 = vmatpush1.msra.mxu0 0.0
  %1326 = vmatprep.subr.mxu0 0.0
  %1327 = vmatpush1.msra.mxu0 0.0
  %1328 = vmatprep.subr.mxu0 0.0
  %1329 = vmatpush1.msra.mxu0 0.0
  %1330 = vmatprep.subr.mxu0 0.0
  %1331 = vmatpush1.msra.mxu0 0.0
  %1332 = vmatprep.subr.mxu0 0.0
  %1333 = vmatpush1.msra.mxu0 0.0
  %1334 = vmatprep.mubr.f32.mxu0 0.0
  %1335 = vmatmul.mubr.f32.gmra.mrb[0].mxu0 %v468
  %v1336 = vpop.f32.mrb[0].mxu0
  %v1337 = vadd.f32 0.0, %v1336
  %v1338 = vpop.f32.mrb[0].mxu0
  %1339 = vmatprep.mubr.f32.mxu0 0.0
  %1340 = vmatmul.mubr.f32.gmra.mrb[0].mxu0 %v468
  %v1341 = vpop.f32.mrb[0].mxu0
  %v1342 = vadd.f32 0.0, %v1341
  %v1343 = vpop.f32.mrb[0].mxu0
  %1344 = vdwg.mxu0
  %1347 = vrot.lane.b32.xlu0 %v1337, 64
  %v1348 = vpop.permute.xlu0 %1347
  %1349 = vrot.lane.b32.xlu0 %v1342, 64
  %v1350 = vpop.permute.xlu0 %1349
  %v1353 = vadd.f32 %v455, %v1348
  %v1354 = vadd.f32 %v460, %v1350
  %v1355 = vxor.u32 %v1353, 2147483648
  %v1356 = vxor.u32 %v1354, 2147483648
  %v1357 = vmul.f32 %v1355, 1.442695
  %v1358 = vpow.pop %v1357
  %v1359 = vmul.f32 %v1356, 1.442695
  %v1360 = vpow.pop %v1359
  %v1361 = vadd.f32 %v1358, 1.0
  %v1362 = vadd.f32 %v1360, 1.0
  %v1363 = vrcp.pop %v1361
  %v1364 = vmul.f32 1.0, %v1363
  %v1365 = vrcp.pop %v1362
  %v1366 = vmul.f32 1.0, %v1365
  %v1367 = vtanh.pop %v1353
  %v1368 = vtanh.pop %v1354
  %v1369 = vmul.f32 %v1364, 0.0
  %v1370 = vmul.f32 %v1366, 0.0
  %1373 = vrot.lane.b32.xlu0 %v1367, 96
  %v1374 = vpop.permute.xlu0 %1373
  %1375 = vrot.lane.b32.xlu0 %v1368, 96
  %v1376 = vpop.permute.xlu0 %1375
  %v1379 = vmul.f32 %v1364, %v1374
  %v1380 = vmul.f32 %v1366, %v1376
  %1383 = vrot.lane.b32.xlu0 %v1379, 16
  %v1384 = vpop.permute.xlu0 %1383
  %1385 = vrot.lane.b32.xlu0 %v1380, 16
  %v1386 = vpop.permute.xlu0 %1385
  %v1389 = vadd.f32 %v1369, %v1384
  %v1390 = vadd.f32 %v1370, %v1386
  %v1391 = vtanh.pop %v1389
  %v1392 = vtanh.pop %v1390
  %1395 = vrot.lane.b32.xlu0 %v1391, 32
  %v1396 = vpop.permute.xlu0 %1395
  %1397 = vrot.lane.b32.xlu0 %v1392, 32
  %v1398 = vpop.permute.xlu0 %1397
  %v1401 = vmul.f32 %v1364, %v1396
  %v1402 = vmul.f32 %v1366, %v1398
  %v1403 = vld [vmem:[%s1] sm:$0xff]
  %v1404 = vld [vmem:[%s1 + $0x8] sm:$0xff]
  %1405 = vset.pattern.permute.xlu0 0
  %1406 = vperm.xlu0 %1405, %v1403
  %v1407 = vpop.permute.xlu0 %1406
  %1408 = vset.pattern.permute.xlu0 0
  %1409 = vperm.xlu0 %1408, %v1404
  %v1410 = vpop.permute.xlu0 %1409
  %vm1411 = vcmp.eq.s32.totalorder %v1407, %v66
  %vm1412 = vcmp.eq.s32.totalorder %v1410, %v66
  %v1413 = vsel %vm1411, 1.0, 0.0
  %v1414 = vsel %vm1412, 1.0, 0.0
  %v1415 = vld [vmem:[%s3] sm:$0xff]
  %v1416 = vld [vmem:[%s3 + $0x8] sm:$0xff]
  %v1417 = vld [vmem:[%s3 + $0x10] sm:$0xff]
  %v1418 = vld [vmem:[%s3 + $0x18] sm:$0xff]
  %vm1419 = vcmask 261120
  %v1421 = vsel %vm1419, %v1413, 0
  %v1424 = vsel %vm1419, %v1414, 0
  %1426 = vmatprep.subr.mxu0 0.0
  %1427 = vmatpush1.msra.mxu0 %v1415
  %1428 = vmatprep.subr.mxu0 0.0
  %1429 = vmatpush1.msra.mxu0 %v1416
  %1430 = vmatprep.subr.mxu0 0.0
  %1431 = vmatpush1.msra.mxu0 %v1417
  %1432 = vmatprep.subr.mxu0 0.0
  %1433 = vmatpush1.msra.mxu0 %v1418
  %1434 = vmatprep.subr.mxu0 0.0
  %1435 = vmatpush1.msra.mxu0 0.0
  %1436 = vmatprep.subr.mxu0 0.0
  %1437 = vmatpush1.msra.mxu0 0.0
  %1438 = vmatprep.subr.mxu0 0.0
  %1439 = vmatpush1.msra.mxu0 0.0
  %1440 = vmatprep.subr.mxu0 0.0
  %1441 = vmatpush1.msra.mxu0 0.0
  %1442 = vmatprep.subr.mxu0 0.0
  %1443 = vmatpush1.msra.mxu0 0.0
  %1444 = vmatprep.subr.mxu0 0.0
  %1445 = vmatpush1.msra.mxu0 0.0
  %1446 = vmatprep.subr.mxu0 0.0
  %1447 = vmatpush1.msra.mxu0 0.0
  %1448 = vmatprep.subr.mxu0 0.0
  %1449 = vmatpush1.msra.mxu0 0.0
  %1450 = vmatprep.subr.mxu0 0.0
  %1451 = vmatpush1.msra.mxu0 0.0
  %1452 = vmatprep.subr.mxu0 0.0
  %1453 = vmatpush1.msra.mxu0 0.0
  %1454 = vmatprep.subr.mxu0 0.0
  %1455 = vmatpush1.msra.mxu0 0.0
  %1456 = vmatprep.subr.mxu0 0.0
  %1457 = vmatpush1.msra.mxu0 0.0
  %1458 = vmatprep.subr.mxu0 0.0
  %1459 = vmatpush1.msra.mxu0 0.0
  %1460 = vmatprep.subr.mxu0 0.0
  %1461 = vmatpush1.msra.mxu0 0.0
  %1462 = vmatprep.subr.mxu0 0.0
  %1463 = vmatpush1.msra.mxu0 0.0
  %1464 = vmatprep.subr.mxu0 0.0
  %1465 = vmatpush1.msra.mxu0 0.0
  %1466 = vmatprep.subr.mxu0 0.0
  %1467 = vmatpush1.msra.mxu0 0.0
  %1468 = vmatprep.subr.mxu0 0.0
  %1469 = vmatpush1.msra.mxu0 0.0
  %1470 = vmatprep.subr.mxu0 0.0
  %1471 = vmatpush1.msra.mxu0 0.0
  %1472 = vmatprep.subr.mxu0 0.0
  %1473 = vmatpush1.msra.mxu0 0.0
  %1474 = vmatprep.subr.mxu0 0.0
  %1475 = vmatpush1.msra.mxu0 0.0
  %1476 = vmatprep.subr.mxu0 0.0
  %1477 = vmatpush1.msra.mxu0 0.0
  %1478 = vmatprep.subr.mxu0 0.0
  %1479 = vmatpush1.msra.mxu0 0.0
  %1480 = vmatprep.subr.mxu0 0.0
  %1481 = vmatpush1.msra.mxu0 0.0
  %1482 = vmatprep.subr.mxu0 0.0
  %1483 = vmatpush1.msra.mxu0 0.0
  %1484 = vmatprep.subr.mxu0 0.0
  %1485 = vmatpush1.msra.mxu0 0.0
  %1486 = vmatprep.subr.mxu0 0.0
  %1487 = vmatpush1.msra.mxu0 0.0
  %1488 = vmatprep.subr.mxu0 0.0
  %1489 = vmatpush1.msra.mxu0 0.0
  %1490 = vmatprep.mubr.f32.mxu0 0.0
  %1491 = vmatmul.mubr.f32.gmra.mrb[0].mxu0 %v1421
  %v1492 = vpop.f32.mrb[0].mxu0
  %v1493 = vadd.f32 0.0, %v1492
  %v1494 = vpop.f32.mrb[0].mxu0
  %1495 = vmatprep.mubr.f32.mxu0 0.0
  %1496 = vmatmul.mubr.f32.gmra.mrb[0].mxu0 %v1424
  %v1497 = vpop.f32.mrb[0].mxu0
  %v1498 = vadd.f32 0.0, %v1497
  %v1499 = vpop.f32.mrb[0].mxu0
  %1500 = vdwg.mxu0
  %v1501 = vld [vmem:[%s8] sm:$0xff]
  %v1502 = vld [vmem:[%s8 + $0x8] sm:$0xff]
  %v1503 = vld [vmem:[%s8 + $0x10] sm:$0xff]
  %v1504 = vld [vmem:[%s8 + $0x18] sm:$0xff]
  %v1505 = vld [vmem:[%s8 + $0x20] sm:$0xff]
  %v1506 = vld [vmem:[%s8 + $0x28] sm:$0xff]
  %v1507 = vld [vmem:[%s8 + $0x30] sm:$0xff]
  %v1508 = vld [vmem:[%s8 + $0x38] sm:$0xff]
  %v1509 = vld [vmem:[%s8 + $0x40] sm:$0xff]
  %v1510 = vld [vmem:[%s8 + $0x48] sm:$0xff]
  %v1511 = vld [vmem:[%s8 + $0x50] sm:$0xff]
  %v1512 = vld [vmem:[%s8 + $0x58] sm:$0xff]
  %v1513 = vld [vmem:[%s8 + $0x60] sm:$0xff]
  %v1514 = vld [vmem:[%s8 + $0x68] sm:$0xff]
  %v1515 = vld [vmem:[%s8 + $0x70] sm:$0xff]
  %v1516 = vld [vmem:[%s8 + $0x78] sm:$0xff]
  %1519 = vrot.lane.b32.xlu0 %v1268, 80
  %v1520 = vpop.permute.xlu0 %1519
  %1521 = vrot.lane.b32.xlu0 %v1269, 80
  %v1522 = vpop.permute.xlu0 %1521
  %v1523 = vsel %vm301, %v1520, 0
  %v1525 = vsel %vm301, %v1522, 0
  %1527 = vmatprep.subr.mxu0 %v1510
  %1528 = vmatpush1.msra.mxu0 %v1509
  %1529 = vmatprep.subr.mxu0 %v1512
  %1530 = vmatpush1.msra.mxu0 %v1511
  %1531 = vmatprep.subr.mxu0 0.0
  %1532 = vmatpush1.msra.mxu0 0.0
  %1533 = vmatprep.subr.mxu0 0.0
  %1534 = vmatpush1.msra.mxu0 0.0
  %1535 = vmatprep.subr.mxu0 0.0
  %1536 = vmatpush1.msra.mxu0 0.0
  %1537 = vmatprep.subr.mxu0 0.0
  %1538 = vmatpush1.msra.mxu0 0.0
  %1539 = vmatprep.subr.mxu0 0.0
  %1540 = vmatpush1.msra.mxu0 0.0
  %1541 = vmatprep.subr.mxu0 0.0
  %1542 = vmatpush1.msra.mxu0 0.0
  %1543 = vmatprep.subr.mxu0 0.0
  %1544 = vmatpush1.msra.mxu0 0.0
  %1545 = vmatprep.subr.mxu0 0.0
  %1546 = vmatpush1.msra.mxu0 0.0
  %1547 = vmatprep.subr.mxu0 0.0
  %1548 = vmatpush1.msra.mxu0 0.0
  %1549 = vmatprep.subr.mxu0 0.0
  %1550 = vmatpush1.msra.mxu0 0.0
  %1551 = vmatprep.subr.mxu0 0.0
  %1552 = vmatpush1.msra.mxu0 0.0
  %1553 = vmatprep.subr.mxu0 0.0
  %1554 = vmatpush1.msra.mxu0 0.0
  %1555 = vmatprep.subr.mxu0 0.0
  %1556 = vmatpush1.msra.mxu0 0.0
  %1557 = vmatprep.subr.mxu0 0.0
  %1558 = vmatpush1.msra.mxu0 0.0
  %1559 = vmatprep.subr.mxu0 0.0
  %1560 = vmatpush1.msra.mxu0 0.0
  %1561 = vmatprep.subr.mxu0 0.0
  %1562 = vmatpush1.msra.mxu0 0.0
  %1563 = vmatprep.subr.mxu0 0.0
  %1564 = vmatpush1.msra.mxu0 0.0
  %1565 = vmatprep.subr.mxu0 0.0
  %1566 = vmatpush1.msra.mxu0 0.0
  %1567 = vmatprep.subr.mxu0 0.0
  %1568 = vmatpush1.msra.mxu0 0.0
  %1569 = vmatprep.subr.mxu0 0.0
  %1570 = vmatpush1.msra.mxu0 0.0
  %1571 = vmatprep.subr.mxu0 0.0
  %1572 = vmatpush1.msra.mxu0 0.0
  %1573 = vmatprep.subr.mxu0 0.0
  %1574 = vmatpush1.msra.mxu0 0.0
  %1575 = vmatprep.subr.mxu0 0.0
  %1576 = vmatpush1.msra.mxu0 0.0
  %1577 = vmatprep.subr.mxu0 0.0
  %1578 = vmatpush1.msra.mxu0 0.0
  %1579 = vmatprep.subr.mxu0 0.0
  %1580 = vmatpush1.msra.mxu0 0.0
  %1581 = vmatprep.subr.mxu0 0.0
  %1582 = vmatpush1.msra.mxu0 0.0
  %1583 = vmatprep.subr.mxu0 0.0
  %1584 = vmatpush1.msra.mxu0 0.0
  %1585 = vmatprep.subr.mxu0 0.0
  %1586 = vmatpush1.msra.mxu0 0.0
  %1587 = vmatprep.subr.mxu0 0.0
  %1588 = vmatpush1.msra.mxu0 0.0
  %1589 = vmatprep.subr.mxu0 0.0
  %1590 = vmatpush1.msra.mxu0 0.0
  %1591 = vmatprep.mubr.f32.mxu0 0.0
  %1592 = vmatmul.mubr.f32.gmra.mrb[0].mxu0 %v1523
  %v1593 = vpop.f32.mrb[0].mxu0
  %v1594 = vadd.f32 0.0, %v1593
  %v1595 = vpop.f32.mrb[0].mxu0
  %v1596 = vadd.f32 0.0, %v1595
  %1597 = vmatprep.mubr.f32.mxu0 0.0
  %1598 = vmatmul.mubr.f32.gmra.mrb[0].mxu0 %v1525
  %v1599 = vpop.f32.mrb[0].mxu0
  %v1600 = vadd.f32 0.0, %v1599
  %v1601 = vpop.f32.mrb[0].mxu0
  %v1602 = vadd.f32 0.0, %v1601
  %1603 = vdwg.mxu0
  %v1605 = vsel %vm1419, %v1493, 0
  %v1608 = vsel %vm1419, %v1498, 0
  %1610 = vmatprep.subr.mxu0 %v1502
  %1611 = vmatpush1.msra.mxu0 %v1501
  %1612 = vmatprep.subr.mxu0 %v1504
  %1613 = vmatpush1.msra.mxu0 %v1503
  %1614 = vmatprep.subr.mxu0 %v1506
  %1615 = vmatpush1.msra.mxu0 %v1505
  %1616 = vmatprep.subr.mxu0 %v1508
  %1617 = vmatpush1.msra.mxu0 %v1507
  %1618 = vmatprep.subr.mxu0 0.0
  %1619 = vmatpush1.msra.mxu0 0.0
  %1620 = vmatprep.subr.mxu0 0.0
  %1621 = vmatpush1.msra.mxu0 0.0
  %1622 = vmatprep.subr.mxu0 0.0
  %1623 = vmatpush1.msra.mxu0 0.0
  %1624 = vmatprep.subr.mxu0 0.0
  %1625 = vmatpush1.msra.mxu0 0.0
  %1626 = vmatprep.subr.mxu0 0.0
  %1627 = vmatpush1.msra.mxu0 0.0
  %1628 = vmatprep.subr.mxu0 0.0
  %1629 = vmatpush1.msra.mxu0 0.0
  %1630 = vmatprep.subr.mxu0 0.0
  %1631 = vmatpush1.msra.mxu0 0.0
  %1632 = vmatprep.subr.mxu0 0.0
  %1633 = vmatpush1.msra.mxu0 0.0
  %1634 = vmatprep.subr.mxu0 0.0
  %1635 = vmatpush1.msra.mxu0 0.0
  %1636 = vmatprep.subr.mxu0 0.0
  %1637 = vmatpush1.msra.mxu0 0.0
  %1638 = vmatprep.subr.mxu0 0.0
  %1639 = vmatpush1.msra.mxu0 0.0
  %1640 = vmatprep.subr.mxu0 0.0
  %1641 = vmatpush1.msra.mxu0 0.0
  %1642 = vmatprep.subr.mxu0 0.0
  %1643 = vmatpush1.msra.mxu0 0.0
  %1644 = vmatprep.subr.mxu0 0.0
  %1645 = vmatpush1.msra.mxu0 0.0
  %1646 = vmatprep.subr.mxu0 0.0
  %1647 = vmatpush1.msra.mxu0 0.0
  %1648 = vmatprep.subr.mxu0 0.0
  %1649 = vmatpush1.msra.mxu0 0.0
  %1650 = vmatprep.subr.mxu0 0.0
  %1651 = vmatpush1.msra.mxu0 0.0
  %1652 = vmatprep.subr.mxu0 0.0
  %1653 = vmatpush1.msra.mxu0 0.0
  %1654 = vmatprep.subr.mxu0 0.0
  %1655 = vmatpush1.msra.mxu0 0.0
  %1656 = vmatprep.subr.mxu0 0.0
  %1657 = vmatpush1.msra.mxu0 0.0
  %1658 = vmatprep.subr.mxu0 0.0
  %1659 = vmatpush1.msra.mxu0 0.0
  %1660 = vmatprep.subr.mxu0 0.0
  %1661 = vmatpush1.msra.mxu0 0.0
  %1662 = vmatprep.subr.mxu0 0.0
  %1663 = vmatpush1.msra.mxu0 0.0
  %1664 = vmatprep.subr.mxu0 0.0
  %1665 = vmatpush1.msra.mxu0 0.0
  %1666 = vmatprep.subr.mxu0 0.0
  %1667 = vmatpush1.msra.mxu0 0.0
  %1668 = vmatprep.subr.mxu0 0.0
  %1669 = vmatpush1.msra.mxu0 0.0
  %1670 = vmatprep.subr.mxu0 0.0
  %1671 = vmatpush1.msra.mxu0 0.0
  %1672 = vmatprep.subr.mxu0 0.0
  %1673 = vmatpush1.msra.mxu0 0.0
  %1674 = vmatprep.mubr.f32.mxu0 0.0
  %1675 = vmatmul.mubr.f32.gmra.mrb[0].mxu0 %v1605
  %v1676 = vpop.f32.mrb[0].mxu0
  %v1677 = vadd.f32 %v1594, %v1676
  %v1678 = vpop.f32.mrb[0].mxu0
  %v1679 = vadd.f32 %v1596, %v1678
  %1680 = vmatprep.mubr.f32.mxu0 0.0
  %1681 = vmatmul.mubr.f32.gmra.mrb[0].mxu0 %v1608
  %v1682 = vpop.f32.mrb[0].mxu0
  %v1683 = vadd.f32 %v1600, %v1682
  %v1684 = vpop.f32.mrb[0].mxu0
  %v1685 = vadd.f32 %v1602, %v1684
  %1686 = vdwg.mxu0
  %1689 = vrot.lane.b32.xlu0 %v1401, 16
  %v1690 = vpop.permute.xlu0 %1689
  %1691 = vrot.lane.b32.xlu0 %v1402, 16
  %v1692 = vpop.permute.xlu0 %1691
  %v1693 = vsel %vm301, %v1690, 0
  %v1695 = vsel %vm301, %v1692, 0
  %1697 = vmatprep.subr.mxu0 %v1514
  %1698 = vmatpush1.msra.mxu0 %v1513
  %1699 = vmatprep.subr.mxu0 %v1516
  %1700 = vmatpush1.msra.mxu0 %v1515
  %1701 = vmatprep.subr.mxu0 0.0
  %1702 = vmatpush1.msra.mxu0 0.0
  %1703 = vmatprep.subr.mxu0 0.0
  %1704 = vmatpush1.msra.mxu0 0.0
  %1705 = vmatprep.subr.mxu0 0.0
  %1706 = vmatpush1.msra.mxu0 0.0
  %1707 = vmatprep.subr.mxu0 0.0
  %1708 = vmatpush1.msra.mxu0 0.0
  %1709 = vmatprep.subr.mxu0 0.0
  %1710 = vmatpush1.msra.mxu0 0.0
  %1711 = vmatprep.subr.mxu0 0.0
  %1712 = vmatpush1.msra.mxu0 0.0
  %1713 = vmatprep.subr.mxu0 0.0
  %1714 = vmatpush1.msra.mxu0 0.0
  %1715 = vmatprep.subr.mxu0 0.0
  %1716 = vmatpush1.msra.mxu0 0.0
  %1717 = vmatprep.subr.mxu0 0.0
  %1718 = vmatpush1.msra.mxu0 0.0
  %1719 = vmatprep.subr.mxu0 0.0
  %1720 = vmatpush1.msra.mxu0 0.0
  %1721 = vmatprep.subr.mxu0 0.0
  %1722 = vmatpush1.msra.mxu0 0.0
  %1723 = vmatprep.subr.mxu0 0.0
  %1724 = vmatpush1.msra.mxu0 0.0
  %1725 = vmatprep.subr.mxu0 0.0
  %1726 = vmatpush1.msra.mxu0 0.0
  %1727 = vmatprep.subr.mxu0 0.0
  %1728 = vmatpush1.msra.mxu0 0.0
  %1729 = vmatprep.subr.mxu0 0.0
  %1730 = vmatpush1.msra.mxu0 0.0
  %1731 = vmatprep.subr.mxu0 0.0
  %1732 = vmatpush1.msra.mxu0 0.0
  %1733 = vmatprep.subr.mxu0 0.0
  %1734 = vmatpush1.msra.mxu0 0.0
  %1735 = vmatprep.subr.mxu0 0.0
  %1736 = vmatpush1.msra.mxu0 0.0
  %1737 = vmatprep.subr.mxu0 0.0
  %1738 = vmatpush1.msra.mxu0 0.0
  %1739 = vmatprep.subr.mxu0 0.0
  %1740 = vmatpush1.msra.mxu0 0.0
  %1741 = vmatprep.subr.mxu0 0.0
  %1742 = vmatpush1.msra.mxu0 0.0
  %1743 = vmatprep.subr.mxu0 0.0
  %1744 = vmatpush1.msra.mxu0 0.0
  %1745 = vmatprep.subr.mxu0 0.0
  %1746 = vmatpush1.msra.mxu0 0.0
  %1747 = vmatprep.subr.mxu0 0.0
  %1748 = vmatpush1.msra.mxu0 0.0
  %1749 = vmatprep.subr.mxu0 0.0
  %1750 = vmatpush1.msra.mxu0 0.0
  %1751 = vmatprep.subr.mxu0 0.0
  %1752 = vmatpush1.msra.mxu0 0.0
  %1753 = vmatprep.subr.mxu0 0.0
  %1754 = vmatpush1.msra.mxu0 0.0
  %1755 = vmatprep.subr.mxu0 0.0
  %1756 = vmatpush1.msra.mxu0 0.0
  %1757 = vmatprep.subr.mxu0 0.0
  %1758 = vmatpush1.msra.mxu0 0.0
  %1759 = vmatprep.subr.mxu0 0.0
  %1760 = vmatpush1.msra.mxu0 0.0
  %1761 = vmatprep.mubr.f32.mxu0 0.0
  %1762 = vmatmul.mubr.f32.gmra.mrb[0].mxu0 %v1693
  %v1763 = vpop.f32.mrb[0].mxu0
  %v1764 = vadd.f32 0.0, %v1763
  %v1765 = vpop.f32.mrb[0].mxu0
  %v1766 = vadd.f32 0.0, %v1765
  %1767 = vmatprep.mubr.f32.mxu0 0.0
  %1768 = vmatmul.mubr.f32.gmra.mrb[0].mxu0 %v1695
  %v1769 = vpop.f32.mrb[0].mxu0
  %v1770 = vadd.f32 0.0, %v1769
  %v1771 = vpop.f32.mrb[0].mxu0
  %v1772 = vadd.f32 0.0, %v1771
  %1773 = vdwg.mxu0
  %v1774 = vadd.f32 %v1677, %v1764
  %v1775 = vadd.f32 %v1679, %v1766
  %v1776 = vadd.f32 %v1683, %v1770
  %v1777 = vadd.f32 %v1685, %v1772
  %v1778 = vld [vmem:[%s11] sm:$0x3]
  %v1780 = vlaneseq
  %v1781 = vshrl.u32 %v1780, 7
  %v1782 = vsub.s32 0, %v1781
  %v1783 = vrot.slane %v1778, %v1782
  %v1784 = vlaneseq
  %v1785 = vshrl.u32 %v1784, 7
  %v1786 = vsub.s32 1, %v1785
  %v1787 = vrot.slane %v1778, %v1786
  %v1790 = vadd.f32 %v1774, %v1783
  %v1791 = vadd.f32 %v1775, %v1787
  %v1792 = vadd.f32 %v1776, %v1783
  %v1793 = vadd.f32 %v1777, %v1787
  %v1794 = vld [vmem:[%s9] sm:$0xff]
  %v1795 = vld [vmem:[%s9 + $0x8] sm:$0xff]
  %v1796 = vld [vmem:[%s9 + $0x10] sm:$0xff]
  %v1797 = vld [vmem:[%s9 + $0x18] sm:$0xff]
  %v1798 = vld [vmem:[%s10] sm:$0xff]
  %v1799 = vld [vmem:[%s10 + $0x8] sm:$0xff]
  %v1800 = vld [vmem:[%s10 + $0x10] sm:$0xff]
  %v1801 = vld [vmem:[%s10 + $0x18] sm:$0xff]
  %v1802 = vsel %vm1419, 0.0, 0
  %1804 = vmatprep.subr.mxu0 0.0
  %1805 = vmatpush1.msra.mxu0 %v1794
  %1806 = vmatprep.subr.mxu0 0.0
  %1807 = vmatpush1.msra.mxu0 %v1795
  %1808 = vmatprep.subr.mxu0 0.0
  %1809 = vmatpush1.msra.mxu0 %v1796
  %1810 = vmatprep.subr.mxu0 0.0
  %1811 = vmatpush1.msra.mxu0 %v1797
  %1812 = vmatprep.subr.mxu0 0.0
  %1813 = vmatpush1.msra.mxu0 0.0
  %1814 = vmatprep.subr.mxu0 0.0
  %1815 = vmatpush1.msra.mxu0 0.0
  %1816 = vmatprep.subr.mxu0 0.0
  %1817 = vmatpush1.msra.mxu0 0.0
  %1818 = vmatprep.subr.mxu0 0.0
  %1819 = vmatpush1.msra.mxu0 0.0
  %1820 = vmatprep.subr.mxu0 0.0
  %1821 = vmatpush1.msra.mxu0 0.0
  %1822 = vmatprep.subr.mxu0 0.0
  %1823 = vmatpush1.msra.mxu0 0.0
  %1824 = vmatprep.subr.mxu0 0.0
  %1825 = vmatpush1.msra.mxu0 0.0
  %1826 = vmatprep.subr.mxu0 0.0
  %1827 = vmatpush1.msra.mxu0 0.0
  %1828 = vmatprep.subr.mxu0 0.0
  %1829 = vmatpush1.msra.mxu0 0.0
  %1830 = vmatprep.subr.mxu0 0.0
  %1831 = vmatpush1.msra.mxu0 0.0
  %1832 = vmatprep.subr.mxu0 0.0
  %1833 = vmatpush1.msra.mxu0 0.0
  %1834 = vmatprep.subr.mxu0 0.0
  %1835 = vmatpush1.msra.mxu0 0.0
  %1836 = vmatprep.subr.mxu0 0.0
  %1837 = vmatpush1.msra.mxu0 0.0
  %1838 = vmatprep.subr.mxu0 0.0
  %1839 = vmatpush1.msra.mxu0 0.0
  %1840 = vmatprep.subr.mxu0 0.0
  %1841 = vmatpush1.msra.mxu0 0.0
  %1842 = vmatprep.subr.mxu0 0.0
  %1843 = vmatpush1.msra.mxu0 0.0
  %1844 = vmatprep.subr.mxu0 0.0
  %1845 = vmatpush1.msra.mxu0 0.0
  %1846 = vmatprep.subr.mxu0 0.0
  %1847 = vmatpush1.msra.mxu0 0.0
  %1848 = vmatprep.subr.mxu0 0.0
  %1849 = vmatpush1.msra.mxu0 0.0
  %1850 = vmatprep.subr.mxu0 0.0
  %1851 = vmatpush1.msra.mxu0 0.0
  %1852 = vmatprep.subr.mxu0 0.0
  %1853 = vmatpush1.msra.mxu0 0.0
  %1854 = vmatprep.subr.mxu0 0.0
  %1855 = vmatpush1.msra.mxu0 0.0
  %1856 = vmatprep.subr.mxu0 0.0
  %1857 = vmatpush1.msra.mxu0 0.0
  %1858 = vmatprep.subr.mxu0 0.0
  %1859 = vmatpush1.msra.mxu0 0.0
  %1860 = vmatprep.subr.mxu0 0.0
  %1861 = vmatpush1.msra.mxu0 0.0
  %1862 = vmatprep.subr.mxu0 0.0
  %1863 = vmatpush1.msra.mxu0 0.0
  %1864 = vmatprep.subr.mxu0 0.0
  %1865 = vmatpush1.msra.mxu0 0.0
  %1866 = vmatprep.subr.mxu0 0.0
  %1867 = vmatpush1.msra.mxu0 0.0
  %1868 = vmatprep.mubr.f32.mxu0 0.0
  %1869 = vmatmul.mubr.f32.gmra.mrb[0].mxu0 %v1802
  %v1870 = vpop.f32.mrb[0].mxu0
  %v1871 = vadd.f32 0.0, %v1870
  %v1872 = vpop.f32.mrb[0].mxu0
  %1873 = vdwg.mxu0
  %v1874 = vadd.f32 %v1790, %v1871
  %v1875 = vxor.u32 %v1874, 2147483648
  %v1876 = vmul.f32 %v1875, 1.442695
  %v1877 = vpow.pop %v1876
  %v1878 = vadd.f32 %v1877, 1.0
  %v1879 = vrcp.pop %v1878
  %v1880 = vmul.f32 1.0, %v1879
  %v1881 = vtanh.pop %v1874
  %v1882 = vmul.f32 %v1880, 0.0
  %1884 = vrot.lane.b32.xlu0 %v1881, 64
  %v1885 = vpop.permute.xlu0 %1884
  %v1887 = vmul.f32 %v1880, %v1885
  %1889 = vrot.lane.b32.xlu0 %v1887, 32
  %v1890 = vpop.permute.xlu0 %1889
  %v1892 = vadd.f32 %v1882, %v1890
  %v1893 = vtanh.pop %v1892
  %1895 = vrot.lane.b32.xlu0 %v1893, 64
  %v1896 = vpop.permute.xlu0 %1895
  %v1898 = vmul.f32 %v1880, %v1896
  %1900 = vrot.lane.b32.xlu0 %v1898, 32
  %v1901 = vpop.permute.xlu0 %1900
  %vm1903 = vcmask 254976
  %1904 = vst.msk [vmem:[#allocation2] sm:$0x3] %vm1903, %v1901
  %v1905 = vsel %vm1419, %v1901, 0
  %1907 = vmatprep.subr.mxu0 0.0
  %1908 = vmatpush1.msra.mxu0 %v1794
  %1909 = vmatprep.subr.mxu0 0.0
  %1910 = vmatpush1.msra.mxu0 %v1795
  %1911 = vmatprep.subr.mxu0 0.0
  %1912 = vmatpush1.msra.mxu0 %v1796
  %1913 = vmatprep.subr.mxu0 0.0
  %1914 = vmatpush1.msra.mxu0 %v1797
  %1915 = vmatprep.subr.mxu0 0.0
  %1916 = vmatpush1.msra.mxu0 0.0
  %1917 = vmatprep.subr.mxu0 0.0
  %1918 = vmatpush1.msra.mxu0 0.0
  %1919 = vmatprep.subr.mxu0 0.0
  %1920 = vmatpush1.msra.mxu0 0.0
  %1921 = vmatprep.subr.mxu0 0.0
  %1922 = vmatpush1.msra.mxu0 0.0
  %1923 = vmatprep.subr.mxu0 0.0
  %1924 = vmatpush1.msra.mxu0 0.0
  %1925 = vmatprep.subr.mxu0 0.0
  %1926 = vmatpush1.msra.mxu0 0.0
  %1927 = vmatprep.subr.mxu0 0.0
  %1928 = vmatpush1.msra.mxu0 0.0
  %1929 = vmatprep.subr.mxu0 0.0
  %1930 = vmatpush1.msra.mxu0 0.0
  %1931 = vmatprep.subr.mxu0 0.0
  %1932 = vmatpush1.msra.mxu0 0.0
  %1933 = vmatprep.subr.mxu0 0.0
  %1934 = vmatpush1.msra.mxu0 0.0
  %1935 = vmatprep.subr.mxu0 0.0
  %1936 = vmatpush1.msra.mxu0 0.0
  %1937 = vmatprep.subr.mxu0 0.0
  %1938 = vmatpush1.msra.mxu0 0.0
  %1939 = vmatprep.subr.mxu0 0.0
  %1940 = vmatpush1.msra.mxu0 0.0
  %1941 = vmatprep.subr.mxu0 0.0
  %1942 = vmatpush1.msra.mxu0 0.0
  %1943 = vmatprep.subr.mxu0 0.0
  %1944 = vmatpush1.msra.mxu0 0.0
  %1945 = vmatprep.subr.mxu0 0.0
  %1946 = vmatpush1.msra.mxu0 0.0
  %1947 = vmatprep.subr.mxu0 0.0
  %1948 = vmatpush1.msra.mxu0 0.0
  %1949 = vmatprep.subr.mxu0 0.0
  %1950 = vmatpush1.msra.mxu0 0.0
  %1951 = vmatprep.subr.mxu0 0.0
  %1952 = vmatpush1.msra.mxu0 0.0
  %1953 = vmatprep.subr.mxu0 0.0
  %1954 = vmatpush1.msra.mxu0 0.0
  %1955 = vmatprep.subr.mxu0 0.0
  %1956 = vmatpush1.msra.mxu0 0.0
  %1957 = vmatprep.subr.mxu0 0.0
  %1958 = vmatpush1.msra.mxu0 0.0
  %1959 = vmatprep.subr.mxu0 0.0
  %1960 = vmatpush1.msra.mxu0 0.0
  %1961 = vmatprep.subr.mxu0 0.0
  %1962 = vmatpush1.msra.mxu0 0.0
  %1963 = vmatprep.subr.mxu0 0.0
  %1964 = vmatpush1.msra.mxu0 0.0
  %1965 = vmatprep.subr.mxu0 0.0
  %1966 = vmatpush1.msra.mxu0 0.0
  %1967 = vmatprep.subr.mxu0 0.0
  %1968 = vmatpush1.msra.mxu0 0.0
  %1969 = vmatprep.subr.mxu0 0.0
  %1970 = vmatpush1.msra.mxu0 0.0
  %1971 = vmatprep.mubr.f32.mxu0 0.0
  %1972 = vmatmul.mubr.f32.gmra.mrb[0].mxu0 %v1905
  %v1973 = vpop.f32.mrb[0].mxu0
  %v1974 = vadd.f32 0.0, %v1973
  %v1975 = vpop.f32.mrb[0].mxu0
  %1976 = vdwg.mxu0
  %v1978 = vrot.slane %v1974, 6
  %v1980 = vadd.f32 %v1790, %v1978
  %v1981 = vxor.u32 %v1980, 2147483648
  %v1982 = vmul.f32 %v1981, 1.442695
  %v1983 = vpow.pop %v1982
  %v1984 = vadd.f32 %v1983, 1.0
  %v1985 = vrcp.pop %v1984
  %v1986 = vmul.f32 1.0, %v1985
  %v1987 = vtanh.pop %v1980
  %v1989 = vrot.slane %v1892, 6
  %v1991 = vmul.f32 %v1986, %v1989
  %1993 = vrot.lane.b32.xlu0 %v1987, 64
  %v1994 = vpop.permute.xlu0 %1993
  %v1996 = vmul.f32 %v1986, %v1994
  %1998 = vrot.lane.b32.xlu0 %v1996, 32
  %v1999 = vpop.permute.xlu0 %1998
  %v2001 = vadd.f32 %v1991, %v1999
  %v2002 = vtanh.pop %v2001
  %2004 = vrot.lane.b32.xlu0 %v2002, 64
  %v2005 = vpop.permute.xlu0 %2004
  %v2007 = vmul.f32 %v1986, %v2005
  %2009 = vrot.lane.b32.xlu0 %v2007, 32
  %v2010 = vpop.permute.xlu0 %2009
  %vm2012 = vcmask 257026
  %2013 = vst.msk [vmem:[#allocation2] sm:$0xc] %vm2012, %v2010
  %v2014 = vrot.slane %v2007, 2
  %2015 = vrot.lane.b32.xlu0 %v2014, 32
  %v2016 = vpop.permute.xlu0 %2015
  %v2017 = vsel %vm1419, %v2016, 0
  %2019 = vmatprep.subr.mxu0 0.0
  %2020 = vmatpush1.msra.mxu0 %v1794
  %2021 = vmatprep.subr.mxu0 0.0
  %2022 = vmatpush1.msra.mxu0 %v1795
  %2023 = vmatprep.subr.mxu0 0.0
  %2024 = vmatpush1.msra.mxu0 %v1796
  %2025 = vmatprep.subr.mxu0 0.0
  %2026 = vmatpush1.msra.mxu0 %v1797
  %2027 = vmatprep.subr.mxu0 0.0
  %2028 = vmatpush1.msra.mxu0 0.0
  %2029 = vmatprep.subr.mxu0 0.0
  %2030 = vmatpush1.msra.mxu0 0.0
  %2031 = vmatprep.subr.mxu0 0.0
  %2032 = vmatpush1.msra.mxu0 0.0
  %2033 = vmatprep.subr.mxu0 0.0
  %2034 = vmatpush1.msra.mxu0 0.0
  %2035 = vmatprep.subr.mxu0 0.0
  %2036 = vmatpush1.msra.mxu0 0.0
  %2037 = vmatprep.subr.mxu0 0.0
  %2038 = vmatpush1.msra.mxu0 0.0
  %2039 = vmatprep.subr.mxu0 0.0
  %2040 = vmatpush1.msra.mxu0 0.0
  %2041 = vmatprep.subr.mxu0 0.0
  %2042 = vmatpush1.msra.mxu0 0.0
  %2043 = vmatprep.subr.mxu0 0.0
  %2044 = vmatpush1.msra.mxu0 0.0
  %2045 = vmatprep.subr.mxu0 0.0
  %2046 = vmatpush1.msra.mxu0 0.0
  %2047 = vmatprep.subr.mxu0 0.0
  %2048 = vmatpush1.msra.mxu0 0.0
  %2049 = vmatprep.subr.mxu0 0.0
  %2050 = vmatpush1.msra.mxu0 0.0
  %2051 = vmatprep.subr.mxu0 0.0
  %2052 = vmatpush1.msra.mxu0 0.0
  %2053 = vmatprep.subr.mxu0 0.0
  %2054 = vmatpush1.msra.mxu0 0.0
  %2055 = vmatprep.subr.mxu0 0.0
  %2056 = vmatpush1.msra.mxu0 0.0
  %2057 = vmatprep.subr.mxu0 0.0
  %2058 = vmatpush1.msra.mxu0 0.0
  %2059 = vmatprep.subr.mxu0 0.0
  %2060 = vmatpush1.msra.mxu0 0.0
  %2061 = vmatprep.subr.mxu0 0.0
  %2062 = vmatpush1.msra.mxu0 0.0
  %2063 = vmatprep.subr.mxu0 0.0
  %2064 = vmatpush1.msra.mxu0 0.0
  %2065 = vmatprep.subr.mxu0 0.0
  %2066 = vmatpush1.msra.mxu0 0.0
  %2067 = vmatprep.subr.mxu0 0.0
  %2068 = vmatpush1.msra.mxu0 0.0
  %2069 = vmatprep.subr.mxu0 0.0
  %2070 = vmatpush1.msra.mxu0 0.0
  %2071 = vmatprep.subr.mxu0 0.0
  %2072 = vmatpush1.msra.mxu0 0.0
  %2073 = vmatprep.subr.mxu0 0.0
  %2074 = vmatpush1.msra.mxu0 0.0
  %2075 = vmatprep.subr.mxu0 0.0
  %2076 = vmatpush1.msra.mxu0 0.0
  %2077 = vmatprep.subr.mxu0 0.0
  %2078 = vmatpush1.msra.mxu0 0.0
  %2079 = vmatprep.subr.mxu0 0.0
  %2080 = vmatpush1.msra.mxu0 0.0
  %2081 = vmatprep.subr.mxu0 0.0
  %2082 = vmatpush1.msra.mxu0 0.0
  %2083 = vmatprep.mubr.f32.mxu0 0.0
  %2084 = vmatmul.mubr.f32.gmra.mrb[0].mxu0 %v2017
  %v2085 = vpop.f32.mrb[0].mxu0
  %v2086 = vadd.f32 0.0, %v2085
  %v2087 = vpop.f32.mrb[0].mxu0
  %2088 = vdwg.mxu0
  %v2090 = vrot.slane %v2086, 4
  %v2092 = vadd.f32 %v1790, %v2090
  %v2093 = vxor.u32 %v2092, 2147483648
  %v2094 = vmul.f32 %v2093, 1.442695
  %v2095 = vpow.pop %v2094
  %v2096 = vadd.f32 %v2095, 1.0
  %v2097 = vrcp.pop %v2096
  %v2098 = vmul.f32 1.0, %v2097
  %v2099 = vtanh.pop %v2092
  %v2101 = vrot.slane %v2001, 6
  %v2103 = vmul.f32 %v2098, %v2101
  %2105 = vrot.lane.b32.xlu0 %v2099, 64
  %v2106 = vpop.permute.xlu0 %2105
  %v2108 = vmul.f32 %v2098, %v2106
  %2110 = vrot.lane.b32.xlu0 %v2108, 32
  %v2111 = vpop.permute.xlu0 %2110
  %v2113 = vadd.f32 %v2103, %v2111
  %v2114 = vtanh.pop %v2113
  %2116 = vrot.lane.b32.xlu0 %v2114, 64
  %v2117 = vpop.permute.xlu0 %2116
  %v2119 = vmul.f32 %v2098, %v2117
  %2121 = vrot.lane.b32.xlu0 %v2119, 32
  %v2122 = vpop.permute.xlu0 %2121
  %vm2124 = vcmask 259076
  %2125 = vst.msk [vmem:[#allocation2] sm:$0x30] %vm2124, %v2122
  %v2126 = vrot.slane %v2119, 4
  %2127 = vrot.lane.b32.xlu0 %v2126, 32
  %v2128 = vpop.permute.xlu0 %2127
  %v2129 = vsel %vm1419, %v2128, 0
  %2131 = vmatprep.subr.mxu0 0.0
  %2132 = vmatpush1.msra.mxu0 %v1794
  %2133 = vmatprep.subr.mxu0 0.0
  %2134 = vmatpush1.msra.mxu0 %v1795
  %2135 = vmatprep.subr.mxu0 0.0
  %2136 = vmatpush1.msra.mxu0 %v1796
  %2137 = vmatprep.subr.mxu0 0.0
  %2138 = vmatpush1.msra.mxu0 %v1797
  %2139 = vmatprep.subr.mxu0 0.0
  %2140 = vmatpush1.msra.mxu0 0.0
  %2141 = vmatprep.subr.mxu0 0.0
  %2142 = vmatpush1.msra.mxu0 0.0
  %2143 = vmatprep.subr.mxu0 0.0
  %2144 = vmatpush1.msra.mxu0 0.0
  %2145 = vmatprep.subr.mxu0 0.0
  %2146 = vmatpush1.msra.mxu0 0.0
  %2147 = vmatprep.subr.mxu0 0.0
  %2148 = vmatpush1.msra.mxu0 0.0
  %2149 = vmatprep.subr.mxu0 0.0
  %2150 = vmatpush1.msra.mxu0 0.0
  %2151 = vmatprep.subr.mxu0 0.0
  %2152 = vmatpush1.msra.mxu0 0.0
  %2153 = vmatprep.subr.mxu0 0.0
  %2154 = vmatpush1.msra.mxu0 0.0
  %2155 = vmatprep.subr.mxu0 0.0
  %2156 = vmatpush1.msra.mxu0 0.0
  %2157 = vmatprep.subr.mxu0 0.0
  %2158 = vmatpush1.msra.mxu0 0.0
  %2159 = vmatprep.subr.mxu0 0.0
  %2160 = vmatpush1.msra.mxu0 0.0
  %2161 = vmatprep.subr.mxu0 0.0
  %2162 = vmatpush1.msra.mxu0 0.0
  %2163 = vmatprep.subr.mxu0 0.0
  %2164 = vmatpush1.msra.mxu0 0.0
  %2165 = vmatprep.subr.mxu0 0.0
  %2166 = vmatpush1.msra.mxu0 0.0
  %2167 = vmatprep.subr.mxu0 0.0
  %2168 = vmatpush1.msra.mxu0 0.0
  %2169 = vmatprep.subr.mxu0 0.0
  %2170 = vmatpush1.msra.mxu0 0.0
  %2171 = vmatprep.subr.mxu0 0.0
  %2172 = vmatpush1.msra.mxu0 0.0
  %2173 = vmatprep.subr.mxu0 0.0
  %2174 = vmatpush1.msra.mxu0 0.0
  %2175 = vmatprep.subr.mxu0 0.0
  %2176 = vmatpush1.msra.mxu0 0.0
  %2177 = vmatprep.subr.mxu0 0.0
  %2178 = vmatpush1.msra.mxu0 0.0
  %2179 = vmatprep.subr.mxu0 0.0
  %2180 = vmatpush1.msra.mxu0 0.0
  %2181 = vmatprep.subr.mxu0 0.0
  %2182 = vmatpush1.msra.mxu0 0.0
  %2183 = vmatprep.subr.mxu0 0.0
  %2184 = vmatpush1.msra.mxu0 0.0
  %2185 = vmatprep.subr.mxu0 0.0
  %2186 = vmatpush1.msra.mxu0 0.0
  %2187 = vmatprep.subr.mxu0 0.0
  %2188 = vmatpush1.msra.mxu0 0.0
  %2189 = vmatprep.subr.mxu0 0.0
  %2190 = vmatpush1.msra.mxu0 0.0
  %2191 = vmatprep.subr.mxu0 0.0
  %2192 = vmatpush1.msra.mxu0 0.0
  %2193 = vmatprep.subr.mxu0 0.0
  %2194 = vmatpush1.msra.mxu0 0.0
  %2195 = vmatprep.mubr.f32.mxu0 0.0
  %2196 = vmatmul.mubr.f32.gmra.mrb[0].mxu0 %v2129
  %v2197 = vpop.f32.mrb[0].mxu0
  %v2198 = vadd.f32 0.0, %v2197
  %v2199 = vpop.f32.mrb[0].mxu0
  %2200 = vdwg.mxu0
  %v2202 = vrot.slane %v2198, 2
  %v2204 = vadd.f32 %v1790, %v2202
  %v2205 = vxor.u32 %v2204, 2147483648
  %v2206 = vmul.f32 %v2205, 1.442695
  %v2207 = vpow.pop %v2206
  %v2208 = vadd.f32 %v2207, 1.0
  %v2209 = vrcp.pop %v2208
  %v2210 = vmul.f32 1.0, %v2209
  %v2211 = vtanh.pop %v2204
  %v2213 = vrot.slane %v2113, 6
  %v2215 = vmul.f32 %v2210, %v2213
  %2217 = vrot.lane.b32.xlu0 %v2211, 64
  %v2218 = vpop.permute.xlu0 %2217
  %v2220 = vmul.f32 %v2210, %v2218
  %2222 = vrot.lane.b32.xlu0 %v2220, 32
  %v2223 = vpop.permute.xlu0 %2222
  %v2225 = vadd.f32 %v2215, %v2223
  %v2226 = vtanh.pop %v2225
  %2228 = vrot.lane.b32.xlu0 %v2226, 64
  %v2229 = vpop.permute.xlu0 %2228
  %v2231 = vmul.f32 %v2210, %v2229
  %2233 = vrot.lane.b32.xlu0 %v2231, 32
  %v2234 = vpop.permute.xlu0 %2233
  %vm2236 = vcmask 261126
  %2237 = vst.msk [vmem:[#allocation2] sm:$0xc0] %vm2236, %v2234
  %v2238 = vrot.slane %v2231, 6
  %2239 = vrot.lane.b32.xlu0 %v2238, 32
  %v2240 = vpop.permute.xlu0 %2239
  %v2241 = vsel %vm1419, %v2240, 0
  %2243 = vmatprep.subr.mxu0 0.0
  %2244 = vmatpush1.msra.mxu0 %v1794
  %2245 = vmatprep.subr.mxu0 0.0
  %2246 = vmatpush1.msra.mxu0 %v1795
  %2247 = vmatprep.subr.mxu0 0.0
  %2248 = vmatpush1.msra.mxu0 %v1796
  %2249 = vmatprep.subr.mxu0 0.0
  %2250 = vmatpush1.msra.mxu0 %v1797
  %2251 = vmatprep.subr.mxu0 0.0
  %2252 = vmatpush1.msra.mxu0 0.0
  %2253 = vmatprep.subr.mxu0 0.0
  %2254 = vmatpush1.msra.mxu0 0.0
  %2255 = vmatprep.subr.mxu0 0.0
  %2256 = vmatpush1.msra.mxu0 0.0
  %2257 = vmatprep.subr.mxu0 0.0
  %2258 = vmatpush1.msra.mxu0 0.0
  %2259 = vmatprep.subr.mxu0 0.0
  %2260 = vmatpush1.msra.mxu0 0.0
  %2261 = vmatprep.subr.mxu0 0.0
  %2262 = vmatpush1.msra.mxu0 0.0
  %2263 = vmatprep.subr.mxu0 0.0
  %2264 = vmatpush1.msra.mxu0 0.0
  %2265 = vmatprep.subr.mxu0 0.0
  %2266 = vmatpush1.msra.mxu0 0.0
  %2267 = vmatprep.subr.mxu0 0.0
  %2268 = vmatpush1.msra.mxu0 0.0
  %2269 = vmatprep.subr.mxu0 0.0
  %2270 = vmatpush1.msra.mxu0 0.0
  %2271 = vmatprep.subr.mxu0 0.0
  %2272 = vmatpush1.msra.mxu0 0.0
  %2273 = vmatprep.subr.mxu0 0.0
  %2274 = vmatpush1.msra.mxu0 0.0
  %2275 = vmatprep.subr.mxu0 0.0
  %2276 = vmatpush1.msra.mxu0 0.0
  %2277 = vmatprep.subr.mxu0 0.0
  %2278 = vmatpush1.msra.mxu0 0.0
  %2279 = vmatprep.subr.mxu0 0.0
  %2280 = vmatpush1.msra.mxu0 0.0
  %2281 = vmatprep.subr.mxu0 0.0
  %2282 = vmatpush1.msra.mxu0 0.0
  %2283 = vmatprep.subr.mxu0 0.0
  %2284 = vmatpush1.msra.mxu0 0.0
  %2285 = vmatprep.subr.mxu0 0.0
  %2286 = vmatpush1.msra.mxu0 0.0
  %2287 = vmatprep.subr.mxu0 0.0
  %2288 = vmatpush1.msra.mxu0 0.0
  %2289 = vmatprep.subr.mxu0 0.0
  %2290 = vmatpush1.msra.mxu0 0.0
  %2291 = vmatprep.subr.mxu0 0.0
  %2292 = vmatpush1.msra.mxu0 0.0
  %2293 = vmatprep.subr.mxu0 0.0
  %2294 = vmatpush1.msra.mxu0 0.0
  %2295 = vmatprep.subr.mxu0 0.0
  %2296 = vmatpush1.msra.mxu0 0.0
  %2297 = vmatprep.subr.mxu0 0.0
  %2298 = vmatpush1.msra.mxu0 0.0
  %2299 = vmatprep.subr.mxu0 0.0
  %2300 = vmatpush1.msra.mxu0 0.0
  %2301 = vmatprep.subr.mxu0 0.0
  %2302 = vmatpush1.msra.mxu0 0.0
  %2303 = vmatprep.subr.mxu0 0.0
  %2304 = vmatpush1.msra.mxu0 0.0
  %2305 = vmatprep.subr.mxu0 0.0
  %2306 = vmatpush1.msra.mxu0 0.0
  %2307 = vmatprep.mubr.f32.mxu0 0.0
  %2308 = vmatmul.mubr.f32.gmra.mrb[0].mxu0 %v2241
  %v2309 = vpop.f32.mrb[0].mxu0
  %v2310 = vadd.f32 0.0, %v2309
  %v2311 = vpop.f32.mrb[0].mxu0
  %2312 = vdwg.mxu0
  %v2313 = vadd.f32 %v1792, %v2310
  %v2314 = vxor.u32 %v2313, 2147483648
  %v2315 = vmul.f32 %v2314, 1.442695
  %v2316 = vpow.pop %v2315
  %v2317 = vadd.f32 %v2316, 1.0
  %v2318 = vrcp.pop %v2317
  %v2319 = vmul.f32 1.0, %v2318
  %v2320 = vtanh.pop %v2313
  %v2322 = vrot.slane %v2225, 6
  %v2324 = vmul.f32 %v2319, %v2322
  %2326 = vrot.lane.b32.xlu0 %v2320, 64
  %v2327 = vpop.permute.xlu0 %2326
  %v2329 = vmul.f32 %v2319, %v2327
  %2331 = vrot.lane.b32.xlu0 %v2329, 32
  %v2332 = vpop.permute.xlu0 %2331
  %v2334 = vadd.f32 %v2324, %v2332
  %v2335 = vtanh.pop %v2334
  %2337 = vrot.lane.b32.xlu0 %v2335, 64
  %v2338 = vpop.permute.xlu0 %2337
  %v2340 = vmul.f32 %v2319, %v2338
  %2342 = vrot.lane.b32.xlu0 %v2340, 32
  %v2343 = vpop.permute.xlu0 %2342
  %2345 = vst.msk [vmem:[#allocation2 + $0x8] sm:$0x3] %vm1903, %v2343
  %v2346 = vsel %vm1419, %v2343, 0
  %2348 = vmatprep.subr.mxu0 0.0
  %2349 = vmatpush1.msra.mxu0 %v1794
  %2350 = vmatprep.subr.mxu0 0.0
  %2351 = vmatpush1.msra.mxu0 %v1795
  %2352 = vmatprep.subr.mxu0 0.0
  %2353 = vmatpush1.msra.mxu0 %v1796
  %2354 = vmatprep.subr.mxu0 0.0
  %2355 = vmatpush1.msra.mxu0 %v1797
  %2356 = vmatprep.subr.mxu0 0.0
  %2357 = vmatpush1.msra.mxu0 0.0
  %2358 = vmatprep.subr.mxu0 0.0
  %2359 = vmatpush1.msra.mxu0 0.0
  %2360 = vmatprep.subr.mxu0 0.0
  %2361 = vmatpush1.msra.mxu0 0.0
  %2362 = vmatprep.subr.mxu0 0.0
  %2363 = vmatpush1.msra.mxu0 0.0
  %2364 = vmatprep.subr.mxu0 0.0
  %2365 = vmatpush1.msra.mxu0 0.0
  %2366 = vmatprep.subr.mxu0 0.0
  %2367 = vmatpush1.msra.mxu0 0.0
  %2368 = vmatprep.subr.mxu0 0.0
  %2369 = vmatpush1.msra.mxu0 0.0
  %2370 = vmatprep.subr.mxu0 0.0
  %2371 = vmatpush1.msra.mxu0 0.0
  %2372 = vmatprep.subr.mxu0 0.0
  %2373 = vmatpush1.msra.mxu0 0.0
  %2374 = vmatprep.subr.mxu0 0.0
  %2375 = vmatpush1.msra.mxu0 0.0
  %2376 = vmatprep.subr.mxu0 0.0
  %2377 = vmatpush1.msra.mxu0 0.0
  %2378 = vmatprep.subr.mxu0 0.0
  %2379 = vmatpush1.msra.mxu0 0.0
  %2380 = vmatprep.subr.mxu0 0.0
  %2381 = vmatpush1.msra.mxu0 0.0
  %2382 = vmatprep.subr.mxu0 0.0
  %2383 = vmatpush1.msra.mxu0 0.0
  %2384 = vmatprep.subr.mxu0 0.0
  %2385 = vmatpush1.msra.mxu0 0.0
  %2386 = vmatprep.subr.mxu0 0.0
  %2387 = vmatpush1.msra.mxu0 0.0
  %2388 = vmatprep.subr.mxu0 0.0
  %2389 = vmatpush1.msra.mxu0 0.0
  %2390 = vmatprep.subr.mxu0 0.0
  %2391 = vmatpush1.msra.mxu0 0.0
  %2392 = vmatprep.subr.mxu0 0.0
  %2393 = vmatpush1.msra.mxu0 0.0
  %2394 = vmatprep.subr.mxu0 0.0
  %2395 = vmatpush1.msra.mxu0 0.0
  %2396 = vmatprep.subr.mxu0 0.0
  %2397 = vmatpush1.msra.mxu0 0.0
  %2398 = vmatprep.subr.mxu0 0.0
  %2399 = vmatpush1.msra.mxu0 0.0
  %2400 = vmatprep.subr.mxu0 0.0
  %2401 = vmatpush1.msra.mxu0 0.0
  %2402 = vmatprep.subr.mxu0 0.0
  %2403 = vmatpush1.msra.mxu0 0.0
  %2404 = vmatprep.subr.mxu0 0.0
  %2405 = vmatpush1.msra.mxu0 0.0
  %2406 = vmatprep.subr.mxu0 0.0
  %2407 = vmatpush1.msra.mxu0 0.0
  %2408 = vmatprep.subr.mxu0 0.0
  %2409 = vmatpush1.msra.mxu0 0.0
  %2410 = vmatprep.subr.mxu0 0.0
  %2411 = vmatpush1.msra.mxu0 0.0
  %2412 = vmatprep.mubr.f32.mxu0 0.0
  %2413 = vmatmul.mubr.f32.gmra.mrb[0].mxu0 %v2346
  %v2414 = vpop.f32.mrb[0].mxu0
  %v2415 = vadd.f32 0.0, %v2414
  %v2416 = vpop.f32.mrb[0].mxu0
  %2417 = vdwg.mxu0
  %v2419 = vrot.slane %v2415, 6
  %v2421 = vadd.f32 %v1792, %v2419
  %v2422 = vxor.u32 %v2421, 2147483648
  %v2423 = vmul.f32 %v2422, 1.442695
  %v2424 = vpow.pop %v2423
  %v2425 = vadd.f32 %v2424, 1.0
  %v2426 = vrcp.pop %v2425
  %v2427 = vmul.f32 1.0, %v2426
  %v2428 = vtanh.pop %v2421
  %v2430 = vrot.slane %v2334, 6
  %v2432 = vmul.f32 %v2427, %v2430
  %2434 = vrot.lane.b32.xlu0 %v2428, 64
  %v2435 = vpop.permute.xlu0 %2434
  %v2437 = vmul.f32 %v2427, %v2435
  %2439 = vrot.lane.b32.xlu0 %v2437, 32
  %v2440 = vpop.permute.xlu0 %2439
  %v2442 = vadd.f32 %v2432, %v2440
  %v2443 = vtanh.pop %v2442
  %2445 = vrot.lane.b32.xlu0 %v2443, 64
  %v2446 = vpop.permute.xlu0 %2445
  %v2448 = vmul.f32 %v2427, %v2446
  %2450 = vrot.lane.b32.xlu0 %v2448, 32
  %v2451 = vpop.permute.xlu0 %2450
  %2453 = vst.msk [vmem:[#allocation2 + $0x8] sm:$0xc] %vm2012, %v2451
  %v2454 = vrot.slane %v2448, 2
  %2455 = vrot.lane.b32.xlu0 %v2454, 32
  %v2456 = vpop.permute.xlu0 %2455
  %v2457 = vsel %vm1419, %v2456, 0
  %2459 = vmatprep.subr.mxu0 0.0
  %2460 = vmatpush1.msra.mxu0 %v1794
  %2461 = vmatprep.subr.mxu0 0.0
  %2462 = vmatpush1.msra.mxu0 %v1795
  %2463 = vmatprep.subr.mxu0 0.0
  %2464 = vmatpush1.msra.mxu0 %v1796
  %2465 = vmatprep.subr.mxu0 0.0
  %2466 = vmatpush1.msra.mxu0 %v1797
  %2467 = vmatprep.subr.mxu0 0.0
  %2468 = vmatpush1.msra.mxu0 0.0
  %2469 = vmatprep.subr.mxu0 0.0
  %2470 = vmatpush1.msra.mxu0 0.0
  %2471 = vmatprep.subr.mxu0 0.0
  %2472 = vmatpush1.msra.mxu0 0.0
  %2473 = vmatprep.subr.mxu0 0.0
  %2474 = vmatpush1.msra.mxu0 0.0
  %2475 = vmatprep.subr.mxu0 0.0
  %2476 = vmatpush1.msra.mxu0 0.0
  %2477 = vmatprep.subr.mxu0 0.0
  %2478 = vmatpush1.msra.mxu0 0.0
  %2479 = vmatprep.subr.mxu0 0.0
  %2480 = vmatpush1.msra.mxu0 0.0
  %2481 = vmatprep.subr.mxu0 0.0
  %2482 = vmatpush1.msra.mxu0 0.0
  %2483 = vmatprep.subr.mxu0 0.0
  %2484 = vmatpush1.msra.mxu0 0.0
  %2485 = vmatprep.subr.mxu0 0.0
  %2486 = vmatpush1.msra.mxu0 0.0
  %2487 = vmatprep.subr.mxu0 0.0
  %2488 = vmatpush1.msra.mxu0 0.0
  %2489 = vmatprep.subr.mxu0 0.0
  %2490 = vmatpush1.msra.mxu0 0.0
  %2491 = vmatprep.subr.mxu0 0.0
  %2492 = vmatpush1.msra.mxu0 0.0
  %2493 = vmatprep.subr.mxu0 0.0
  %2494 = vmatpush1.msra.mxu0 0.0
  %2495 = vmatprep.subr.mxu0 0.0
  %2496 = vmatpush1.msra.mxu0 0.0
  %2497 = vmatprep.subr.mxu0 0.0
  %2498 = vmatpush1.msra.mxu0 0.0
  %2499 = vmatprep.subr.mxu0 0.0
  %2500 = vmatpush1.msra.mxu0 0.0
  %2501 = vmatprep.subr.mxu0 0.0
  %2502 = vmatpush1.msra.mxu0 0.0
  %2503 = vmatprep.subr.mxu0 0.0
  %2504 = vmatpush1.msra.mxu0 0.0
  %2505 = vmatprep.subr.mxu0 0.0
  %2506 = vmatpush1.msra.mxu0 0.0
  %2507 = vmatprep.subr.mxu0 0.0
  %2508 = vmatpush1.msra.mxu0 0.0
  %2509 = vmatprep.subr.mxu0 0.0
  %2510 = vmatpush1.msra.mxu0 0.0
  %2511 = vmatprep.subr.mxu0 0.0
  %2512 = vmatpush1.msra.mxu0 0.0
  %2513 = vmatprep.subr.mxu0 0.0
  %2514 = vmatpush1.msra.mxu0 0.0
  %2515 = vmatprep.subr.mxu0 0.0
  %2516 = vmatpush1.msra.mxu0 0.0
  %2517 = vmatprep.subr.mxu0 0.0
  %2518 = vmatpush1.msra.mxu0 0.0
  %2519 = vmatprep.subr.mxu0 0.0
  %2520 = vmatpush1.msra.mxu0 0.0
  %2521 = vmatprep.subr.mxu0 0.0
  %2522 = vmatpush1.msra.mxu0 0.0
  %2523 = vmatprep.mubr.f32.mxu0 0.0
  %2524 = vmatmul.mubr.f32.gmra.mrb[0].mxu0 %v2457
  %v2525 = vpop.f32.mrb[0].mxu0
  %v2526 = vadd.f32 0.0, %v2525
  %v2527 = vpop.f32.mrb[0].mxu0
  %2528 = vdwg.mxu0
  %v2530 = vrot.slane %v2526, 4
  %v2532 = vadd.f32 %v1792, %v2530
  %v2533 = vxor.u32 %v2532, 2147483648
  %v2534 = vmul.f32 %v2533, 1.442695
  %v2535 = vpow.pop %v2534
  %v2536 = vadd.f32 %v2535, 1.0
  %v2537 = vrcp.pop %v2536
  %v2538 = vmul.f32 1.0, %v2537
  %v2539 = vtanh.pop %v2532
  %v2541 = vrot.slane %v2442, 6
  %v2543 = vmul.f32 %v2538, %v2541
  %2545 = vrot.lane.b32.xlu0 %v2539, 64
  %v2546 = vpop.permute.xlu0 %2545
  %v2548 = vmul.f32 %v2538, %v2546
  %2550 = vrot.lane.b32.xlu0 %v2548, 32
  %v2551 = vpop.permute.xlu0 %2550
  %v2553 = vadd.f32 %v2543, %v2551
  %v2554 = vtanh.pop %v2553
  %2556 = vrot.lane.b32.xlu0 %v2554, 64
  %v2557 = vpop.permute.xlu0 %2556
  %v2559 = vmul.f32 %v2538, %v2557
  %2561 = vrot.lane.b32.xlu0 %v2559, 32
  %v2562 = vpop.permute.xlu0 %2561
  %2564 = vst.msk [vmem:[#allocation2 + $0x8] sm:$0x30] %vm2124, %v2562
  %v2565 = vrot.slane %v2559, 4
  %2566 = vrot.lane.b32.xlu0 %v2565, 32
  %v2567 = vpop.permute.xlu0 %2566
  %v2568 = vsel %vm1419, %v2567, 0
  %2570 = vmatprep.subr.mxu0 0.0
  %2571 = vmatpush1.msra.mxu0 %v1794
  %2572 = vmatprep.subr.mxu0 0.0
  %2573 = vmatpush1.msra.mxu0 %v1795
  %2574 = vmatprep.subr.mxu0 0.0
  %2575 = vmatpush1.msra.mxu0 %v1796
  %2576 = vmatprep.subr.mxu0 0.0
  %2577 = vmatpush1.msra.mxu0 %v1797
  %2578 = vmatprep.subr.mxu0 0.0
  %2579 = vmatpush1.msra.mxu0 0.0
  %2580 = vmatprep.subr.mxu0 0.0
  %2581 = vmatpush1.msra.mxu0 0.0
  %2582 = vmatprep.subr.mxu0 0.0
  %2583 = vmatpush1.msra.mxu0 0.0
  %2584 = vmatprep.subr.mxu0 0.0
  %2585 = vmatpush1.msra.mxu0 0.0
  %2586 = vmatprep.subr.mxu0 0.0
  %2587 = vmatpush1.msra.mxu0 0.0
  %2588 = vmatprep.subr.mxu0 0.0
  %2589 = vmatpush1.msra.mxu0 0.0
  %2590 = vmatprep.subr.mxu0 0.0
  %2591 = vmatpush1.msra.mxu0 0.0
  %2592 = vmatprep.subr.mxu0 0.0
  %2593 = vmatpush1.msra.mxu0 0.0
  %2594 = vmatprep.subr.mxu0 0.0
  %2595 = vmatpush1.msra.mxu0 0.0
  %2596 = vmatprep.subr.mxu0 0.0
  %2597 = vmatpush1.msra.mxu0 0.0
  %2598 = vmatprep.subr.mxu0 0.0
  %2599 = vmatpush1.msra.mxu0 0.0
  %2600 = vmatprep.subr.mxu0 0.0
  %2601 = vmatpush1.msra.mxu0 0.0
  %2602 = vmatprep.subr.mxu0 0.0
  %2603 = vmatpush1.msra.mxu0 0.0
  %2604 = vmatprep.subr.mxu0 0.0
  %2605 = vmatpush1.msra.mxu0 0.0
  %2606 = vmatprep.subr.mxu0 0.0
  %2607 = vmatpush1.msra.mxu0 0.0
  %2608 = vmatprep.subr.mxu0 0.0
  %2609 = vmatpush1.msra.mxu0 0.0
  %2610 = vmatprep.subr.mxu0 0.0
  %2611 = vmatpush1.msra.mxu0 0.0
  %2612 = vmatprep.subr.mxu0 0.0
  %2613 = vmatpush1.msra.mxu0 0.0
  %2614 = vmatprep.subr.mxu0 0.0
  %2615 = vmatpush1.msra.mxu0 0.0
  %2616 = vmatprep.subr.mxu0 0.0
  %2617 = vmatpush1.msra.mxu0 0.0
  %2618 = vmatprep.subr.mxu0 0.0
  %2619 = vmatpush1.msra.mxu0 0.0
  %2620 = vmatprep.subr.mxu0 0.0
  %2621 = vmatpush1.msra.mxu0 0.0
  %2622 = vmatprep.subr.mxu0 0.0
  %2623 = vmatpush1.msra.mxu0 0.0
  %2624 = vmatprep.subr.mxu0 0.0
  %2625 = vmatpush1.msra.mxu0 0.0
  %2626 = vmatprep.subr.mxu0 0.0
  %2627 = vmatpush1.msra.mxu0 0.0
  %2628 = vmatprep.subr.mxu0 0.0
  %2629 = vmatpush1.msra.mxu0 0.0
  %2630 = vmatprep.subr.mxu0 0.0
  %2631 = vmatpush1.msra.mxu0 0.0
  %2632 = vmatprep.subr.mxu0 0.0
  %2633 = vmatpush1.msra.mxu0 0.0
  %2634 = vmatprep.mubr.f32.mxu0 0.0
  %2635 = vmatmul.mubr.f32.gmra.mrb[0].mxu0 %v2568
  %v2636 = vpop.f32.mrb[0].mxu0
  %v2637 = vadd.f32 0.0, %v2636
  %v2638 = vpop.f32.mrb[0].mxu0
  %2639 = vdwg.mxu0
  %v2641 = vrot.slane %v2637, 2
  %v2643 = vadd.f32 %v1792, %v2641
  %v2644 = vxor.u32 %v2643, 2147483648
  %v2645 = vmul.f32 %v2644, 1.442695
  %v2646 = vpow.pop %v2645
  %v2647 = vadd.f32 %v2646, 1.0
  %v2648 = vrcp.pop %v2647
  %v2649 = vmul.f32 1.0, %v2648
  %v2650 = vtanh.pop %v2643
  %v2652 = vrot.slane %v2553, 6
  %v2654 = vmul.f32 %v2649, %v2652
  %2656 = vrot.lane.b32.xlu0 %v2650, 64
  %v2657 = vpop.permute.xlu0 %2656
  %v2659 = vmul.f32 %v2649, %v2657
  %2661 = vrot.lane.b32.xlu0 %v2659, 32
  %v2662 = vpop.permute.xlu0 %2661
  %v2664 = vadd.f32 %v2654, %v2662
  %v2665 = vtanh.pop %v2664
  %2667 = vrot.lane.b32.xlu0 %v2665, 64
  %v2668 = vpop.permute.xlu0 %2667
  %v2670 = vmul.f32 %v2649, %v2668
  %2672 = vrot.lane.b32.xlu0 %v2670, 32
  %v2673 = vpop.permute.xlu0 %2672
  %2675 = vst.msk [vmem:[#allocation2 + $0x8] sm:$0xc0] %vm2236, %v2673
  %2676 = vmatprep.subr.mxu0 0.0
  %2677 = vmatpush1.msra.mxu0 %v1798
  %2678 = vmatprep.subr.mxu0 0.0
  %2679 = vmatpush1.msra.mxu0 %v1799
  %2680 = vmatprep.subr.mxu0 0.0
  %2681 = vmatpush1.msra.mxu0 %v1800
  %2682 = vmatprep.subr.mxu0 0.0
  %2683 = vmatpush1.msra.mxu0 %v1801
  %2684 = vmatprep.subr.mxu0 0.0
  %2685 = vmatpush1.msra.mxu0 0.0
  %2686 = vmatprep.subr.mxu0 0.0
  %2687 = vmatpush1.msra.mxu0 0.0
  %2688 = vmatprep.subr.mxu0 0.0
  %2689 = vmatpush1.msra.mxu0 0.0
  %2690 = vmatprep.subr.mxu0 0.0
  %2691 = vmatpush1.msra.mxu0 0.0
  %2692 = vmatprep.subr.mxu0 0.0
  %2693 = vmatpush1.msra.mxu0 0.0
  %2694 = vmatprep.subr.mxu0 0.0
  %2695 = vmatpush1.msra.mxu0 0.0
  %2696 = vmatprep.subr.mxu0 0.0
  %2697 = vmatpush1.msra.mxu0 0.0
  %2698 = vmatprep.subr.mxu0 0.0
  %2699 = vmatpush1.msra.mxu0 0.0
  %2700 = vmatprep.subr.mxu0 0.0
  %2701 = vmatpush1.msra.mxu0 0.0
  %2702 = vmatprep.subr.mxu0 0.0
  %2703 = vmatpush1.msra.mxu0 0.0
  %2704 = vmatprep.subr.mxu0 0.0
  %2705 = vmatpush1.msra.mxu0 0.0
  %2706 = vmatprep.subr.mxu0 0.0
  %2707 = vmatpush1.msra.mxu0 0.0
  %2708 = vmatprep.subr.mxu0 0.0
  %2709 = vmatpush1.msra.mxu0 0.0
  %2710 = vmatprep.subr.mxu0 0.0
  %2711 = vmatpush1.msra.mxu0 0.0
  %2712 = vmatprep.subr.mxu0 0.0
  %2713 = vmatpush1.msra.mxu0 0.0
  %2714 = vmatprep.subr.mxu0 0.0
  %2715 = vmatpush1.msra.mxu0 0.0
  %2716 = vmatprep.subr.mxu0 0.0
  %2717 = vmatpush1.msra.mxu0 0.0
  %2718 = vmatprep.subr.mxu0 0.0
  %2719 = vmatpush1.msra.mxu0 0.0
  %2720 = vmatprep.subr.mxu0 0.0
  %2721 = vmatpush1.msra.mxu0 0.0
  %2722 = vmatprep.subr.mxu0 0.0
  %2723 = vmatpush1.msra.mxu0 0.0
  %2724 = vmatprep.subr.mxu0 0.0
  %2725 = vmatpush1.msra.mxu0 0.0
  %2726 = vmatprep.subr.mxu0 0.0
  %2727 = vmatpush1.msra.mxu0 0.0
  %2728 = vmatprep.subr.mxu0 0.0
  %2729 = vmatpush1.msra.mxu0 0.0
  %2730 = vmatprep.subr.mxu0 0.0
  %2731 = vmatpush1.msra.mxu0 0.0
  %2732 = vmatprep.subr.mxu0 0.0
  %2733 = vmatpush1.msra.mxu0 0.0
  %2734 = vmatprep.subr.mxu0 0.0
  %2735 = vmatpush1.msra.mxu0 0.0
  %2736 = vmatprep.subr.mxu0 0.0
  %2737 = vmatpush1.msra.mxu0 0.0
  %2738 = vmatprep.subr.mxu0 0.0
  %2739 = vmatpush1.msra.mxu0 0.0
  %2740 = vmatprep.mubr.f32.mxu0 0.0
  %2741 = vmatmul.mubr.f32.gmra.mrb[0].mxu0 %v1802
  %v2742 = vpop.f32.mrb[0].mxu0
  %v2743 = vadd.f32 0.0, %v2742
  %v2744 = vpop.f32.mrb[0].mxu0
  %2745 = vdwg.mxu0
  %v2747 = vrot.slane %v2743, 2
  %v2749 = vadd.f32 %v1793, %v2747
  %v2750 = vxor.u32 %v2749, 2147483648
  %v2751 = vmul.f32 %v2750, 1.442695
  %v2752 = vpow.pop %v2751
  %v2753 = vadd.f32 %v2752, 1.0
  %v2754 = vrcp.pop %v2753
  %v2755 = vmul.f32 1.0, %v2754
  %v2756 = vtanh.pop %v2749
  %v2757 = vmul.f32 %v2755, 0.0
  %2759 = vrot.lane.b32.xlu0 %v2756, 64
  %v2760 = vpop.permute.xlu0 %2759
  %v2762 = vmul.f32 %v2755, %v2760
  %2764 = vrot.lane.b32.xlu0 %v2762, 32
  %v2765 = vpop.permute.xlu0 %2764
  %v2767 = vadd.f32 %v2757, %v2765
  %v2768 = vtanh.pop %v2767
  %2770 = vrot.lane.b32.xlu0 %v2768, 64
  %v2771 = vpop.permute.xlu0 %2770
  %v2773 = vmul.f32 %v2755, %v2771
  %2775 = vrot.lane.b32.xlu0 %v2773, 64
  %v2776 = vpop.permute.xlu0 %2775
  %vm2778 = vcmask 523526
  %2779 = vst.msk [vmem:[#allocation2 + $0x8] sm:$0xc0] %vm2778, %v2776
  %v2780 = vrot.slane %v2773, 6
  %2781 = vrot.lane.b32.xlu0 %v2780, 32
  %v2782 = vpop.permute.xlu0 %2781
  %v2783 = vsel %vm1419, %v2782, 0
  %2785 = vmatprep.subr.mxu0 0.0
  %2786 = vmatpush1.msra.mxu0 %v1798
  %2787 = vmatprep.subr.mxu0 0.0
  %2788 = vmatpush1.msra.mxu0 %v1799
  %2789 = vmatprep.subr.mxu0 0.0
  %2790 = vmatpush1.msra.mxu0 %v1800
  %2791 = vmatprep.subr.mxu0 0.0
  %2792 = vmatpush1.msra.mxu0 %v1801
  %2793 = vmatprep.subr.mxu0 0.0
  %2794 = vmatpush1.msra.mxu0 0.0
  %2795 = vmatprep.subr.mxu0 0.0
  %2796 = vmatpush1.msra.mxu0 0.0
  %2797 = vmatprep.subr.mxu0 0.0
  %2798 = vmatpush1.msra.mxu0 0.0
  %2799 = vmatprep.subr.mxu0 0.0
  %2800 = vmatpush1.msra.mxu0 0.0
  %2801 = vmatprep.subr.mxu0 0.0
  %2802 = vmatpush1.msra.mxu0 0.0
  %2803 = vmatprep.subr.mxu0 0.0
  %2804 = vmatpush1.msra.mxu0 0.0
  %2805 = vmatprep.subr.mxu0 0.0
  %2806 = vmatpush1.msra.mxu0 0.0
  %2807 = vmatprep.subr.mxu0 0.0
  %2808 = vmatpush1.msra.mxu0 0.0
  %2809 = vmatprep.subr.mxu0 0.0
  %2810 = vmatpush1.msra.mxu0 0.0
  %2811 = vmatprep.subr.mxu0 0.0
  %2812 = vmatpush1.msra.mxu0 0.0
  %2813 = vmatprep.subr.mxu0 0.0
  %2814 = vmatpush1.msra.mxu0 0.0
  %2815 = vmatprep.subr.mxu0 0.0
  %2816 = vmatpush1.msra.mxu0 0.0
  %2817 = vmatprep.subr.mxu0 0.0
  %2818 = vmatpush1.msra.mxu0 0.0
  %2819 = vmatprep.subr.mxu0 0.0
  %2820 = vmatpush1.msra.mxu0 0.0
  %2821 = vmatprep.subr.mxu0 0.0
  %2822 = vmatpush1.msra.mxu0 0.0
  %2823 = vmatprep.subr.mxu0 0.0
  %2824 = vmatpush1.msra.mxu0 0.0
  %2825 = vmatprep.subr.mxu0 0.0
  %2826 = vmatpush1.msra.mxu0 0.0
  %2827 = vmatprep.subr.mxu0 0.0
  %2828 = vmatpush1.msra.mxu0 0.0
  %2829 = vmatprep.subr.mxu0 0.0
  %2830 = vmatpush1.msra.mxu0 0.0
  %2831 = vmatprep.subr.mxu0 0.0
  %2832 = vmatpush1.msra.mxu0 0.0
  %2833 = vmatprep.subr.mxu0 0.0
  %2834 = vmatpush1.msra.mxu0 0.0
  %2835 = vmatprep.subr.mxu0 0.0
  %2836 = vmatpush1.msra.mxu0 0.0
  %2837 = vmatprep.subr.mxu0 0.0
  %2838 = vmatpush1.msra.mxu0 0.0
  %2839 = vmatprep.subr.mxu0 0.0
  %2840 = vmatpush1.msra.mxu0 0.0
  %2841 = vmatprep.subr.mxu0 0.0
  %2842 = vmatpush1.msra.mxu0 0.0
  %2843 = vmatprep.subr.mxu0 0.0
  %2844 = vmatpush1.msra.mxu0 0.0
  %2845 = vmatprep.subr.mxu0 0.0
  %2846 = vmatpush1.msra.mxu0 0.0
  %2847 = vmatprep.subr.mxu0 0.0
  %2848 = vmatpush1.msra.mxu0 0.0
  %2849 = vmatprep.mubr.f32.mxu0 0.0
  %2850 = vmatmul.mubr.f32.gmra.mrb[0].mxu0 %v2783
  %v2851 = vpop.f32.mrb[0].mxu0
  %v2852 = vadd.f32 0.0, %v2851
  %v2853 = vpop.f32.mrb[0].mxu0
  %2854 = vdwg.mxu0
  %v2856 = vrot.slane %v2852, 4
  %v2858 = vadd.f32 %v1793, %v2856
  %v2859 = vxor.u32 %v2858, 2147483648
  %v2860 = vmul.f32 %v2859, 1.442695
  %v2861 = vpow.pop %v2860
  %v2862 = vadd.f32 %v2861, 1.0
  %v2863 = vrcp.pop %v2862
  %v2864 = vmul.f32 1.0, %v2863
  %v2865 = vtanh.pop %v2858
  %v2867 = vrot.slane %v2767, 2
  %v2869 = vmul.f32 %v2864, %v2867
  %2871 = vrot.lane.b32.xlu0 %v2865, 64
  %v2872 = vpop.permute.xlu0 %2871
  %v2874 = vmul.f32 %v2864, %v2872
  %2876 = vrot.lane.b32.xlu0 %v2874, 32
  %v2877 = vpop.permute.xlu0 %2876
  %v2879 = vadd.f32 %v2869, %v2877
  %v2880 = vtanh.pop %v2879
  %2882 = vrot.lane.b32.xlu0 %v2880, 64
  %v2883 = vpop.permute.xlu0 %2882
  %v2885 = vmul.f32 %v2864, %v2883
  %2887 = vrot.lane.b32.xlu0 %v2885, 64
  %v2888 = vpop.permute.xlu0 %2887
  %vm2890 = vcmask 521476
  %2891 = vst.msk [vmem:[#allocation2 + $0x8] sm:$0x30] %vm2890, %v2888
  %v2892 = vrot.slane %v2885, 4
  %2893 = vrot.lane.b32.xlu0 %v2892, 32
  %v2894 = vpop.permute.xlu0 %2893
  %v2895 = vsel %vm1419, %v2894, 0
  %2897 = vmatprep.subr.mxu0 0.0
  %2898 = vmatpush1.msra.mxu0 %v1798
  %2899 = vmatprep.subr.mxu0 0.0
  %2900 = vmatpush1.msra.mxu0 %v1799
  %2901 = vmatprep.subr.mxu0 0.0
  %2902 = vmatpush1.msra.mxu0 %v1800
  %2903 = vmatprep.subr.mxu0 0.0
  %2904 = vmatpush1.msra.mxu0 %v1801
  %2905 = vmatprep.subr.mxu0 0.0
  %2906 = vmatpush1.msra.mxu0 0.0
  %2907 = vmatprep.subr.mxu0 0.0
  %2908 = vmatpush1.msra.mxu0 0.0
  %2909 = vmatprep.subr.mxu0 0.0
  %2910 = vmatpush1.msra.mxu0 0.0
  %2911 = vmatprep.subr.mxu0 0.0
  %2912 = vmatpush1.msra.mxu0 0.0
  %2913 = vmatprep.subr.mxu0 0.0
  %2914 = vmatpush1.msra.mxu0 0.0
  %2915 = vmatprep.subr.mxu0 0.0
  %2916 = vmatpush1.msra.mxu0 0.0
  %2917 = vmatprep.subr.mxu0 0.0
  %2918 = vmatpush1.msra.mxu0 0.0
  %2919 = vmatprep.subr.mxu0 0.0
  %2920 = vmatpush1.msra.mxu0 0.0
  %2921 = vmatprep.subr.mxu0 0.0
  %2922 = vmatpush1.msra.mxu0 0.0
  %2923 = vmatprep.subr.mxu0 0.0
  %2924 = vmatpush1.msra.mxu0 0.0
  %2925 = vmatprep.subr.mxu0 0.0
  %2926 = vmatpush1.msra.mxu0 0.0
  %2927 = vmatprep.subr.mxu0 0.0
  %2928 = vmatpush1.msra.mxu0 0.0
  %2929 = vmatprep.subr.mxu0 0.0
  %2930 = vmatpush1.msra.mxu0 0.0
  %2931 = vmatprep.subr.mxu0 0.0
  %2932 = vmatpush1.msra.mxu0 0.0
  %2933 = vmatprep.subr.mxu0 0.0
  %2934 = vmatpush1.msra.mxu0 0.0
  %2935 = vmatprep.subr.mxu0 0.0
  %2936 = vmatpush1.msra.mxu0 0.0
  %2937 = vmatprep.subr.mxu0 0.0
  %2938 = vmatpush1.msra.mxu0 0.0
  %2939 = vmatprep.subr.mxu0 0.0
  %2940 = vmatpush1.msra.mxu0 0.0
  %2941 = vmatprep.subr.mxu0 0.0
  %2942 = vmatpush1.msra.mxu0 0.0
  %2943 = vmatprep.subr.mxu0 0.0
  %2944 = vmatpush1.msra.mxu0 0.0
  %2945 = vmatprep.subr.mxu0 0.0
  %2946 = vmatpush1.msra.mxu0 0.0
  %2947 = vmatprep.subr.mxu0 0.0
  %2948 = vmatpush1.msra.mxu0 0.0
  %2949 = vmatprep.subr.mxu0 0.0
  %2950 = vmatpush1.msra.mxu0 0.0
  %2951 = vmatprep.subr.mxu0 0.0
  %2952 = vmatpush1.msra.mxu0 0.0
  %2953 = vmatprep.subr.mxu0 0.0
  %2954 = vmatpush1.msra.mxu0 0.0
  %2955 = vmatprep.subr.mxu0 0.0
  %2956 = vmatpush1.msra.mxu0 0.0
  %2957 = vmatprep.subr.mxu0 0.0
  %2958 = vmatpush1.msra.mxu0 0.0
  %2959 = vmatprep.subr.mxu0 0.0
  %2960 = vmatpush1.msra.mxu0 0.0
  %2961 = vmatprep.mubr.f32.mxu0 0.0
  %2962 = vmatmul.mubr.f32.gmra.mrb[0].mxu0 %v2895
  %v2963 = vpop.f32.mrb[0].mxu0
  %v2964 = vadd.f32 0.0, %v2963
  %v2965 = vpop.f32.mrb[0].mxu0
  %2966 = vdwg.mxu0
  %v2968 = vrot.slane %v2964, 6
  %v2970 = vadd.f32 %v1793, %v2968
  %v2971 = vxor.u32 %v2970, 2147483648
  %v2972 = vmul.f32 %v2971, 1.442695
  %v2973 = vpow.pop %v2972
  %v2974 = vadd.f32 %v2973, 1.0
  %v2975 = vrcp.pop %v2974
  %v2976 = vmul.f32 1.0, %v2975
  %v2977 = vtanh.pop %v2970
  %v2979 = vrot.slane %v2879, 2
  %v2981 = vmul.f32 %v2976, %v2979
  %2983 = vrot.lane.b32.xlu0 %v2977, 64
  %v2984 = vpop.permute.xlu0 %2983
  %v2986 = vmul.f32 %v2976, %v2984
  %2988 = vrot.lane.b32.xlu0 %v2986, 32
  %v2989 = vpop.permute.xlu0 %2988
  %v2991 = vadd.f32 %v2981, %v2989
  %v2992 = vtanh.pop %v2991
  %2994 = vrot.lane.b32.xlu0 %v2992, 64
  %v2995 = vpop.permute.xlu0 %2994
  %v2997 = vmul.f32 %v2976, %v2995
  %2999 = vrot.lane.b32.xlu0 %v2997, 64
  %v3000 = vpop.permute.xlu0 %2999
  %vm3002 = vcmask 519426
  %3003 = vst.msk [vmem:[#allocation2 + $0x8] sm:$0xc] %vm3002, %v3000
  %v3004 = vrot.slane %v2997, 2
  %3005 = vrot.lane.b32.xlu0 %v3004, 32
  %v3006 = vpop.permute.xlu0 %3005
  %v3007 = vsel %vm1419, %v3006, 0
  %3009 = vmatprep.subr.mxu0 0.0
  %3010 = vmatpush1.msra.mxu0 %v1798
  %3011 = vmatprep.subr.mxu0 0.0
  %3012 = vmatpush1.msra.mxu0 %v1799
  %3013 = vmatprep.subr.mxu0 0.0
  %3014 = vmatpush1.msra.mxu0 %v1800
  %3015 = vmatprep.subr.mxu0 0.0
  %3016 = vmatpush1.msra.mxu0 %v1801
  %3017 = vmatprep.subr.mxu0 0.0
  %3018 = vmatpush1.msra.mxu0 0.0
  %3019 = vmatprep.subr.mxu0 0.0
  %3020 = vmatpush1.msra.mxu0 0.0
  %3021 = vmatprep.subr.mxu0 0.0
  %3022 = vmatpush1.msra.mxu0 0.0
  %3023 = vmatprep.subr.mxu0 0.0
  %3024 = vmatpush1.msra.mxu0 0.0
  %3025 = vmatprep.subr.mxu0 0.0
  %3026 = vmatpush1.msra.mxu0 0.0
  %3027 = vmatprep.subr.mxu0 0.0
  %3028 = vmatpush1.msra.mxu0 0.0
  %3029 = vmatprep.subr.mxu0 0.0
  %3030 = vmatpush1.msra.mxu0 0.0
  %3031 = vmatprep.subr.mxu0 0.0
  %3032 = vmatpush1.msra.mxu0 0.0
  %3033 = vmatprep.subr.mxu0 0.0
  %3034 = vmatpush1.msra.mxu0 0.0
  %3035 = vmatprep.subr.mxu0 0.0
  %3036 = vmatpush1.msra.mxu0 0.0
  %3037 = vmatprep.subr.mxu0 0.0
  %3038 = vmatpush1.msra.mxu0 0.0
  %3039 = vmatprep.subr.mxu0 0.0
  %3040 = vmatpush1.msra.mxu0 0.0
  %3041 = vmatprep.subr.mxu0 0.0
  %3042 = vmatpush1.msra.mxu0 0.0
  %3043 = vmatprep.subr.mxu0 0.0
  %3044 = vmatpush1.msra.mxu0 0.0
  %3045 = vmatprep.subr.mxu0 0.0
  %3046 = vmatpush1.msra.mxu0 0.0
  %3047 = vmatprep.subr.mxu0 0.0
  %3048 = vmatpush1.msra.mxu0 0.0
  %3049 = vmatprep.subr.mxu0 0.0
  %3050 = vmatpush1.msra.mxu0 0.0
  %3051 = vmatprep.subr.mxu0 0.0
  %3052 = vmatpush1.msra.mxu0 0.0
  %3053 = vmatprep.subr.mxu0 0.0
  %3054 = vmatpush1.msra.mxu0 0.0
  %3055 = vmatprep.subr.mxu0 0.0
  %3056 = vmatpush1.msra.mxu0 0.0
  %3057 = vmatprep.subr.mxu0 0.0
  %3058 = vmatpush1.msra.mxu0 0.0
  %3059 = vmatprep.subr.mxu0 0.0
  %3060 = vmatpush1.msra.mxu0 0.0
  %3061 = vmatprep.subr.mxu0 0.0
  %3062 = vmatpush1.msra.mxu0 0.0
  %3063 = vmatprep.subr.mxu0 0.0
  %3064 = vmatpush1.msra.mxu0 0.0
  %3065 = vmatprep.subr.mxu0 0.0
  %3066 = vmatpush1.msra.mxu0 0.0
  %3067 = vmatprep.subr.mxu0 0.0
  %3068 = vmatpush1.msra.mxu0 0.0
  %3069 = vmatprep.subr.mxu0 0.0
  %3070 = vmatpush1.msra.mxu0 0.0
  %3071 = vmatprep.subr.mxu0 0.0
  %3072 = vmatpush1.msra.mxu0 0.0
  %3073 = vmatprep.mubr.f32.mxu0 0.0
  %3074 = vmatmul.mubr.f32.gmra.mrb[0].mxu0 %v3007
  %v3075 = vpop.f32.mrb[0].mxu0
  %v3076 = vadd.f32 0.0, %v3075
  %v3077 = vpop.f32.mrb[0].mxu0
  %3078 = vdwg.mxu0
  %v3079 = vadd.f32 %v1793, %v3076
  %v3080 = vxor.u32 %v3079, 2147483648
  %v3081 = vmul.f32 %v3080, 1.442695
  %v3082 = vpow.pop %v3081
  %v3083 = vadd.f32 %v3082, 1.0
  %v3084 = vrcp.pop %v3083
  %v3085 = vmul.f32 1.0, %v3084
  %v3086 = vtanh.pop %v3079
  %v3088 = vrot.slane %v2991, 2
  %v3090 = vmul.f32 %v3085, %v3088
  %3092 = vrot.lane.b32.xlu0 %v3086, 64
  %v3093 = vpop.permute.xlu0 %3092
  %v3095 = vmul.f32 %v3085, %v3093
  %3097 = vrot.lane.b32.xlu0 %v3095, 32
  %v3098 = vpop.permute.xlu0 %3097
  %v3100 = vadd.f32 %v3090, %v3098
  %v3101 = vtanh.pop %v3100
  %3103 = vrot.lane.b32.xlu0 %v3101, 64
  %v3104 = vpop.permute.xlu0 %3103
  %v3106 = vmul.f32 %v3085, %v3104
  %3108 = vrot.lane.b32.xlu0 %v3106, 64
  %v3109 = vpop.permute.xlu0 %3108
  %vm3111 = vcmask 517376
  %3112 = vst.msk [vmem:[#allocation2 + $0x8] sm:$0x3] %vm3111, %v3109
  %3113 = vrot.lane.b32.xlu0 %v3106, 32
  %v3114 = vpop.permute.xlu0 %3113
  %v3115 = vsel %vm1419, %v3114, 0
  %3117 = vmatprep.subr.mxu0 0.0
  %3118 = vmatpush1.msra.mxu0 %v1798
  %3119 = vmatprep.subr.mxu0 0.0
  %3120 = vmatpush1.msra.mxu0 %v1799
  %3121 = vmatprep.subr.mxu0 0.0
  %3122 = vmatpush1.msra.mxu0 %v1800
  %3123 = vmatprep.subr.mxu0 0.0
  %3124 = vmatpush1.msra.mxu0 %v1801
  %3125 = vmatprep.subr.mxu0 0.0
  %3126 = vmatpush1.msra.mxu0 0.0
  %3127 = vmatprep.subr.mxu0 0.0
  %3128 = vmatpush1.msra.mxu0 0.0
  %3129 = vmatprep.subr.mxu0 0.0
  %3130 = vmatpush1.msra.mxu0 0.0
  %3131 = vmatprep.subr.mxu0 0.0
  %3132 = vmatpush1.msra.mxu0 0.0
  %3133 = vmatprep.subr.mxu0 0.0
  %3134 = vmatpush1.msra.mxu0 0.0
  %3135 = vmatprep.subr.mxu0 0.0
  %3136 = vmatpush1.msra.mxu0 0.0
  %3137 = vmatprep.subr.mxu0 0.0
  %3138 = vmatpush1.msra.mxu0 0.0
  %3139 = vmatprep.subr.mxu0 0.0
  %3140 = vmatpush1.msra.mxu0 0.0
  %3141 = vmatprep.subr.mxu0 0.0
  %3142 = vmatpush1.msra.mxu0 0.0
  %3143 = vmatprep.subr.mxu0 0.0
  %3144 = vmatpush1.msra.mxu0 0.0
  %3145 = vmatprep.subr.mxu0 0.0
  %3146 = vmatpush1.msra.mxu0 0.0
  %3147 = vmatprep.subr.mxu0 0.0
  %3148 = vmatpush1.msra.mxu0 0.0
  %3149 = vmatprep.subr.mxu0 0.0
  %3150 = vmatpush1.msra.mxu0 0.0
  %3151 = vmatprep.subr.mxu0 0.0
  %3152 = vmatpush1.msra.mxu0 0.0
  %3153 = vmatprep.subr.mxu0 0.0
  %3154 = vmatpush1.msra.mxu0 0.0
  %3155 = vmatprep.subr.mxu0 0.0
  %3156 = vmatpush1.msra.mxu0 0.0
  %3157 = vmatprep.subr.mxu0 0.0
  %3158 = vmatpush1.msra.mxu0 0.0
  %3159 = vmatprep.subr.mxu0 0.0
  %3160 = vmatpush1.msra.mxu0 0.0
  %3161 = vmatprep.subr.mxu0 0.0
  %3162 = vmatpush1.msra.mxu0 0.0
  %3163 = vmatprep.subr.mxu0 0.0
  %3164 = vmatpush1.msra.mxu0 0.0
  %3165 = vmatprep.subr.mxu0 0.0
  %3166 = vmatpush1.msra.mxu0 0.0
  %3167 = vmatprep.subr.mxu0 0.0
  %3168 = vmatpush1.msra.mxu0 0.0
  %3169 = vmatprep.subr.mxu0 0.0
  %3170 = vmatpush1.msra.mxu0 0.0
  %3171 = vmatprep.subr.mxu0 0.0
  %3172 = vmatpush1.msra.mxu0 0.0
  %3173 = vmatprep.subr.mxu0 0.0
  %3174 = vmatpush1.msra.mxu0 0.0
  %3175 = vmatprep.subr.mxu0 0.0
  %3176 = vmatpush1.msra.mxu0 0.0
  %3177 = vmatprep.subr.mxu0 0.0
  %3178 = vmatpush1.msra.mxu0 0.0
  %3179 = vmatprep.subr.mxu0 0.0
  %3180 = vmatpush1.msra.mxu0 0.0
  %3181 = vmatprep.mubr.f32.mxu0 0.0
  %3182 = vmatmul.mubr.f32.gmra.mrb[0].mxu0 %v3115
  %v3183 = vpop.f32.mrb[0].mxu0
  %v3184 = vadd.f32 0.0, %v3183
  %v3185 = vpop.f32.mrb[0].mxu0
  %3186 = vdwg.mxu0
  %v3188 = vrot.slane %v3184, 2
  %v3190 = vadd.f32 %v1791, %v3188
  %v3191 = vxor.u32 %v3190, 2147483648
  %v3192 = vmul.f32 %v3191, 1.442695
  %v3193 = vpow.pop %v3192
  %v3194 = vadd.f32 %v3193, 1.0
  %v3195 = vrcp.pop %v3194
  %v3196 = vmul.f32 1.0, %v3195
  %v3197 = vtanh.pop %v3190
  %v3199 = vrot.slane %v3100, 2
  %v3201 = vmul.f32 %v3196, %v3199
  %3203 = vrot.lane.b32.xlu0 %v3197, 64
  %v3204 = vpop.permute.xlu0 %3203
  %v3206 = vmul.f32 %v3196, %v3204
  %3208 = vrot.lane.b32.xlu0 %v3206, 32
  %v3209 = vpop.permute.xlu0 %3208
  %v3211 = vadd.f32 %v3201, %v3209
  %v3212 = vtanh.pop %v3211
  %3214 = vrot.lane.b32.xlu0 %v3212, 64
  %v3215 = vpop.permute.xlu0 %3214
  %v3217 = vmul.f32 %v3196, %v3215
  %3219 = vrot.lane.b32.xlu0 %v3217, 64
  %v3220 = vpop.permute.xlu0 %3219
  %3222 = vst.msk [vmem:[#allocation2] sm:$0xc0] %vm2778, %v3220
  %v3223 = vrot.slane %v3217, 6
  %3224 = vrot.lane.b32.xlu0 %v3223, 32
  %v3225 = vpop.permute.xlu0 %3224
  %v3226 = vsel %vm1419, %v3225, 0
  %3228 = vmatprep.subr.mxu0 0.0
  %3229 = vmatpush1.msra.mxu0 %v1798
  %3230 = vmatprep.subr.mxu0 0.0
  %3231 = vmatpush1.msra.mxu0 %v1799
  %3232 = vmatprep.subr.mxu0 0.0
  %3233 = vmatpush1.msra.mxu0 %v1800
  %3234 = vmatprep.subr.mxu0 0.0
  %3235 = vmatpush1.msra.mxu0 %v1801
  %3236 = vmatprep.subr.mxu0 0.0
  %3237 = vmatpush1.msra.mxu0 0.0
  %3238 = vmatprep.subr.mxu0 0.0
  %3239 = vmatpush1.msra.mxu0 0.0
  %3240 = vmatprep.subr.mxu0 0.0
  %3241 = vmatpush1.msra.mxu0 0.0
  %3242 = vmatprep.subr.mxu0 0.0
  %3243 = vmatpush1.msra.mxu0 0.0
  %3244 = vmatprep.subr.mxu0 0.0
  %3245 = vmatpush1.msra.mxu0 0.0
  %3246 = vmatprep.subr.mxu0 0.0
  %3247 = vmatpush1.msra.mxu0 0.0
  %3248 = vmatprep.subr.mxu0 0.0
  %3249 = vmatpush1.msra.mxu0 0.0
  %3250 = vmatprep.subr.mxu0 0.0
  %3251 = vmatpush1.msra.mxu0 0.0
  %3252 = vmatprep.subr.mxu0 0.0
  %3253 = vmatpush1.msra.mxu0 0.0
  %3254 = vmatprep.subr.mxu0 0.0
  %3255 = vmatpush1.msra.mxu0 0.0
  %3256 = vmatprep.subr.mxu0 0.0
  %3257 = vmatpush1.msra.mxu0 0.0
  %3258 = vmatprep.subr.mxu0 0.0
  %3259 = vmatpush1.msra.mxu0 0.0
  %3260 = vmatprep.subr.mxu0 0.0
  %3261 = vmatpush1.msra.mxu0 0.0
  %3262 = vmatprep.subr.mxu0 0.0
  %3263 = vmatpush1.msra.mxu0 0.0
  %3264 = vmatprep.subr.mxu0 0.0
  %3265 = vmatpush1.msra.mxu0 0.0
  %3266 = vmatprep.subr.mxu0 0.0
  %3267 = vmatpush1.msra.mxu0 0.0
  %3268 = vmatprep.subr.mxu0 0.0
  %3269 = vmatpush1.msra.mxu0 0.0
  %3270 = vmatprep.subr.mxu0 0.0
  %3271 = vmatpush1.msra.mxu0 0.0
  %3272 = vmatprep.subr.mxu0 0.0
  %3273 = vmatpush1.msra.mxu0 0.0
  %3274 = vmatprep.subr.mxu0 0.0
  %3275 = vmatpush1.msra.mxu0 0.0
  %3276 = vmatprep.subr.mxu0 0.0
  %3277 = vmatpush1.msra.mxu0 0.0
  %3278 = vmatprep.subr.mxu0 0.0
  %3279 = vmatpush1.msra.mxu0 0.0
  %3280 = vmatprep.subr.mxu0 0.0
  %3281 = vmatpush1.msra.mxu0 0.0
  %3282 = vmatprep.subr.mxu0 0.0
  %3283 = vmatpush1.msra.mxu0 0.0
  %3284 = vmatprep.subr.mxu0 0.0
  %3285 = vmatpush1.msra.mxu0 0.0
  %3286 = vmatprep.subr.mxu0 0.0
  %3287 = vmatpush1.msra.mxu0 0.0
  %3288 = vmatprep.subr.mxu0 0.0
  %3289 = vmatpush1.msra.mxu0 0.0
  %3290 = vmatprep.subr.mxu0 0.0
  %3291 = vmatpush1.msra.mxu0 0.0
  %3292 = vmatprep.mubr.f32.mxu0 0.0
  %3293 = vmatmul.mubr.f32.gmra.mrb[0].mxu0 %v3226
  %v3294 = vpop.f32.mrb[0].mxu0
  %v3295 = vadd.f32 0.0, %v3294
  %v3296 = vpop.f32.mrb[0].mxu0
  %3297 = vdwg.mxu0
  %v3299 = vrot.slane %v3295, 4
  %v3301 = vadd.f32 %v1791, %v3299
  %v3302 = vxor.u32 %v3301, 2147483648
  %v3303 = vmul.f32 %v3302, 1.442695
  %v3304 = vpow.pop %v3303
  %v3305 = vadd.f32 %v3304, 1.0
  %v3306 = vrcp.pop %v3305
  %v3307 = vmul.f32 1.0, %v3306
  %v3308 = vtanh.pop %v3301
  %v3310 = vrot.slane %v3211, 2
  %v3312 = vmul.f32 %v3307, %v3310
  %3314 = vrot.lane.b32.xlu0 %v3308, 64
  %v3315 = vpop.permute.xlu0 %3314
  %v3317 = vmul.f32 %v3307, %v3315
  %3319 = vrot.lane.b32.xlu0 %v3317, 32
  %v3320 = vpop.permute.xlu0 %3319
  %v3322 = vadd.f32 %v3312, %v3320
  %v3323 = vtanh.pop %v3322
  %3325 = vrot.lane.b32.xlu0 %v3323, 64
  %v3326 = vpop.permute.xlu0 %3325
  %v3328 = vmul.f32 %v3307, %v3326
  %3330 = vrot.lane.b32.xlu0 %v3328, 64
  %v3331 = vpop.permute.xlu0 %3330
  %3333 = vst.msk [vmem:[#allocation2] sm:$0x30] %vm2890, %v3331
  %v3334 = vrot.slane %v3328, 4
  %3335 = vrot.lane.b32.xlu0 %v3334, 32
  %v3336 = vpop.permute.xlu0 %3335
  %v3337 = vsel %vm1419, %v3336, 0
  %3339 = vmatprep.subr.mxu0 0.0
  %3340 = vmatpush1.msra.mxu0 %v1798
  %3341 = vmatprep.subr.mxu0 0.0
  %3342 = vmatpush1.msra.mxu0 %v1799
  %3343 = vmatprep.subr.mxu0 0.0
  %3344 = vmatpush1.msra.mxu0 %v1800
  %3345 = vmatprep.subr.mxu0 0.0
  %3346 = vmatpush1.msra.mxu0 %v1801
  %3347 = vmatprep.subr.mxu0 0.0
  %3348 = vmatpush1.msra.mxu0 0.0
  %3349 = vmatprep.subr.mxu0 0.0
  %3350 = vmatpush1.msra.mxu0 0.0
  %3351 = vmatprep.subr.mxu0 0.0
  %3352 = vmatpush1.msra.mxu0 0.0
  %3353 = vmatprep.subr.mxu0 0.0
  %3354 = vmatpush1.msra.mxu0 0.0
  %3355 = vmatprep.subr.mxu0 0.0
  %3356 = vmatpush1.msra.mxu0 0.0
  %3357 = vmatprep.subr.mxu0 0.0
  %3358 = vmatpush1.msra.mxu0 0.0
  %3359 = vmatprep.subr.mxu0 0.0
  %3360 = vmatpush1.msra.mxu0 0.0
  %3361 = vmatprep.subr.mxu0 0.0
  %3362 = vmatpush1.msra.mxu0 0.0
  %3363 = vmatprep.subr.mxu0 0.0
  %3364 = vmatpush1.msra.mxu0 0.0
  %3365 = vmatprep.subr.mxu0 0.0
  %3366 = vmatpush1.msra.mxu0 0.0
  %3367 = vmatprep.subr.mxu0 0.0
  %3368 = vmatpush1.msra.mxu0 0.0
  %3369 = vmatprep.subr.mxu0 0.0
  %3370 = vmatpush1.msra.mxu0 0.0
  %3371 = vmatprep.subr.mxu0 0.0
  %3372 = vmatpush1.msra.mxu0 0.0
  %3373 = vmatprep.subr.mxu0 0.0
  %3374 = vmatpush1.msra.mxu0 0.0
  %3375 = vmatprep.subr.mxu0 0.0
  %3376 = vmatpush1.msra.mxu0 0.0
  %3377 = vmatprep.subr.mxu0 0.0
  %3378 = vmatpush1.msra.mxu0 0.0
  %3379 = vmatprep.subr.mxu0 0.0
  %3380 = vmatpush1.msra.mxu0 0.0
  %3381 = vmatprep.subr.mxu0 0.0
  %3382 = vmatpush1.msra.mxu0 0.0
  %3383 = vmatprep.subr.mxu0 0.0
  %3384 = vmatpush1.msra.mxu0 0.0
  %3385 = vmatprep.subr.mxu0 0.0
  %3386 = vmatpush1.msra.mxu0 0.0
  %3387 = vmatprep.subr.mxu0 0.0
  %3388 = vmatpush1.msra.mxu0 0.0
  %3389 = vmatprep.subr.mxu0 0.0
  %3390 = vmatpush1.msra.mxu0 0.0
  %3391 = vmatprep.subr.mxu0 0.0
  %3392 = vmatpush1.msra.mxu0 0.0
  %3393 = vmatprep.subr.mxu0 0.0
  %3394 = vmatpush1.msra.mxu0 0.0
  %3395 = vmatprep.subr.mxu0 0.0
  %3396 = vmatpush1.msra.mxu0 0.0
  %3397 = vmatprep.subr.mxu0 0.0
  %3398 = vmatpush1.msra.mxu0 0.0
  %3399 = vmatprep.subr.mxu0 0.0
  %3400 = vmatpush1.msra.mxu0 0.0
  %3401 = vmatprep.subr.mxu0 0.0
  %3402 = vmatpush1.msra.mxu0 0.0
  %3403 = vmatprep.mubr.f32.mxu0 0.0
  %3404 = vmatmul.mubr.f32.gmra.mrb[0].mxu0 %v3337
  %v3405 = vpop.f32.mrb[0].mxu0
  %v3406 = vadd.f32 0.0, %v3405
  %v3407 = vpop.f32.mrb[0].mxu0
  %3408 = vdwg.mxu0
  %v3410 = vrot.slane %v3406, 6
  %v3412 = vadd.f32 %v1791, %v3410
  %v3413 = vxor.u32 %v3412, 2147483648
  %v3414 = vmul.f32 %v3413, 1.442695
  %v3415 = vpow.pop %v3414
  %v3416 = vadd.f32 %v3415, 1.0
  %v3417 = vrcp.pop %v3416
  %v3418 = vmul.f32 1.0, %v3417
  %v3419 = vtanh.pop %v3412
  %v3421 = vrot.slane %v3322, 2
  %v3423 = vmul.f32 %v3418, %v3421
  %3425 = vrot.lane.b32.xlu0 %v3419, 64
  %v3426 = vpop.permute.xlu0 %3425
  %v3428 = vmul.f32 %v3418, %v3426
  %3430 = vrot.lane.b32.xlu0 %v3428, 32
  %v3431 = vpop.permute.xlu0 %3430
  %v3433 = vadd.f32 %v3423, %v3431
  %v3434 = vtanh.pop %v3433
  %3436 = vrot.lane.b32.xlu0 %v3434, 64
  %v3437 = vpop.permute.xlu0 %3436
  %v3439 = vmul.f32 %v3418, %v3437
  %3441 = vrot.lane.b32.xlu0 %v3439, 64
  %v3442 = vpop.permute.xlu0 %3441
  %3444 = vst.msk [vmem:[#allocation2] sm:$0xc] %vm3002, %v3442
  %v3445 = vrot.slane %v3439, 2
  %3446 = vrot.lane.b32.xlu0 %v3445, 32
  %v3447 = vpop.permute.xlu0 %3446
  %v3448 = vsel %vm1419, %v3447, 0
  %3450 = vmatprep.subr.mxu0 0.0
  %3451 = vmatpush1.msra.mxu0 %v1798
  %3452 = vmatprep.subr.mxu0 0.0
  %3453 = vmatpush1.msra.mxu0 %v1799
  %3454 = vmatprep.subr.mxu0 0.0
  %3455 = vmatpush1.msra.mxu0 %v1800
  %3456 = vmatprep.subr.mxu0 0.0
  %3457 = vmatpush1.msra.mxu0 %v1801
  %3458 = vmatprep.subr.mxu0 0.0
  %3459 = vmatpush1.msra.mxu0 0.0
  %3460 = vmatprep.subr.mxu0 0.0
  %3461 = vmatpush1.msra.mxu0 0.0
  %3462 = vmatprep.subr.mxu0 0.0
  %3463 = vmatpush1.msra.mxu0 0.0
  %3464 = vmatprep.subr.mxu0 0.0
  %3465 = vmatpush1.msra.mxu0 0.0
  %3466 = vmatprep.subr.mxu0 0.0
  %3467 = vmatpush1.msra.mxu0 0.0
  %3468 = vmatprep.subr.mxu0 0.0
  %3469 = vmatpush1.msra.mxu0 0.0
  %3470 = vmatprep.subr.mxu0 0.0
  %3471 = vmatpush1.msra.mxu0 0.0
  %3472 = vmatprep.subr.mxu0 0.0
  %3473 = vmatpush1.msra.mxu0 0.0
  %3474 = vmatprep.subr.mxu0 0.0
  %3475 = vmatpush1.msra.mxu0 0.0
  %3476 = vmatprep.subr.mxu0 0.0
  %3477 = vmatpush1.msra.mxu0 0.0
  %3478 = vmatprep.subr.mxu0 0.0
  %3479 = vmatpush1.msra.mxu0 0.0
  %3480 = vmatprep.subr.mxu0 0.0
  %3481 = vmatpush1.msra.mxu0 0.0
  %3482 = vmatprep.subr.mxu0 0.0
  %3483 = vmatpush1.msra.mxu0 0.0
  %3484 = vmatprep.subr.mxu0 0.0
  %3485 = vmatpush1.msra.mxu0 0.0
  %3486 = vmatprep.subr.mxu0 0.0
  %3487 = vmatpush1.msra.mxu0 0.0
  %3488 = vmatprep.subr.mxu0 0.0
  %3489 = vmatpush1.msra.mxu0 0.0
  %3490 = vmatprep.subr.mxu0 0.0
  %3491 = vmatpush1.msra.mxu0 0.0
  %3492 = vmatprep.subr.mxu0 0.0
  %3493 = vmatpush1.msra.mxu0 0.0
  %3494 = vmatprep.subr.mxu0 0.0
  %3495 = vmatpush1.msra.mxu0 0.0
  %3496 = vmatprep.subr.mxu0 0.0
  %3497 = vmatpush1.msra.mxu0 0.0
  %3498 = vmatprep.subr.mxu0 0.0
  %3499 = vmatpush1.msra.mxu0 0.0
  %3500 = vmatprep.subr.mxu0 0.0
  %3501 = vmatpush1.msra.mxu0 0.0
  %3502 = vmatprep.subr.mxu0 0.0
  %3503 = vmatpush1.msra.mxu0 0.0
  %3504 = vmatprep.subr.mxu0 0.0
  %3505 = vmatpush1.msra.mxu0 0.0
  %3506 = vmatprep.subr.mxu0 0.0
  %3507 = vmatpush1.msra.mxu0 0.0
  %3508 = vmatprep.subr.mxu0 0.0
  %3509 = vmatpush1.msra.mxu0 0.0
  %3510 = vmatprep.subr.mxu0 0.0
  %3511 = vmatpush1.msra.mxu0 0.0
  %3512 = vmatprep.subr.mxu0 0.0
  %3513 = vmatpush1.msra.mxu0 0.0
  %3514 = vmatprep.mubr.f32.mxu0 0.0
  %3515 = vmatmul.mubr.f32.gmra.mrb[0].mxu0 %v3448
  %v3516 = vpop.f32.mrb[0].mxu0
  %v3517 = vadd.f32 0.0, %v3516
  %v3518 = vpop.f32.mrb[0].mxu0
  %3519 = vdwg.mxu0
  %v3520 = vadd.f32 %v1791, %v3517
  %v3521 = vxor.u32 %v3520, 2147483648
  %v3522 = vmul.f32 %v3521, 1.442695
  %v3523 = vpow.pop %v3522
  %v3524 = vadd.f32 %v3523, 1.0
  %v3525 = vrcp.pop %v3524
  %v3526 = vmul.f32 1.0, %v3525
  %v3527 = vtanh.pop %v3520
  %v3529 = vrot.slane %v3433, 2
  %v3531 = vmul.f32 %v3526, %v3529
  %3533 = vrot.lane.b32.xlu0 %v3527, 64
  %v3534 = vpop.permute.xlu0 %3533
  %v3536 = vmul.f32 %v3526, %v3534
  %3538 = vrot.lane.b32.xlu0 %v3536, 32
  %v3539 = vpop.permute.xlu0 %3538
  %v3541 = vadd.f32 %v3531, %v3539
  %v3542 = vtanh.pop %v3541
  %3544 = vrot.lane.b32.xlu0 %v3542, 64
  %v3545 = vpop.permute.xlu0 %3544
  %v3547 = vmul.f32 %v3526, %v3545
  %3549 = vrot.lane.b32.xlu0 %v3547, 64
  %v3550 = vpop.permute.xlu0 %3549
  %3552 = vst.msk [vmem:[#allocation2] sm:$0x3] %vm3111, %v3550
  %v3553 = vld [vmem:[#allocation2] sm:$0xff]
  %v3554 = vld [vmem:[#allocation2 + $0x8] sm:$0xff]
  %v3555 = vld [vmem:[%s12] sm:$0xff]
  %v3556 = vld [vmem:[%s12 + $0x8] sm:$0xff]
  %v3557 = vld [vmem:[%s12 + $0x10] sm:$0xff]
  %v3558 = vld [vmem:[%s12 + $0x18] sm:$0xff]
  %v3559 = vld [vmem:[%s12 + $0x20] sm:$0xff]
  %v3560 = vld [vmem:[%s12 + $0x28] sm:$0xff]
  %v3561 = vld [vmem:[%s12 + $0x30] sm:$0xff]
  %v3562 = vld [vmem:[%s12 + $0x38] sm:$0xff]
  %v3563 = vld [vmem:[%s13] sm:$0x1]
  %v3565 = vlaneseq
  %v3566 = vshrl.u32 %v3565, 7
  %v3567 = vsub.s32 0, %v3566
  %v3568 = vrot.slane %v3563, %v3567
  %vm3570 = vcmask 523264
  %v3572 = vsel %vm3570, %v3553, 0
  %v3575 = vsel %vm3570, %v3554, 0
  %3577 = vmatprep.subr.mxu0 0.0
  %3578 = vmatpush1.msra.mxu0 %v3555
  %3579 = vmatprep.subr.mxu0 0.0
  %3580 = vmatpush1.msra.mxu0 %v3556
  %3581 = vmatprep.subr.mxu0 0.0
  %3582 = vmatpush1.msra.mxu0 %v3557
  %3583 = vmatprep.subr.mxu0 0.0
  %3584 = vmatpush1.msra.mxu0 %v3558
  %3585 = vmatprep.subr.mxu0 0.0
  %3586 = vmatpush1.msra.mxu0 %v3559
  %3587 = vmatprep.subr.mxu0 0.0
  %3588 = vmatpush1.msra.mxu0 %v3560
  %3589 = vmatprep.subr.mxu0 0.0
  %3590 = vmatpush1.msra.mxu0 %v3561
  %3591 = vmatprep.subr.mxu0 0.0
  %3592 = vmatpush1.msra.mxu0 %v3562
  %3593 = vmatprep.subr.mxu0 0.0
  %3594 = vmatpush1.msra.mxu0 0.0
  %3595 = vmatprep.subr.mxu0 0.0
  %3596 = vmatpush1.msra.mxu0 0.0
  %3597 = vmatprep.subr.mxu0 0.0
  %3598 = vmatpush1.msra.mxu0 0.0
  %3599 = vmatprep.subr.mxu0 0.0
  %3600 = vmatpush1.msra.mxu0 0.0
  %3601 = vmatprep.subr.mxu0 0.0
  %3602 = vmatpush1.msra.mxu0 0.0
  %3603 = vmatprep.subr.mxu0 0.0
  %3604 = vmatpush1.msra.mxu0 0.0
  %3605 = vmatprep.subr.mxu0 0.0
  %3606 = vmatpush1.msra.mxu0 0.0
  %3607 = vmatprep.subr.mxu0 0.0
  %3608 = vmatpush1.msra.mxu0 0.0
  %3609 = vmatprep.subr.mxu0 0.0
  %3610 = vmatpush1.msra.mxu0 0.0
  %3611 = vmatprep.subr.mxu0 0.0
  %3612 = vmatpush1.msra.mxu0 0.0
  %3613 = vmatprep.subr.mxu0 0.0
  %3614 = vmatpush1.msra.mxu0 0.0
  %3615 = vmatprep.subr.mxu0 0.0
  %3616 = vmatpush1.msra.mxu0 0.0
  %3617 = vmatprep.subr.mxu0 0.0
  %3618 = vmatpush1.msra.mxu0 0.0
  %3619 = vmatprep.subr.mxu0 0.0
  %3620 = vmatpush1.msra.mxu0 0.0
  %3621 = vmatprep.subr.mxu0 0.0
  %3622 = vmatpush1.msra.mxu0 0.0
  %3623 = vmatprep.subr.mxu0 0.0
  %3624 = vmatpush1.msra.mxu0 0.0
  %3625 = vmatprep.subr.mxu0 0.0
  %3626 = vmatpush1.msra.mxu0 0.0
  %3627 = vmatprep.subr.mxu0 0.0
  %3628 = vmatpush1.msra.mxu0 0.0
  %3629 = vmatprep.subr.mxu0 0.0
  %3630 = vmatpush1.msra.mxu0 0.0
  %3631 = vmatprep.subr.mxu0 0.0
  %3632 = vmatpush1.msra.mxu0 0.0
  %3633 = vmatprep.subr.mxu0 0.0
  %3634 = vmatpush1.msra.mxu0 0.0
  %3635 = vmatprep.subr.mxu0 0.0
  %3636 = vmatpush1.msra.mxu0 0.0
  %3637 = vmatprep.subr.mxu0 0.0
  %3638 = vmatpush1.msra.mxu0 0.0
  %3639 = vmatprep.subr.mxu0 0.0
  %3640 = vmatpush1.msra.mxu0 0.0
  %3641 = vmatprep.mubr.f32.mxu0 0.0
  %3642 = vmatmul.mubr.f32.gmra.mrb[0].mxu0 %v3572
  %v3643 = vpop.f32.mrb[0].mxu0
  %v3644 = vadd.f32 %v3568, %v3643
  %v3645 = vpop.f32.mrb[0].mxu0
  %3646 = vmatprep.mubr.f32.mxu0 0.0
  %3647 = vmatmul.mubr.f32.gmra.mrb[0].mxu0 %v3575
  %v3648 = vpop.f32.mrb[0].mxu0
  %v3649 = vadd.f32 %v3568, %v3648
  %v3650 = vpop.f32.mrb[0].mxu0
  %3651 = vdwg.mxu0
  %v3652 = vmax.f32 %v3644, 0.0
  %v3653 = vmax.f32 %v3649, 0.0
  %v3654 = vld [vmem:[%s14] sm:$0xff]
  %v3655 = vld [vmem:[%s14 + $0x8] sm:$0xff]
  %v3656 = vld [vmem:[%s14 + $0x10] sm:$0xff]
  %v3657 = vld [vmem:[%s14 + $0x18] sm:$0xff]
  %v3658 = vld [vmem:[%s15] sm:$0x1]
  %v3660 = vlaneseq
  %v3661 = vshrl.u32 %v3660, 7
  %v3662 = vsub.s32 0, %v3661
  %v3663 = vrot.slane %v3658, %v3662
  %v3666 = vsel %vm1419, %v3652, 0
  %v3669 = vsel %vm1419, %v3653, 0
  %3671 = vmatprep.subr.mxu0 0.0
  %3672 = vmatpush1.msra.mxu0 %v3654
  %3673 = vmatprep.subr.mxu0 0.0
  %3674 = vmatpush1.msra.mxu0 %v3655
  %3675 = vmatprep.subr.mxu0 0.0
  %3676 = vmatpush1.msra.mxu0 %v3656
  %3677 = vmatprep.subr.mxu0 0.0
  %3678 = vmatpush1.msra.mxu0 %v3657
  %3679 = vmatprep.subr.mxu0 0.0
  %3680 = vmatpush1.msra.mxu0 0.0
  %3681 = vmatprep.subr.mxu0 0.0
  %3682 = vmatpush1.msra.mxu0 0.0
  %3683 = vmatprep.subr.mxu0 0.0
  %3684 = vmatpush1.msra.mxu0 0.0
  %3685 = vmatprep.subr.mxu0 0.0
  %3686 = vmatpush1.msra.mxu0 0.0
  %3687 = vmatprep.subr.mxu0 0.0
  %3688 = vmatpush1.msra.mxu0 0.0
  %3689 = vmatprep.subr.mxu0 0.0
  %3690 = vmatpush1.msra.mxu0 0.0
  %3691 = vmatprep.subr.mxu0 0.0
  %3692 = vmatpush1.msra.mxu0 0.0
  %3693 = vmatprep.subr.mxu0 0.0
  %3694 = vmatpush1.msra.mxu0 0.0
  %3695 = vmatprep.subr.mxu0 0.0
  %3696 = vmatpush1.msra.mxu0 0.0
  %3697 = vmatprep.subr.mxu0 0.0
  %3698 = vmatpush1.msra.mxu0 0.0
  %3699 = vmatprep.subr.mxu0 0.0
  %3700 = vmatpush1.msra.mxu0 0.0
  %3701 = vmatprep.subr.mxu0 0.0
  %3702 = vmatpush1.msra.mxu0 0.0
  %3703 = vmatprep.subr.mxu0 0.0
  %3704 = vmatpush1.msra.mxu0 0.0
  %3705 = vmatprep.subr.mxu0 0.0
  %3706 = vmatpush1.msra.mxu0 0.0
  %3707 = vmatprep.subr.mxu0 0.0
  %3708 = vmatpush1.msra.mxu0 0.0
  %3709 = vmatprep.subr.mxu0 0.0
  %3710 = vmatpush1.msra.mxu0 0.0
  %3711 = vmatprep.subr.mxu0 0.0
  %3712 = vmatpush1.msra.mxu0 0.0
  %3713 = vmatprep.subr.mxu0 0.0
  %3714 = vmatpush1.msra.mxu0 0.0
  %3715 = vmatprep.subr.mxu0 0.0
  %3716 = vmatpush1.msra.mxu0 0.0
  %3717 = vmatprep.subr.mxu0 0.0
  %3718 = vmatpush1.msra.mxu0 0.0
  %3719 = vmatprep.subr.mxu0 0.0
  %3720 = vmatpush1.msra.mxu0 0.0
  %3721 = vmatprep.subr.mxu0 0.0
  %3722 = vmatpush1.msra.mxu0 0.0
  %3723 = vmatprep.subr.mxu0 0.0
  %3724 = vmatpush1.msra.mxu0 0.0
  %3725 = vmatprep.subr.mxu0 0.0
  %3726 = vmatpush1.msra.mxu0 0.0
  %3727 = vmatprep.subr.mxu0 0.0
  %3728 = vmatpush1.msra.mxu0 0.0
  %3729 = vmatprep.subr.mxu0 0.0
  %3730 = vmatpush1.msra.mxu0 0.0
  %3731 = vmatprep.subr.mxu0 0.0
  %3732 = vmatpush1.msra.mxu0 0.0
  %3733 = vmatprep.subr.mxu0 0.0
  %3734 = vmatpush1.msra.mxu0 0.0
  %3735 = vmatprep.mubr.f32.mxu0 0.0
  %3736 = vmatmul.mubr.f32.gmra.mrb[0].mxu0 %v3666
  %v3737 = vpop.f32.mrb[0].mxu0
  %v3738 = vadd.f32 %v3663, %v3737
  %v3739 = vpop.f32.mrb[0].mxu0
  %3740 = vmatprep.mubr.f32.mxu0 0.0
  %3741 = vmatmul.mubr.f32.gmra.mrb[0].mxu0 %v3669
  %v3742 = vpop.f32.mrb[0].mxu0
  %v3743 = vadd.f32 %v3663, %v3742
  %v3744 = vpop.f32.mrb[0].mxu0
  %3745 = vdwg.mxu0
  %3746 = vmax.xlane.f32.xlu0 %v3738
  %v3747 = vpop.xlane.xlu0 %3746
  %3748 = vmax.xlane.f32.xlu0 %v3743
  %v3749 = vpop.xlane.xlu0 %3748
  %v3750 = vsub.f32 %v3738, %v3747
  %v3751 = vsub.f32 %v3743, %v3749
  %v3752 = vmul.f32 %v3750, 1.442695
  %v3753 = vpow.pop %v3752
  %v3754 = vmul.f32 %v3751, 1.442695
  %v3755 = vpow.pop %v3754
  %3756 = vadd.xlane.f32.xlu0 %v3753
  %v3757 = vpop.xlane.xlu0 %3756
  %3758 = vadd.xlane.f32.xlu0 %v3755
  %v3759 = vpop.xlane.xlu0 %3758
  %v3760 = vlog2.pop %v3757
  %v3761 = vmul.f32 %v3760, 0.6931472
  %v3762 = vlog2.pop %v3759
  %v3763 = vmul.f32 %v3762, 0.6931472
  %v3764 = vsub.f32 %v3750, %v3761
  %v3765 = vsub.f32 %v3751, %v3763
  %3766 = vst [vmem:[%s16] sm:$0xff] %v3764
  %3767 = vst [vmem:[%s16 + $0x8] sm:$0xff] %v3765
  // Predicated region
  $region66: #{forward.1} parent=0 // pred_check
    _
  $region67: #{forward.1} parent=0 // pred_check_branch
    %3769 = sbr.rel (0) target = $region69
  $region68: #{forward.1} parent=0 // pred_region
    _
  $region69: #{forward.1} parent=0 // pred_fallthru
    _
  // Predicated region
  $region70: #{forward.1} parent=0 // pred_check
    _
  $region71: #{forward.1} parent=0 // pred_check_branch
    %3771 = sbr.rel (0) target = $region73
  $region72: #{forward.1} parent=0 // pred_region
    _
  $region73: #{forward.1} parent=0 // pred_fallthru
    _

</llo_original>
